<compile_context>
chip_gen: v7x
topology: tpu7x:2x2x1
jax: 0.10.0
libtpu: 0.0.40
codegen_flags: <defaults>
</compile_context>

<pallas_src>
import numpy as np
import jax
import jax.numpy as jnp
from jax.experimental import pallas as pl
from jax.experimental.pallas import tpu as pltpu

# ---------------- config (scaled-down roberta-large stand-in) ----------------
VOCAB = 64
HID = 32                      # real hidden width
N_LAYERS = 2
N_HEADS = 2
HEAD_DIM = HID // N_HEADS
FFN = 128                     # already a multiple of 128 -> lane dense
SEQ = 8
BATCH = 2
NUM_CLASSES = 2
LN_EPS = 1e-5

HPAD = 128                    # lane-dense padded hidden width
QKV_W = 3 * N_HEADS * HPAD    # fused qkv slab width (head-major, 128-aligned per head)
VEC_ROWS_PER_LAYER = 8        # bqkv, bo, ln1_g, ln1_b, b1, b2, ln2_g, ln2_b
N_VEC_ROWS = N_LAYERS * VEC_ROWS_PER_LAYER + 4   # + emb_ln_g, emb_ln_b, pool_b, head_b
ATT_SCALE = 1.0 / float(np.sqrt(HEAD_DIM))
NEG_INF = -1e30


# ---------------- fused whole-model kernel ----------------
def _fused_kernel(x_ref, mask_ref, seq_lbl_ref, tok_lbl_ref, tok_w_ref,
                  wqkv_ref, wo_ref, w1_ref, w2_ref, vec_ref, phw_ref,
                  seq_logits_ref, tok_logits_ref, seq_loss_ref, tok_loss_ref):
    f32 = jnp.float32
    bf16 = jnp.bfloat16
    B = mask_ref.shape[0]
    S = mask_ref.shape[2]
    BS = x_ref.shape[0]
    n_layers = wqkv_ref.shape[0]

    # lane mask for the real hidden width (only HID of HPAD lanes carry data)
    lane_cols = jax.lax.broadcasted_iota(jnp.int32, (1, HPAD), 1)
    lane_mask = (lane_cols < HID).astype(f32)

    def layer_norm(v, g, b):
        # v has exact zeros in the pad lanes, so sum(v)/HID is the true mean;
        # variance is masked so the 96 pad lanes don't contribute (v - mu)^2.
        mu = jnp.sum(v, axis=-1, keepdims=True) * (1.0 / HID)
        d = (v - mu) * lane_mask
        var = jnp.sum(d * d, axis=-1, keepdims=True) * (1.0 / HID)
        return d * jax.lax.rsqrt(var + LN_EPS) * g + b          # pad lanes stay 0 (g=b=0)

    def vrow(r, width=HPAD):                                     # packed bias/LN vectors
        return vec_ref[r:r + 1, 0:width]

    gbase = n_layers * VEC_ROWS_PER_LAYER
    emb_g, emb_b = vrow(gbase + 0), vrow(gbase + 1)
    pool_b, head_b = vrow(gbase + 2), vrow(gbase + 3)

    bias = (1.0 - mask_ref[...]) * -1e9                          # (B, 1, S) additive mask

    def attention(qkv, wo_l):
        # qkv: (BS, 3*NH*HPAD), head-major 128-aligned; wo_l: (NH*HPAD, HPAD)
        out = None
        for hd in range(N_HEADS):
            q = qkv[:, hd * HPAD:(hd + 1) * HPAD].reshape(B, S, HPAD)
            k = qkv[:, (N_HEADS + hd) * HPAD:(N_HEADS + hd + 1) * HPAD].reshape(B, S, HPAD)
            v = qkv[:, (2 * N_HEADS + hd) * HPAD:(2 * N_HEADS + hd + 1) * HPAD].reshape(B, S, HPAD)
            s = jnp.einsum("bqd,bkd->bqk", q.astype(bf16), k.astype(bf16),
                           preferred_element_type=f32) * ATT_SCALE + bias
            s = s - jnp.max(s, axis=-1, keepdims=True)
            p = jnp.exp(s)
            p = p * pl.reciprocal(jnp.sum(p, axis=-1, keepdims=True), approx=True)
            ctx = jnp.einsum("bqk,bkd->bqd", p.astype(bf16), v.astype(bf16),
                             preferred_element_type=f32).reshape(BS, HPAD)
            part = jnp.dot(ctx.astype(bf16), wo_l[hd * HPAD:(hd + 1) * HPAD, :],
                           preferred_element_type=f32)
            out = part if out is None else out + part
        return out

    # embedding LayerNorm (pad lanes stay exactly zero through the whole network)
    h = layer_norm(x_ref[...], emb_g, emb_b)

    # encoder layers (statically unrolled)
    for l in range(n_layers):
        base = l * VEC_ROWS_PER_LAYER
        qkv = jnp.dot(h.astype(bf16), wqkv_ref[l],
                      preferred_element_type=f32) + vrow(base + 0, QKV_W)
        attn = attention(qkv, wo_ref[l]) + vrow(base + 1)
        h = layer_norm(attn + h, vrow(base + 2), vrow(base + 3))
        ff = jnp.dot(h.astype(bf16), w1_ref[l],
                     preferred_element_type=f32) + vrow(base + 4, FFN)
        ff = jax.nn.gelu(ff)
        ff = jnp.dot(ff.astype(bf16), w2_ref[l],
                     preferred_element_type=f32) + vrow(base + 5)
        h = layer_norm(ff + h, vrow(base + 6), vrow(base + 7))

    # tanh pooler on the <s> (CLS) rows: slice h viewed as (B, S, HPAD) at position 0
    cls_h = h.reshape(B, S, HPAD)[:, 0, :]                       # (B, HPAD)
    pooled = jnp.tanh(jnp.dot(cls_h.astype(bf16), phw_ref[0],
                              preferred_element_type=f32) + pool_b)

    # both heads share one lane-dense [HPAD, 128] slab: cols 0:2 -> seq, cols 2:4 -> tok
    seq_logits = jnp.dot(pooled.astype(bf16), phw_ref[1],
                         preferred_element_type=f32) + head_b    # (B, 128)
    tok_logits = jnp.dot(h.astype(bf16), phw_ref[1],
                         preferred_element_type=f32) + head_b    # (BS, 128)
    seq_logits_ref[...] = seq_logits
    tok_logits_ref[...] = tok_logits

    # ---- in-kernel cross-entropies (masks from iota + integer labels, no one-hots) ----
    def masked_nll(z, lbl_col, lo, hi):
        cols = jax.lax.broadcasted_iota(jnp.int32, z.shape, 1)
        valid = (cols >= lo) & (cols < hi)
        zm = jnp.where(valid, z, NEG_INF)
        m = jnp.max(zm, axis=-1, keepdims=True)
        lse = m + jnp.log(jnp.sum(jnp.exp(zm - m), axis=-1, keepdims=True))
        pick = jnp.sum(jnp.where(cols == lbl_col, zm, 0.0), axis=-1, keepdims=True)
        return lse - pick                                        # (rows, 1)

    seq_nll = masked_nll(seq_logits, seq_lbl_ref[...], 0, NUM_CLASSES)
    seq_loss_ref[...] = jnp.sum(seq_nll, axis=0, keepdims=True) * (1.0 / B)

    tok_nll = masked_nll(tok_logits, tok_lbl_ref[...] + NUM_CLASSES,
                         NUM_CLASSES, 2 * NUM_CLASSES)
    tok_loss_ref[...] = jnp.sum(tok_nll * tok_w_ref[...], axis=0, keepdims=True)


# ---------------- pallas_call wrapper ----------------
def _fused_forward(p, x, mask, seq_lbl, tok_lbl, tok_w):
    B = mask.shape[0]
    BS = x.shape[0]
    args = (x, mask, seq_lbl, tok_lbl, tok_w,
            p["wqkv"], p["wo"], p["w1"], p["w2"], p["vec"], p["phw"])
    out_shape = (jax.ShapeDtypeStruct((B, HPAD), jnp.float32),
                 jax.ShapeDtypeStruct((BS, HPAD), jnp.float32),
                 jax.ShapeDtypeStruct((1, 1), jnp.float32),
                 jax.ShapeDtypeStruct((1, 1), jnp.float32))

    in_bytes = sum(int(np.prod(a.shape)) * jnp.dtype(a.dtype).itemsize for a in args)
    out_bytes = sum(int(np.prod(o.shape)) * jnp.dtype(o.dtype).itemsize for o in out_shape)
    per_layer_flops = (2 * BS * HPAD * QKV_W                         # fused qkv matmul
                       + N_HEADS * 4 * B * SEQ * SEQ * HPAD          # qk^T + pv
                       + N_HEADS * 2 * BS * HPAD * HPAD              # per-head out proj
                       + 2 * BS * HPAD * FFN + 2 * BS * FFN * HPAD)  # FFN
    flops = (N_LAYERS * per_layer_flops
             + 2 * B * HPAD * HPAD                                    # pooler
             + 2 * B * HPAD * HPAD + 2 * BS * HPAD * HPAD)            # heads
    transcendentals = (N_LAYERS * (N_HEADS * B * SEQ * SEQ + BS * FFN)
                       + B * HPAD + (B + BS) * HPAD)

    vmem = pl.BlockSpec(memory_space=pltpu.MemorySpace.VMEM)
    return pl.pallas_call(
        _fused_kernel,
        out_shape=out_shape,
        in_specs=[vmem] * len(args),
        out_specs=(vmem,) * len(out_shape),
        compiler_params=pltpu.CompilerParams(
            vmem_limit_bytes=min(128 << 20, 2 * (in_bytes + out_bytes) + (8 << 20))),
        cost_estimate=pl.CostEstimate(flops=flops, transcendentals=transcendentals,
                                      bytes_accessed=in_bytes + out_bytes),
    )(*args)


# ---------------- parameters (deterministic synthetic init, lane-padded) ----------------
def init_params(key):
    def dense(k, fi, fo):
        return np.asarray(jax.random.normal(k, (fi, fo), jnp.float32)) * 0.02

    keys = jax.random.split(key, 5 + N_LAYERS)

    word_emb = np.zeros((VOCAB, HPAD), np.float32)
    word_emb[:, :HID] = np.asarray(jax.random.normal(keys[0], (VOCAB, HID), jnp.float32)) * 0.02
    pos_emb = np.zeros((SEQ, HPAD), np.float32)
    pos_emb[:, :HID] = np.asarray(jax.random.normal(keys[1], (SEQ, HID), jnp.float32)) * 0.02

    wqkv = np.zeros((N_LAYERS, HPAD, QKV_W), np.float32)
    wo = np.zeros((N_LAYERS, N_HEADS * HPAD, HPAD), np.float32)
    w1 = np.zeros((N_LAYERS, HPAD, FFN), np.float32)
    w2 = np.zeros((N_LAYERS, FFN, HPAD), np.float32)
    vec = np.zeros((N_VEC_ROWS, QKV_W), np.float32)

    for l in range(N_LAYERS):
        lk = jax.random.split(keys[2 + l], 6)
        wq, wk, wv = dense(lk[0], HID, HID), dense(lk[1], HID, HID), dense(lk[2], HID, HID)
        wo_l, w1_l, w2_l = dense(lk[3], HID, HID), dense(lk[4], HID, FFN), dense(lk[5], FFN, HID)
        for hd in range(N_HEADS):
            cq, ck, cv = hd * HPAD, (N_HEADS + hd) * HPAD, (2 * N_HEADS + hd) * HPAD
            wqkv[l, :HID, cq:cq + HEAD_DIM] = wq[:, hd * HEAD_DIM:(hd + 1) * HEAD_DIM]
            wqkv[l, :HID, ck:ck + HEAD_DIM] = wk[:, hd * HEAD_DIM:(hd + 1) * HEAD_DIM]
            wqkv[l, :HID, cv:cv + HEAD_DIM] = wv[:, hd * HEAD_DIM:(hd + 1) * HEAD_DIM]
            wo[l, hd * HPAD:hd * HPAD + HEAD_DIM, :HID] = wo_l[hd * HEAD_DIM:(hd + 1) * HEAD_DIM, :]
        w1[l, :HID, :FFN] = w1_l
        w2[l, :FFN, :HID] = w2_l
        base = l * VEC_ROWS_PER_LAYER
        vec[base + 2, :HID] = 1.0     # ln1 gamma
        vec[base + 6, :HID] = 1.0     # ln2 gamma
        # all linear biases / LN betas stay zero (synthetic init)

    gbase = N_LAYERS * VEC_ROWS_PER_LAYER
    vec[gbase + 0, :HID] = 1.0        # embedding LN gamma

    pool_w = np.zeros((HPAD, HPAD), np.float32)
    pool_w[:HID, :HID] = dense(keys[2 + N_LAYERS], HID, HID)
    head_w = np.zeros((HPAD, HPAD), np.float32)
    head_w[:HID, 0:NUM_CLASSES] = dense(keys[3 + N_LAYERS], HID, NUM_CLASSES)
    head_w[:HID, NUM_CLASSES:2 * NUM_CLASSES] = dense(keys[4 + N_LAYERS], HID, NUM_CLASSES)
    phw = np.stack([pool_w, head_w])  # (2, HPAD, HPAD)

    return {
        "word_emb": jnp.asarray(word_emb),
        "pos_emb": jnp.asarray(pos_emb),
        "wqkv": jnp.asarray(wqkv, jnp.bfloat16),
        "wo": jnp.asarray(wo, jnp.bfloat16),
        "w1": jnp.asarray(w1, jnp.bfloat16),
        "w2": jnp.asarray(w2, jnp.bfloat16),
        "vec": jnp.asarray(vec),
        "phw": jnp.asarray(phw, jnp.bfloat16),
    }


# ---------------- device-side forward (jittable) ----------------
@jax.jit
def _device_forward(params, input_ids, attention_mask, label, padded_labels, lengths):
    B, S = input_ids.shape
    x = (jnp.take(params["word_emb"], input_ids, axis=0)
         + params["pos_emb"][None, :, :]).reshape(B * S, HPAD)
    mask = attention_mask.astype(jnp.float32)[:, None, :]                    # (B, 1, S)
    seq_lbl = label.astype(jnp.int32)[:, None]                               # (B, 1)
    tok_lbl = padded_labels.astype(jnp.int32).reshape(B * S, 1)              # (B*S, 1)
    pos = jnp.arange(S)[None, :]
    valid = (pos >= 1) & (pos <= lengths[:, None])                           # (B, S)
    tok_w = (valid.astype(jnp.float32)
             / (lengths[:, None].astype(jnp.float32) * B)).reshape(B * S, 1)
    return _fused_forward(params, x, mask, seq_lbl, tok_lbl, tok_w)


# ---------------- MixturePredictor.forward ----------------
def mixture_predictor_forward(params, inputs):
    input_ids = inputs["input_ids"]
    attention_mask = inputs["attention_mask"]
    label = inputs["label"]
    tagger_labels = inputs["tagger_labels"]           # ragged host list (boundary glue)
    B, S = input_ids.shape

    # pack the ragged python list once (host); everything else runs on device.
    lengths = np.array([len(t) for t in tagger_labels], np.int32)
    padded = np.zeros((B, S), np.int32)
    for i, t in enumerate(tagger_labels):
        padded[i, 1:len(t) + 1] = np.asarray(t)

    seq_lp, tok_lp, seq_loss, tok_loss = _device_forward(
        params, input_ids, attention_mask, label,
        jnp.asarray(padded), jnp.asarray(lengths))

    seq_logits = seq_lp[:, :NUM_CLASSES]                                     # (B, 2)
    tok_logits = tok_lp[:, NUM_CLASSES:2 * NUM_CLASSES].reshape(B, S, NUM_CLASSES)
    seq_loss = seq_loss[0, 0]
    tok_loss = tok_loss[0, 0]
    return {
        "sequence_loss": seq_loss,
        "sequence_mixture_preds": seq_logits,
        "token_mixture_loss": tok_loss,
        "token_mixture_preds": [tok_logits[i, 1:len(t) + 1]
                                for i, t in enumerate(tagger_labels)],
        "loss": seq_loss + tok_loss,
    }


# ---------------- demo ----------------
if __name__ == "__main__":
    key = jax.random.PRNGKey(0)
    pkey, ikey, lkey, t1key, t2key = jax.random.split(key, 5)

    params = init_params(pkey)

    input_ids = jax.random.randint(ikey, (BATCH, SEQ), 0, VOCAB, dtype=jnp.int32)
    attention_mask = jnp.array([[1] * SEQ, [1] * 6 + [0, 0]], dtype=jnp.int32)
    label = jax.random.randint(lkey, (BATCH,), 0, NUM_CLASSES, dtype=jnp.int32)
    tagger_labels = [
        np.asarray(jax.random.randint(t1key, (6,), 0, NUM_CLASSES, dtype=jnp.int32)),
        np.asarray(jax.random.randint(t2key, (4,), 0, NUM_CLASSES, dtype=jnp.int32)),
    ]
    inputs = {
        "input_ids": input_ids,
        "attention_mask": attention_mask,
        "label": label,
        "tagger_labels": tagger_labels,
    }

    result = mixture_predictor_forward(params, inputs)
    jax.block_until_ready((result["loss"],
                           result["sequence_loss"],
                           result["token_mixture_loss"],
                           result["sequence_mixture_preds"],
                           result["token_mixture_preds"]))
    assert result["sequence_mixture_preds"].shape == (BATCH, NUM_CLASSES)
    assert result["token_mixture_preds"][0].shape == (6, NUM_CLASSES)
    assert result["token_mixture_preds"][1].shape == (4, NUM_CLASSES)
    assert np.isfinite(float(result["loss"]))
    assert np.isfinite(float(result["sequence_loss"]))
    assert np.isfinite(float(result["token_mixture_loss"]))
    print("KERNEL_OK")
</pallas_src>

<mosaic_0001>
module attributes {stable_mosaic.version = 11 : i64} {
  func.func @_fused_kernel(%arg0: memref<16x128xf32, #tpu.memory_space<vmem>>, %arg1: memref<2x1x8xf32, #tpu.memory_space<vmem>>, %arg2: memref<2x1xi32, #tpu.memory_space<vmem>>, %arg3: memref<16x1xi32, #tpu.memory_space<vmem>>, %arg4: memref<16x1xf32, #tpu.memory_space<vmem>>, %arg5: memref<2x128x768xbf16, #tpu.memory_space<vmem>>, %arg6: memref<2x256x128xbf16, #tpu.memory_space<vmem>>, %arg7: memref<2x128x128xbf16, #tpu.memory_space<vmem>>, %arg8: memref<2x128x128xbf16, #tpu.memory_space<vmem>>, %arg9: memref<20x768xf32, #tpu.memory_space<vmem>>, %arg10: memref<2x128x128xbf16, #tpu.memory_space<vmem>>, %arg11: memref<2x128xf32, #tpu.memory_space<vmem>>, %arg12: memref<16x128xf32, #tpu.memory_space<vmem>>, %arg13: memref<1x1xf32, #tpu.memory_space<vmem>>, %arg14: memref<1x1xf32, #tpu.memory_space<vmem>>) attributes {dimension_semantics = [], scalar_prefetch = 0 : i64, scratch_operands = 0 : i64, tpu.core_type = #tpu.core_type<tc>} {
    %0 = tpu.iota {dimensions = array<i32: 1>} : vector<1x128xi32>
    %c32_i32 = arith.constant 32 : i32
    %1 = vector.broadcast %c32_i32 : i32 to vector<1x128xi32>
    %2 = arith.cmpi slt, %0, %1 : vector<1x128xi32>
    %3 = arith.extui %2 : vector<1x128xi1> to vector<1x128xi32>
    %4 = arith.sitofp %3 : vector<1x128xi32> to vector<1x128xf32>
    %c16 = arith.constant 16 : index
    %c0 = arith.constant 0 : index
    %5 = vector.load %arg9[%c16, %c0] : memref<20x768xf32, #tpu.memory_space<vmem>>, vector<1x128xf32>
    %c17 = arith.constant 17 : index
    %c0_0 = arith.constant 0 : index
    %6 = vector.load %arg9[%c17, %c0_0] : memref<20x768xf32, #tpu.memory_space<vmem>>, vector<1x128xf32>
    %c18 = arith.constant 18 : index
    %c0_1 = arith.constant 0 : index
    %7 = vector.load %arg9[%c18, %c0_1] : memref<20x768xf32, #tpu.memory_space<vmem>>, vector<1x128xf32>
    %c19 = arith.constant 19 : index
    %c0_2 = arith.constant 0 : index
    %8 = vector.load %arg9[%c19, %c0_2] : memref<20x768xf32, #tpu.memory_space<vmem>>, vector<1x128xf32>
    %c0_3 = arith.constant 0 : index
    %c0_4 = arith.constant 0 : index
    %c0_5 = arith.constant 0 : index
    %9 = vector.load %arg1[%c0_3, %c0_4, %c0_5] : memref<2x1x8xf32, #tpu.memory_space<vmem>>, vector<2x1x8xf32>
    %cst = arith.constant 1.000000e+00 : f32
    %10 = vector.broadcast %cst : f32 to vector<2x1x8xf32>
    %11 = arith.subf %10, %9 : vector<2x1x8xf32>
    %cst_6 = arith.constant -1.000000e+09 : f32
    %12 = vector.broadcast %cst_6 : f32 to vector<2x1x8xf32>
    %13 = arith.mulf %11, %12 : vector<2x1x8xf32>
    %c0_7 = arith.constant 0 : index
    %c0_8 = arith.constant 0 : index
    %14 = vector.load %arg0[%c0_7, %c0_8] : memref<16x128xf32, #tpu.memory_space<vmem>>, vector<16x128xf32>
    %cst_9 = arith.constant dense<0.000000e+00> : vector<16xf32>
    %15 = vector.multi_reduction <add>, %14, %cst_9 [1] : vector<16x128xf32> to vector<16xf32>
    %16 = vector.shape_cast %15 : vector<16xf32> to vector<16x1xf32>
    %cst_10 = arith.constant 3.125000e-02 : f32
    %17 = vector.broadcast %cst_10 : f32 to vector<16x1xf32>
    %18 = arith.mulf %16, %17 : vector<16x1xf32>
    %19 = vector.broadcast %18 : vector<16x1xf32> to vector<16x128xf32>
    %20 = arith.subf %14, %19 : vector<16x128xf32>
    %21 = vector.broadcast %4 : vector<1x128xf32> to vector<16x128xf32>
    %22 = arith.mulf %20, %21 : vector<16x128xf32>
    %23 = arith.mulf %22, %22 : vector<16x128xf32>
    %cst_11 = arith.constant dense<0.000000e+00> : vector<16xf32>
    %24 = vector.multi_reduction <add>, %23, %cst_11 [1] : vector<16x128xf32> to vector<16xf32>
    %25 = vector.shape_cast %24 : vector<16xf32> to vector<16x1xf32>
    %cst_12 = arith.constant 3.125000e-02 : f32
    %26 = vector.broadcast %cst_12 : f32 to vector<16x1xf32>
    %27 = arith.mulf %25, %26 : vector<16x1xf32>
    %cst_13 = arith.constant 9.99999974E-6 : f32
    %28 = vector.broadcast %cst_13 : f32 to vector<16x1xf32>
    %29 = arith.addf %27, %28 : vector<16x1xf32>
    %30 = math.rsqrt %29 : vector<16x1xf32>
    %31 = vector.broadcast %30 : vector<16x1xf32> to vector<16x128xf32>
    %32 = arith.mulf %22, %31 : vector<16x128xf32>
    %33 = vector.broadcast %5 : vector<1x128xf32> to vector<16x128xf32>
    %34 = arith.mulf %32, %33 : vector<16x128xf32>
    %35 = vector.broadcast %6 : vector<1x128xf32> to vector<16x128xf32>
    %36 = arith.addf %34, %35 : vector<16x128xf32>
    %37 = arith.truncf %36 : vector<16x128xf32> to vector<16x128xbf16>
    %c0_14 = arith.constant 0 : index
    %c0_15 = arith.constant 0 : index
    %c0_16 = arith.constant 0 : index
    %38 = vector.load %arg5[%c0_14, %c0_15, %c0_16] : memref<2x128x768xbf16, #tpu.memory_space<vmem>>, vector<1x128x768xbf16>
    %39 = vector.shape_cast %38 : vector<1x128x768xbf16> to vector<128x768xbf16>
    %cst_17 = arith.constant dense<0.000000e+00> : vector<16x768xf32>
    %40 = tpu.matmul %37, %39, %cst_17 {dimension_numbers = #tpu.dot_dimension_numbers<[1], [0], [0], [1], [0, 0, 1, 1], [], []>} : vector<16x128xbf16>, vector<128x768xbf16>, vector<16x768xf32> -> vector<16x768xf32>
    %c0_18 = arith.constant 0 : index
    %c0_19 = arith.constant 0 : index
    %41 = vector.load %arg9[%c0_18, %c0_19] : memref<20x768xf32, #tpu.memory_space<vmem>>, vector<1x768xf32>
    %42 = vector.broadcast %41 : vector<1x768xf32> to vector<16x768xf32>
    %43 = arith.addf %40, %42 : vector<16x768xf32>
    %c0_20 = arith.constant 0 : index
    %c0_21 = arith.constant 0 : index
    %c0_22 = arith.constant 0 : index
    %44 = vector.load %arg6[%c0_20, %c0_21, %c0_22] : memref<2x256x128xbf16, #tpu.memory_space<vmem>>, vector<1x256x128xbf16>
    %45 = vector.shape_cast %44 : vector<1x256x128xbf16> to vector<256x128xbf16>
    %46 = vector.extract_strided_slice %43 {offsets = [0, 0], sizes = [16, 128], strides = [1, 1]} : vector<16x768xf32> to vector<16x128xf32>
    %47 = vector.shape_cast %46 : vector<16x128xf32> to vector<2x8x128xf32>
    %48 = vector.extract_strided_slice %43 {offsets = [0, 256], sizes = [16, 128], strides = [1, 1]} : vector<16x768xf32> to vector<16x128xf32>
    %49 = vector.shape_cast %48 : vector<16x128xf32> to vector<2x8x128xf32>
    %50 = vector.extract_strided_slice %43 {offsets = [0, 512], sizes = [16, 128], strides = [1, 1]} : vector<16x768xf32> to vector<16x128xf32>
    %51 = vector.shape_cast %50 : vector<16x128xf32> to vector<2x8x128xf32>
    %52 = arith.truncf %47 : vector<2x8x128xf32> to vector<2x8x128xbf16>
    %53 = arith.truncf %49 : vector<2x8x128xf32> to vector<2x8x128xbf16>
    "tpu.trace_start"() <{level = 10 : i32, message = "bqd,bkd->bqk"}> : () -> ()
    %cst_23 = arith.constant dense<0.000000e+00> : vector<2x8x8xf32>
    %54 = tpu.matmul %52, %53, %cst_23 {dimension_numbers = #tpu.dot_dimension_numbers<[2], [2], [1], [1], [0, 0, 0, 1, 1, 1], [0], [0]>} : vector<2x8x128xbf16>, vector<2x8x128xbf16>, vector<2x8x8xf32> -> vector<2x8x8xf32>
    "tpu.trace_stop"() : () -> ()
    %cst_24 = arith.constant 2.500000e-01 : f32
    %55 = vector.broadcast %cst_24 : f32 to vector<2x8x8xf32>
    %56 = arith.mulf %54, %55 : vector<2x8x8xf32>
    %57 = vector.broadcast %13 : vector<2x1x8xf32> to vector<2x8x8xf32>
    %58 = arith.addf %56, %57 : vector<2x8x8xf32>
    %cst_25 = arith.constant dense<0xFF800000> : vector<2x8xf32>
    %59 = vector.multi_reduction <maximumf>, %58, %cst_25 [2] : vector<2x8x8xf32> to vector<2x8xf32>
    %60 = vector.shape_cast %59 : vector<2x8xf32> to vector<2x8x1xf32>
    %61 = vector.broadcast %60 : vector<2x8x1xf32> to vector<2x8x8xf32>
    %62 = arith.subf %58, %61 : vector<2x8x8xf32>
    %63 = math.exp %62 : vector<2x8x8xf32>
    %cst_26 = arith.constant dense<0.000000e+00> : vector<2x8xf32>
    %64 = vector.multi_reduction <add>, %63, %cst_26 [2] : vector<2x8x8xf32> to vector<2x8xf32>
    %65 = vector.shape_cast %64 : vector<2x8xf32> to vector<2x8x1xf32>
    %66 = tpu.reciprocal %65 {approx = true} : vector<2x8x1xf32> -> vector<2x8x1xf32>
    %67 = vector.broadcast %66 : vector<2x8x1xf32> to vector<2x8x8xf32>
    %68 = arith.mulf %63, %67 : vector<2x8x8xf32>
    %69 = arith.truncf %68 : vector<2x8x8xf32> to vector<2x8x8xbf16>
    %70 = arith.truncf %51 : vector<2x8x128xf32> to vector<2x8x128xbf16>
    "tpu.trace_start"() <{level = 10 : i32, message = "bqk,bkd->bqd"}> : () -> ()
    %cst_27 = arith.constant dense<0.000000e+00> : vector<2x8x128xf32>
    %71 = tpu.matmul %69, %70, %cst_27 {dimension_numbers = #tpu.dot_dimension_numbers<[2], [1], [1], [2], [0, 0, 0, 1, 1, 2], [0], [0]>} : vector<2x8x8xbf16>, vector<2x8x128xbf16>, vector<2x8x128xf32> -> vector<2x8x128xf32>
    "tpu.trace_stop"() : () -> ()
    %72 = vector.shape_cast %71 : vector<2x8x128xf32> to vector<16x128xf32>
    %73 = arith.truncf %72 : vector<16x128xf32> to vector<16x128xbf16>
    %74 = vector.extract_strided_slice %45 {offsets = [0, 0], sizes = [128, 128], strides = [1, 1]} : vector<256x128xbf16> to vector<128x128xbf16>
    %cst_28 = arith.constant dense<0.000000e+00> : vector<16x128xf32>
    %75 = tpu.matmul %73, %74, %cst_28 {dimension_numbers = #tpu.dot_dimension_numbers<[1], [0], [0], [1], [0, 0, 1, 1], [], []>} : vector<16x128xbf16>, vector<128x128xbf16>, vector<16x128xf32> -> vector<16x128xf32>
    %76 = vector.extract_strided_slice %43 {offsets = [0, 128], sizes = [16, 128], strides = [1, 1]} : vector<16x768xf32> to vector<16x128xf32>
    %77 = vector.shape_cast %76 : vector<16x128xf32> to vector<2x8x128xf32>
    %78 = vector.extract_strided_slice %43 {offsets = [0, 384], sizes = [16, 128], strides = [1, 1]} : vector<16x768xf32> to vector<16x128xf32>
    %79 = vector.shape_cast %78 : vector<16x128xf32> to vector<2x8x128xf32>
    %80 = vector.extract_strided_slice %43 {offsets = [0, 640], sizes = [16, 128], strides = [1, 1]} : vector<16x768xf32> to vector<16x128xf32>
    %81 = vector.shape_cast %80 : vector<16x128xf32> to vector<2x8x128xf32>
    %82 = arith.truncf %77 : vector<2x8x128xf32> to vector<2x8x128xbf16>
    %83 = arith.truncf %79 : vector<2x8x128xf32> to vector<2x8x128xbf16>
    "tpu.trace_start"() <{level = 10 : i32, message = "bqd,bkd->bqk"}> : () -> ()
    %cst_29 = arith.constant dense<0.000000e+00> : vector<2x8x8xf32>
    %84 = tpu.matmul %82, %83, %cst_29 {dimension_numbers = #tpu.dot_dimension_numbers<[2], [2], [1], [1], [0, 0, 0, 1, 1, 1], [0], [0]>} : vector<2x8x128xbf16>, vector<2x8x128xbf16>, vector<2x8x8xf32> -> vector<2x8x8xf32>
    "tpu.trace_stop"() : () -> ()
    %cst_30 = arith.constant 2.500000e-01 : f32
    %85 = vector.broadcast %cst_30 : f32 to vector<2x8x8xf32>
    %86 = arith.mulf %84, %85 : vector<2x8x8xf32>
    %87 = vector.broadcast %13 : vector<2x1x8xf32> to vector<2x8x8xf32>
    %88 = arith.addf %86, %87 : vector<2x8x8xf32>
    %cst_31 = arith.constant dense<0xFF800000> : vector<2x8xf32>
    %89 = vector.multi_reduction <maximumf>, %88, %cst_31 [2] : vector<2x8x8xf32> to vector<2x8xf32>
    %90 = vector.shape_cast %89 : vector<2x8xf32> to vector<2x8x1xf32>
    %91 = vector.broadcast %90 : vector<2x8x1xf32> to vector<2x8x8xf32>
    %92 = arith.subf %88, %91 : vector<2x8x8xf32>
    %93 = math.exp %92 : vector<2x8x8xf32>
    %cst_32 = arith.constant dense<0.000000e+00> : vector<2x8xf32>
    %94 = vector.multi_reduction <add>, %93, %cst_32 [2] : vector<2x8x8xf32> to vector<2x8xf32>
    %95 = vector.shape_cast %94 : vector<2x8xf32> to vector<2x8x1xf32>
    %96 = tpu.reciprocal %95 {approx = true} : vector<2x8x1xf32> -> vector<2x8x1xf32>
    %97 = vector.broadcast %96 : vector<2x8x1xf32> to vector<2x8x8xf32>
    %98 = arith.mulf %93, %97 : vector<2x8x8xf32>
    %99 = arith.truncf %98 : vector<2x8x8xf32> to vector<2x8x8xbf16>
    %100 = arith.truncf %81 : vector<2x8x128xf32> to vector<2x8x128xbf16>
    "tpu.trace_start"() <{level = 10 : i32, message = "bqk,bkd->bqd"}> : () -> ()
    %cst_33 = arith.constant dense<0.000000e+00> : vector<2x8x128xf32>
    %101 = tpu.matmul %99, %100, %cst_33 {dimension_numbers = #tpu.dot_dimension_numbers<[2], [1], [1], [2], [0, 0, 0, 1, 1, 2], [0], [0]>} : vector<2x8x8xbf16>, vector<2x8x128xbf16>, vector<2x8x128xf32> -> vector<2x8x128xf32>
    "tpu.trace_stop"() : () -> ()
    %102 = vector.shape_cast %101 : vector<2x8x128xf32> to vector<16x128xf32>
    %103 = arith.truncf %102 : vector<16x128xf32> to vector<16x128xbf16>
    %104 = vector.extract_strided_slice %45 {offsets = [128, 0], sizes = [128, 128], strides = [1, 1]} : vector<256x128xbf16> to vector<128x128xbf16>
    %cst_34 = arith.constant dense<0.000000e+00> : vector<16x128xf32>
    %105 = tpu.matmul %103, %104, %cst_34 {dimension_numbers = #tpu.dot_dimension_numbers<[1], [0], [0], [1], [0, 0, 1, 1], [], []>} : vector<16x128xbf16>, vector<128x128xbf16>, vector<16x128xf32> -> vector<16x128xf32>
    %106 = arith.addf %75, %105 : vector<16x128xf32>
    %c1 = arith.constant 1 : index
    %c0_35 = arith.constant 0 : index
    %107 = vector.load %arg9[%c1, %c0_35] : memref<20x768xf32, #tpu.memory_space<vmem>>, vector<1x128xf32>
    %108 = vector.broadcast %107 : vector<1x128xf32> to vector<16x128xf32>
    %109 = arith.addf %106, %108 : vector<16x128xf32>
    %110 = arith.addf %109, %36 : vector<16x128xf32>
    %c2 = arith.constant 2 : index
    %c0_36 = arith.constant 0 : index
    %111 = vector.load %arg9[%c2, %c0_36] : memref<20x768xf32, #tpu.memory_space<vmem>>, vector<1x128xf32>
    %c3 = arith.constant 3 : index
    %c0_37 = arith.constant 0 : index
    %112 = vector.load %arg9[%c3, %c0_37] : memref<20x768xf32, #tpu.memory_space<vmem>>, vector<1x128xf32>
    %cst_38 = arith.constant dense<0.000000e+00> : vector<16xf32>
    %113 = vector.multi_reduction <add>, %110, %cst_38 [1] : vector<16x128xf32> to vector<16xf32>
    %114 = vector.shape_cast %113 : vector<16xf32> to vector<16x1xf32>
    %cst_39 = arith.constant 3.125000e-02 : f32
    %115 = vector.broadcast %cst_39 : f32 to vector<16x1xf32>
    %116 = arith.mulf %114, %115 : vector<16x1xf32>
    %117 = vector.broadcast %116 : vector<16x1xf32> to vector<16x128xf32>
    %118 = arith.subf %110, %117 : vector<16x128xf32>
    %119 = vector.broadcast %4 : vector<1x128xf32> to vector<16x128xf32>
    %120 = arith.mulf %118, %119 : vector<16x128xf32>
    %121 = arith.mulf %120, %120 : vector<16x128xf32>
    %cst_40 = arith.constant dense<0.000000e+00> : vector<16xf32>
    %122 = vector.multi_reduction <add>, %121, %cst_40 [1] : vector<16x128xf32> to vector<16xf32>
    %123 = vector.shape_cast %122 : vector<16xf32> to vector<16x1xf32>
    %cst_41 = arith.constant 3.125000e-02 : f32
    %124 = vector.broadcast %cst_41 : f32 to vector<16x1xf32>
    %125 = arith.mulf %123, %124 : vector<16x1xf32>
    %cst_42 = arith.constant 9.99999974E-6 : f32
    %126 = vector.broadcast %cst_42 : f32 to vector<16x1xf32>
    %127 = arith.addf %125, %126 : vector<16x1xf32>
    %128 = math.rsqrt %127 : vector<16x1xf32>
    %129 = vector.broadcast %128 : vector<16x1xf32> to vector<16x128xf32>
    %130 = arith.mulf %120, %129 : vector<16x128xf32>
    %131 = vector.broadcast %111 : vector<1x128xf32> to vector<16x128xf32>
    %132 = arith.mulf %130, %131 : vector<16x128xf32>
    %133 = vector.broadcast %112 : vector<1x128xf32> to vector<16x128xf32>
    %134 = arith.addf %132, %133 : vector<16x128xf32>
    %135 = arith.truncf %134 : vector<16x128xf32> to vector<16x128xbf16>
    %c0_43 = arith.constant 0 : index
    %c0_44 = arith.constant 0 : index
    %c0_45 = arith.constant 0 : index
    %136 = vector.load %arg7[%c0_43, %c0_44, %c0_45] : memref<2x128x128xbf16, #tpu.memory_space<vmem>>, vector<1x128x128xbf16>
    %137 = vector.shape_cast %136 : vector<1x128x128xbf16> to vector<128x128xbf16>
    %cst_46 = arith.constant dense<0.000000e+00> : vector<16x128xf32>
    %138 = tpu.matmul %135, %137, %cst_46 {dimension_numbers = #tpu.dot_dimension_numbers<[1], [0], [0], [1], [0, 0, 1, 1], [], []>} : vector<16x128xbf16>, vector<128x128xbf16>, vector<16x128xf32> -> vector<16x128xf32>
    %c4 = arith.constant 4 : index
    %c0_47 = arith.constant 0 : index
    %139 = vector.load %arg9[%c4, %c0_47] : memref<20x768xf32, #tpu.memory_space<vmem>>, vector<1x128xf32>
    %140 = vector.broadcast %139 : vector<1x128xf32> to vector<16x128xf32>
    %141 = arith.addf %138, %140 : vector<16x128xf32>
    %142 = arith.mulf %141, %141 : vector<16x128xf32>
    %143 = arith.mulf %141, %142 : vector<16x128xf32>
    %cst_48 = arith.constant 4.471500e-02 : f32
    %144 = vector.broadcast %cst_48 : f32 to vector<16x128xf32>
    %145 = arith.mulf %144, %143 : vector<16x128xf32>
    %146 = arith.addf %141, %145 : vector<16x128xf32>
    %cst_49 = arith.constant 0.797884583 : f32
    %147 = vector.broadcast %cst_49 : f32 to vector<16x128xf32>
    %148 = arith.mulf %147, %146 : vector<16x128xf32>
    %149 = math.tanh %148 : vector<16x128xf32>
    %cst_50 = arith.constant 1.000000e+00 : f32
    %150 = vector.broadcast %cst_50 : f32 to vector<16x128xf32>
    %151 = arith.addf %150, %149 : vector<16x128xf32>
    %cst_51 = arith.constant 5.000000e-01 : f32
    %152 = vector.broadcast %cst_51 : f32 to vector<16x128xf32>
    %153 = arith.mulf %152, %151 : vector<16x128xf32>
    %154 = arith.mulf %141, %153 : vector<16x128xf32>
    %155 = arith.truncf %154 : vector<16x128xf32> to vector<16x128xbf16>
    %c0_52 = arith.constant 0 : index
    %c0_53 = arith.constant 0 : index
    %c0_54 = arith.constant 0 : index
    %156 = vector.load %arg8[%c0_52, %c0_53, %c0_54] : memref<2x128x128xbf16, #tpu.memory_space<vmem>>, vector<1x128x128xbf16>
    %157 = vector.shape_cast %156 : vector<1x128x128xbf16> to vector<128x128xbf16>
    %cst_55 = arith.constant dense<0.000000e+00> : vector<16x128xf32>
    %158 = tpu.matmul %155, %157, %cst_55 {dimension_numbers = #tpu.dot_dimension_numbers<[1], [0], [0], [1], [0, 0, 1, 1], [], []>} : vector<16x128xbf16>, vector<128x128xbf16>, vector<16x128xf32> -> vector<16x128xf32>
    %c5 = arith.constant 5 : index
    %c0_56 = arith.constant 0 : index
    %159 = vector.load %arg9[%c5, %c0_56] : memref<20x768xf32, #tpu.memory_space<vmem>>, vector<1x128xf32>
    %160 = vector.broadcast %159 : vector<1x128xf32> to vector<16x128xf32>
    %161 = arith.addf %158, %160 : vector<16x128xf32>
    %162 = arith.addf %161, %134 : vector<16x128xf32>
    %c6 = arith.constant 6 : index
    %c0_57 = arith.constant 0 : index
    %163 = vector.load %arg9[%c6, %c0_57] : memref<20x768xf32, #tpu.memory_space<vmem>>, vector<1x128xf32>
    %c7 = arith.constant 7 : index
    %c0_58 = arith.constant 0 : index
    %164 = vector.load %arg9[%c7, %c0_58] : memref<20x768xf32, #tpu.memory_space<vmem>>, vector<1x128xf32>
    %cst_59 = arith.constant dense<0.000000e+00> : vector<16xf32>
    %165 = vector.multi_reduction <add>, %162, %cst_59 [1] : vector<16x128xf32> to vector<16xf32>
    %166 = vector.shape_cast %165 : vector<16xf32> to vector<16x1xf32>
    %cst_60 = arith.constant 3.125000e-02 : f32
    %167 = vector.broadcast %cst_60 : f32 to vector<16x1xf32>
    %168 = arith.mulf %166, %167 : vector<16x1xf32>
    %169 = vector.broadcast %168 : vector<16x1xf32> to vector<16x128xf32>
    %170 = arith.subf %162, %169 : vector<16x128xf32>
    %171 = vector.broadcast %4 : vector<1x128xf32> to vector<16x128xf32>
    %172 = arith.mulf %170, %171 : vector<16x128xf32>
    %173 = arith.mulf %172, %172 : vector<16x128xf32>
    %cst_61 = arith.constant dense<0.000000e+00> : vector<16xf32>
    %174 = vector.multi_reduction <add>, %173, %cst_61 [1] : vector<16x128xf32> to vector<16xf32>
    %175 = vector.shape_cast %174 : vector<16xf32> to vector<16x1xf32>
    %cst_62 = arith.constant 3.125000e-02 : f32
    %176 = vector.broadcast %cst_62 : f32 to vector<16x1xf32>
    %177 = arith.mulf %175, %176 : vector<16x1xf32>
    %cst_63 = arith.constant 9.99999974E-6 : f32
    %178 = vector.broadcast %cst_63 : f32 to vector<16x1xf32>
    %179 = arith.addf %177, %178 : vector<16x1xf32>
    %180 = math.rsqrt %179 : vector<16x1xf32>
    %181 = vector.broadcast %180 : vector<16x1xf32> to vector<16x128xf32>
    %182 = arith.mulf %172, %181 : vector<16x128xf32>
    %183 = vector.broadcast %163 : vector<1x128xf32> to vector<16x128xf32>
    %184 = arith.mulf %182, %183 : vector<16x128xf32>
    %185 = vector.broadcast %164 : vector<1x128xf32> to vector<16x128xf32>
    %186 = arith.addf %184, %185 : vector<16x128xf32>
    %187 = arith.truncf %186 : vector<16x128xf32> to vector<16x128xbf16>
    %c1_64 = arith.constant 1 : index
    %c0_65 = arith.constant 0 : index
    %c0_66 = arith.constant 0 : index
    %188 = vector.load %arg5[%c1_64, %c0_65, %c0_66] : memref<2x128x768xbf16, #tpu.memory_space<vmem>>, vector<1x128x768xbf16>
    %189 = vector.shape_cast %188 : vector<1x128x768xbf16> to vector<128x768xbf16>
    %cst_67 = arith.constant dense<0.000000e+00> : vector<16x768xf32>
    %190 = tpu.matmul %187, %189, %cst_67 {dimension_numbers = #tpu.dot_dimension_numbers<[1], [0], [0], [1], [0, 0, 1, 1], [], []>} : vector<16x128xbf16>, vector<128x768xbf16>, vector<16x768xf32> -> vector<16x768xf32>
    %c8 = arith.constant 8 : index
    %c0_68 = arith.constant 0 : index
    %191 = vector.load %arg9[%c8, %c0_68] : memref<20x768xf32, #tpu.memory_space<vmem>>, vector<1x768xf32>
    %192 = vector.broadcast %191 : vector<1x768xf32> to vector<16x768xf32>
    %193 = arith.addf %190, %192 : vector<16x768xf32>
    %c1_69 = arith.constant 1 : index
    %c0_70 = arith.constant 0 : index
    %c0_71 = arith.constant 0 : index
    %194 = vector.load %arg6[%c1_69, %c0_70, %c0_71] : memref<2x256x128xbf16, #tpu.memory_space<vmem>>, vector<1x256x128xbf16>
    %195 = vector.shape_cast %194 : vector<1x256x128xbf16> to vector<256x128xbf16>
    %196 = vector.extract_strided_slice %193 {offsets = [0, 0], sizes = [16, 128], strides = [1, 1]} : vector<16x768xf32> to vector<16x128xf32>
    %197 = vector.shape_cast %196 : vector<16x128xf32> to vector<2x8x128xf32>
    %198 = vector.extract_strided_slice %193 {offsets = [0, 256], sizes = [16, 128], strides = [1, 1]} : vector<16x768xf32> to vector<16x128xf32>
    %199 = vector.shape_cast %198 : vector<16x128xf32> to vector<2x8x128xf32>
    %200 = vector.extract_strided_slice %193 {offsets = [0, 512], sizes = [16, 128], strides = [1, 1]} : vector<16x768xf32> to vector<16x128xf32>
    %201 = vector.shape_cast %200 : vector<16x128xf32> to vector<2x8x128xf32>
    %202 = arith.truncf %197 : vector<2x8x128xf32> to vector<2x8x128xbf16>
    %203 = arith.truncf %199 : vector<2x8x128xf32> to vector<2x8x128xbf16>
    "tpu.trace_start"() <{level = 10 : i32, message = "bqd,bkd->bqk"}> : () -> ()
    %cst_72 = arith.constant dense<0.000000e+00> : vector<2x8x8xf32>
    %204 = tpu.matmul %202, %203, %cst_72 {dimension_numbers = #tpu.dot_dimension_numbers<[2], [2], [1], [1], [0, 0, 0, 1, 1, 1], [0], [0]>} : vector<2x8x128xbf16>, vector<2x8x128xbf16>, vector<2x8x8xf32> -> vector<2x8x8xf32>
    "tpu.trace_stop"() : () -> ()
    %cst_73 = arith.constant 2.500000e-01 : f32
    %205 = vector.broadcast %cst_73 : f32 to vector<2x8x8xf32>
    %206 = arith.mulf %204, %205 : vector<2x8x8xf32>
    %207 = vector.broadcast %13 : vector<2x1x8xf32> to vector<2x8x8xf32>
    %208 = arith.addf %206, %207 : vector<2x8x8xf32>
    %cst_74 = arith.constant dense<0xFF800000> : vector<2x8xf32>
    %209 = vector.multi_reduction <maximumf>, %208, %cst_74 [2] : vector<2x8x8xf32> to vector<2x8xf32>
    %210 = vector.shape_cast %209 : vector<2x8xf32> to vector<2x8x1xf32>
    %211 = vector.broadcast %210 : vector<2x8x1xf32> to vector<2x8x8xf32>
    %212 = arith.subf %208, %211 : vector<2x8x8xf32>
    %213 = math.exp %212 : vector<2x8x8xf32>
    %cst_75 = arith.constant dense<0.000000e+00> : vector<2x8xf32>
    %214 = vector.multi_reduction <add>, %213, %cst_75 [2] : vector<2x8x8xf32> to vector<2x8xf32>
    %215 = vector.shape_cast %214 : vector<2x8xf32> to vector<2x8x1xf32>
    %216 = tpu.reciprocal %215 {approx = true} : vector<2x8x1xf32> -> vector<2x8x1xf32>
    %217 = vector.broadcast %216 : vector<2x8x1xf32> to vector<2x8x8xf32>
    %218 = arith.mulf %213, %217 : vector<2x8x8xf32>
    %219 = arith.truncf %218 : vector<2x8x8xf32> to vector<2x8x8xbf16>
    %220 = arith.truncf %201 : vector<2x8x128xf32> to vector<2x8x128xbf16>
    "tpu.trace_start"() <{level = 10 : i32, message = "bqk,bkd->bqd"}> : () -> ()
    %cst_76 = arith.constant dense<0.000000e+00> : vector<2x8x128xf32>
    %221 = tpu.matmul %219, %220, %cst_76 {dimension_numbers = #tpu.dot_dimension_numbers<[2], [1], [1], [2], [0, 0, 0, 1, 1, 2], [0], [0]>} : vector<2x8x8xbf16>, vector<2x8x128xbf16>, vector<2x8x128xf32> -> vector<2x8x128xf32>
    "tpu.trace_stop"() : () -> ()
    %222 = vector.shape_cast %221 : vector<2x8x128xf32> to vector<16x128xf32>
    %223 = arith.truncf %222 : vector<16x128xf32> to vector<16x128xbf16>
    %224 = vector.extract_strided_slice %195 {offsets = [0, 0], sizes = [128, 128], strides = [1, 1]} : vector<256x128xbf16> to vector<128x128xbf16>
    %cst_77 = arith.constant dense<0.000000e+00> : vector<16x128xf32>
    %225 = tpu.matmul %223, %224, %cst_77 {dimension_numbers = #tpu.dot_dimension_numbers<[1], [0], [0], [1], [0, 0, 1, 1], [], []>} : vector<16x128xbf16>, vector<128x128xbf16>, vector<16x128xf32> -> vector<16x128xf32>
    %226 = vector.extract_strided_slice %193 {offsets = [0, 128], sizes = [16, 128], strides = [1, 1]} : vector<16x768xf32> to vector<16x128xf32>
    %227 = vector.shape_cast %226 : vector<16x128xf32> to vector<2x8x128xf32>
    %228 = vector.extract_strided_slice %193 {offsets = [0, 384], sizes = [16, 128], strides = [1, 1]} : vector<16x768xf32> to vector<16x128xf32>
    %229 = vector.shape_cast %228 : vector<16x128xf32> to vector<2x8x128xf32>
    %230 = vector.extract_strided_slice %193 {offsets = [0, 640], sizes = [16, 128], strides = [1, 1]} : vector<16x768xf32> to vector<16x128xf32>
    %231 = vector.shape_cast %230 : vector<16x128xf32> to vector<2x8x128xf32>
    %232 = arith.truncf %227 : vector<2x8x128xf32> to vector<2x8x128xbf16>
    %233 = arith.truncf %229 : vector<2x8x128xf32> to vector<2x8x128xbf16>
    "tpu.trace_start"() <{level = 10 : i32, message = "bqd,bkd->bqk"}> : () -> ()
    %cst_78 = arith.constant dense<0.000000e+00> : vector<2x8x8xf32>
    %234 = tpu.matmul %232, %233, %cst_78 {dimension_numbers = #tpu.dot_dimension_numbers<[2], [2], [1], [1], [0, 0, 0, 1, 1, 1], [0], [0]>} : vector<2x8x128xbf16>, vector<2x8x128xbf16>, vector<2x8x8xf32> -> vector<2x8x8xf32>
    "tpu.trace_stop"() : () -> ()
    %cst_79 = arith.constant 2.500000e-01 : f32
    %235 = vector.broadcast %cst_79 : f32 to vector<2x8x8xf32>
    %236 = arith.mulf %234, %235 : vector<2x8x8xf32>
    %237 = vector.broadcast %13 : vector<2x1x8xf32> to vector<2x8x8xf32>
    %238 = arith.addf %236, %237 : vector<2x8x8xf32>
    %cst_80 = arith.constant dense<0xFF800000> : vector<2x8xf32>
    %239 = vector.multi_reduction <maximumf>, %238, %cst_80 [2] : vector<2x8x8xf32> to vector<2x8xf32>
    %240 = vector.shape_cast %239 : vector<2x8xf32> to vector<2x8x1xf32>
    %241 = vector.broadcast %240 : vector<2x8x1xf32> to vector<2x8x8xf32>
    %242 = arith.subf %238, %241 : vector<2x8x8xf32>
    %243 = math.exp %242 : vector<2x8x8xf32>
    %cst_81 = arith.constant dense<0.000000e+00> : vector<2x8xf32>
    %244 = vector.multi_reduction <add>, %243, %cst_81 [2] : vector<2x8x8xf32> to vector<2x8xf32>
    %245 = vector.shape_cast %244 : vector<2x8xf32> to vector<2x8x1xf32>
    %246 = tpu.reciprocal %245 {approx = true} : vector<2x8x1xf32> -> vector<2x8x1xf32>
    %247 = vector.broadcast %246 : vector<2x8x1xf32> to vector<2x8x8xf32>
    %248 = arith.mulf %243, %247 : vector<2x8x8xf32>
    %249 = arith.truncf %248 : vector<2x8x8xf32> to vector<2x8x8xbf16>
    %250 = arith.truncf %231 : vector<2x8x128xf32> to vector<2x8x128xbf16>
    "tpu.trace_start"() <{level = 10 : i32, message = "bqk,bkd->bqd"}> : () -> ()
    %cst_82 = arith.constant dense<0.000000e+00> : vector<2x8x128xf32>
    %251 = tpu.matmul %249, %250, %cst_82 {dimension_numbers = #tpu.dot_dimension_numbers<[2], [1], [1], [2], [0, 0, 0, 1, 1, 2], [0], [0]>} : vector<2x8x8xbf16>, vector<2x8x128xbf16>, vector<2x8x128xf32> -> vector<2x8x128xf32>
    "tpu.trace_stop"() : () -> ()
    %252 = vector.shape_cast %251 : vector<2x8x128xf32> to vector<16x128xf32>
    %253 = arith.truncf %252 : vector<16x128xf32> to vector<16x128xbf16>
    %254 = vector.extract_strided_slice %195 {offsets = [128, 0], sizes = [128, 128], strides = [1, 1]} : vector<256x128xbf16> to vector<128x128xbf16>
    %cst_83 = arith.constant dense<0.000000e+00> : vector<16x128xf32>
    %255 = tpu.matmul %253, %254, %cst_83 {dimension_numbers = #tpu.dot_dimension_numbers<[1], [0], [0], [1], [0, 0, 1, 1], [], []>} : vector<16x128xbf16>, vector<128x128xbf16>, vector<16x128xf32> -> vector<16x128xf32>
    %256 = arith.addf %225, %255 : vector<16x128xf32>
    %c9 = arith.constant 9 : index
    %c0_84 = arith.constant 0 : index
    %257 = vector.load %arg9[%c9, %c0_84] : memref<20x768xf32, #tpu.memory_space<vmem>>, vector<1x128xf32>
    %258 = vector.broadcast %257 : vector<1x128xf32> to vector<16x128xf32>
    %259 = arith.addf %256, %258 : vector<16x128xf32>
    %260 = arith.addf %259, %186 : vector<16x128xf32>
    %c10 = arith.constant 10 : index
    %c0_85 = arith.constant 0 : index
    %261 = vector.load %arg9[%c10, %c0_85] : memref<20x768xf32, #tpu.memory_space<vmem>>, vector<1x128xf32>
    %c11 = arith.constant 11 : index
    %c0_86 = arith.constant 0 : index
    %262 = vector.load %arg9[%c11, %c0_86] : memref<20x768xf32, #tpu.memory_space<vmem>>, vector<1x128xf32>
    %cst_87 = arith.constant dense<0.000000e+00> : vector<16xf32>
    %263 = vector.multi_reduction <add>, %260, %cst_87 [1] : vector<16x128xf32> to vector<16xf32>
    %264 = vector.shape_cast %263 : vector<16xf32> to vector<16x1xf32>
    %cst_88 = arith.constant 3.125000e-02 : f32
    %265 = vector.broadcast %cst_88 : f32 to vector<16x1xf32>
    %266 = arith.mulf %264, %265 : vector<16x1xf32>
    %267 = vector.broadcast %266 : vector<16x1xf32> to vector<16x128xf32>
    %268 = arith.subf %260, %267 : vector<16x128xf32>
    %269 = vector.broadcast %4 : vector<1x128xf32> to vector<16x128xf32>
    %270 = arith.mulf %268, %269 : vector<16x128xf32>
    %271 = arith.mulf %270, %270 : vector<16x128xf32>
    %cst_89 = arith.constant dense<0.000000e+00> : vector<16xf32>
    %272 = vector.multi_reduction <add>, %271, %cst_89 [1] : vector<16x128xf32> to vector<16xf32>
    %273 = vector.shape_cast %272 : vector<16xf32> to vector<16x1xf32>
    %cst_90 = arith.constant 3.125000e-02 : f32
    %274 = vector.broadcast %cst_90 : f32 to vector<16x1xf32>
    %275 = arith.mulf %273, %274 : vector<16x1xf32>
    %cst_91 = arith.constant 9.99999974E-6 : f32
    %276 = vector.broadcast %cst_91 : f32 to vector<16x1xf32>
    %277 = arith.addf %275, %276 : vector<16x1xf32>
    %278 = math.rsqrt %277 : vector<16x1xf32>
    %279 = vector.broadcast %278 : vector<16x1xf32> to vector<16x128xf32>
    %280 = arith.mulf %270, %279 : vector<16x128xf32>
    %281 = vector.broadcast %261 : vector<1x128xf32> to vector<16x128xf32>
    %282 = arith.mulf %280, %281 : vector<16x128xf32>
    %283 = vector.broadcast %262 : vector<1x128xf32> to vector<16x128xf32>
    %284 = arith.addf %282, %283 : vector<16x128xf32>
    %285 = arith.truncf %284 : vector<16x128xf32> to vector<16x128xbf16>
    %c1_92 = arith.constant 1 : index
    %c0_93 = arith.constant 0 : index
    %c0_94 = arith.constant 0 : index
    %286 = vector.load %arg7[%c1_92, %c0_93, %c0_94] : memref<2x128x128xbf16, #tpu.memory_space<vmem>>, vector<1x128x128xbf16>
    %287 = vector.shape_cast %286 : vector<1x128x128xbf16> to vector<128x128xbf16>
    %cst_95 = arith.constant dense<0.000000e+00> : vector<16x128xf32>
    %288 = tpu.matmul %285, %287, %cst_95 {dimension_numbers = #tpu.dot_dimension_numbers<[1], [0], [0], [1], [0, 0, 1, 1], [], []>} : vector<16x128xbf16>, vector<128x128xbf16>, vector<16x128xf32> -> vector<16x128xf32>
    %c12 = arith.constant 12 : index
    %c0_96 = arith.constant 0 : index
    %289 = vector.load %arg9[%c12, %c0_96] : memref<20x768xf32, #tpu.memory_space<vmem>>, vector<1x128xf32>
    %290 = vector.broadcast %289 : vector<1x128xf32> to vector<16x128xf32>
    %291 = arith.addf %288, %290 : vector<16x128xf32>
    %292 = arith.mulf %291, %291 : vector<16x128xf32>
    %293 = arith.mulf %291, %292 : vector<16x128xf32>
    %cst_97 = arith.constant 4.471500e-02 : f32
    %294 = vector.broadcast %cst_97 : f32 to vector<16x128xf32>
    %295 = arith.mulf %294, %293 : vector<16x128xf32>
    %296 = arith.addf %291, %295 : vector<16x128xf32>
    %cst_98 = arith.constant 0.797884583 : f32
    %297 = vector.broadcast %cst_98 : f32 to vector<16x128xf32>
    %298 = arith.mulf %297, %296 : vector<16x128xf32>
    %299 = math.tanh %298 : vector<16x128xf32>
    %cst_99 = arith.constant 1.000000e+00 : f32
    %300 = vector.broadcast %cst_99 : f32 to vector<16x128xf32>
    %301 = arith.addf %300, %299 : vector<16x128xf32>
    %cst_100 = arith.constant 5.000000e-01 : f32
    %302 = vector.broadcast %cst_100 : f32 to vector<16x128xf32>
    %303 = arith.mulf %302, %301 : vector<16x128xf32>
    %304 = arith.mulf %291, %303 : vector<16x128xf32>
    %305 = arith.truncf %304 : vector<16x128xf32> to vector<16x128xbf16>
    %c1_101 = arith.constant 1 : index
    %c0_102 = arith.constant 0 : index
    %c0_103 = arith.constant 0 : index
    %306 = vector.load %arg8[%c1_101, %c0_102, %c0_103] : memref<2x128x128xbf16, #tpu.memory_space<vmem>>, vector<1x128x128xbf16>
    %307 = vector.shape_cast %306 : vector<1x128x128xbf16> to vector<128x128xbf16>
    %cst_104 = arith.constant dense<0.000000e+00> : vector<16x128xf32>
    %308 = tpu.matmul %305, %307, %cst_104 {dimension_numbers = #tpu.dot_dimension_numbers<[1], [0], [0], [1], [0, 0, 1, 1], [], []>} : vector<16x128xbf16>, vector<128x128xbf16>, vector<16x128xf32> -> vector<16x128xf32>
    %c13 = arith.constant 13 : index
    %c0_105 = arith.constant 0 : index
    %309 = vector.load %arg9[%c13, %c0_105] : memref<20x768xf32, #tpu.memory_space<vmem>>, vector<1x128xf32>
    %310 = vector.broadcast %309 : vector<1x128xf32> to vector<16x128xf32>
    %311 = arith.addf %308, %310 : vector<16x128xf32>
    %312 = arith.addf %311, %284 : vector<16x128xf32>
    %c14 = arith.constant 14 : index
    %c0_106 = arith.constant 0 : index
    %313 = vector.load %arg9[%c14, %c0_106] : memref<20x768xf32, #tpu.memory_space<vmem>>, vector<1x128xf32>
    %c15 = arith.constant 15 : index
    %c0_107 = arith.constant 0 : index
    %314 = vector.load %arg9[%c15, %c0_107] : memref<20x768xf32, #tpu.memory_space<vmem>>, vector<1x128xf32>
    %cst_108 = arith.constant dense<0.000000e+00> : vector<16xf32>
    %315 = vector.multi_reduction <add>, %312, %cst_108 [1] : vector<16x128xf32> to vector<16xf32>
    %316 = vector.shape_cast %315 : vector<16xf32> to vector<16x1xf32>
    %cst_109 = arith.constant 3.125000e-02 : f32
    %317 = vector.broadcast %cst_109 : f32 to vector<16x1xf32>
    %318 = arith.mulf %316, %317 : vector<16x1xf32>
    %319 = vector.broadcast %318 : vector<16x1xf32> to vector<16x128xf32>
    %320 = arith.subf %312, %319 : vector<16x128xf32>
    %321 = vector.broadcast %4 : vector<1x128xf32> to vector<16x128xf32>
    %322 = arith.mulf %320, %321 : vector<16x128xf32>
    %323 = arith.mulf %322, %322 : vector<16x128xf32>
    %cst_110 = arith.constant dense<0.000000e+00> : vector<16xf32>
    %324 = vector.multi_reduction <add>, %323, %cst_110 [1] : vector<16x128xf32> to vector<16xf32>
    %325 = vector.shape_cast %324 : vector<16xf32> to vector<16x1xf32>
    %cst_111 = arith.constant 3.125000e-02 : f32
    %326 = vector.broadcast %cst_111 : f32 to vector<16x1xf32>
    %327 = arith.mulf %325, %326 : vector<16x1xf32>
    %cst_112 = arith.constant 9.99999974E-6 : f32
    %328 = vector.broadcast %cst_112 : f32 to vector<16x1xf32>
    %329 = arith.addf %327, %328 : vector<16x1xf32>
    %330 = math.rsqrt %329 : vector<16x1xf32>
    %331 = vector.broadcast %330 : vector<16x1xf32> to vector<16x128xf32>
    %332 = arith.mulf %322, %331 : vector<16x128xf32>
    %333 = vector.broadcast %313 : vector<1x128xf32> to vector<16x128xf32>
    %334 = arith.mulf %332, %333 : vector<16x128xf32>
    %335 = vector.broadcast %314 : vector<1x128xf32> to vector<16x128xf32>
    %336 = arith.addf %334, %335 : vector<16x128xf32>
    %337 = vector.shape_cast %336 : vector<16x128xf32> to vector<2x8x128xf32>
    %338 = vector.extract_strided_slice %337 {offsets = [0, 0, 0], sizes = [2, 1, 128], strides = [1, 1, 1]} : vector<2x8x128xf32> to vector<2x1x128xf32>
    %339 = vector.shape_cast %338 : vector<2x1x128xf32> to vector<2x128xf32>
    %340 = arith.truncf %339 : vector<2x128xf32> to vector<2x128xbf16>
    %c0_113 = arith.constant 0 : index
    %c0_114 = arith.constant 0 : index
    %c0_115 = arith.constant 0 : index
    %341 = vector.load %arg10[%c0_113, %c0_114, %c0_115] : memref<2x128x128xbf16, #tpu.memory_space<vmem>>, vector<1x128x128xbf16>
    %342 = vector.shape_cast %341 : vector<1x128x128xbf16> to vector<128x128xbf16>
    %cst_116 = arith.constant dense<0.000000e+00> : vector<2x128xf32>
    %343 = tpu.matmul %340, %342, %cst_116 {dimension_numbers = #tpu.dot_dimension_numbers<[1], [0], [0], [1], [0, 0, 1, 1], [], []>} : vector<2x128xbf16>, vector<128x128xbf16>, vector<2x128xf32> -> vector<2x128xf32>
    %344 = vector.broadcast %7 : vector<1x128xf32> to vector<2x128xf32>
    %345 = arith.addf %343, %344 : vector<2x128xf32>
    %346 = math.tanh %345 : vector<2x128xf32>
    %347 = arith.truncf %346 : vector<2x128xf32> to vector<2x128xbf16>
    %c1_117 = arith.constant 1 : index
    %c0_118 = arith.constant 0 : index
    %c0_119 = arith.constant 0 : index
    %348 = vector.load %arg10[%c1_117, %c0_118, %c0_119] : memref<2x128x128xbf16, #tpu.memory_space<vmem>>, vector<1x128x128xbf16>
    %349 = vector.shape_cast %348 : vector<1x128x128xbf16> to vector<128x128xbf16>
    %cst_120 = arith.constant dense<0.000000e+00> : vector<2x128xf32>
    %350 = tpu.matmul %347, %349, %cst_120 {dimension_numbers = #tpu.dot_dimension_numbers<[1], [0], [0], [1], [0, 0, 1, 1], [], []>} : vector<2x128xbf16>, vector<128x128xbf16>, vector<2x128xf32> -> vector<2x128xf32>
    %351 = vector.broadcast %8 : vector<1x128xf32> to vector<2x128xf32>
    %352 = arith.addf %350, %351 : vector<2x128xf32>
    %353 = arith.truncf %336 : vector<16x128xf32> to vector<16x128xbf16>
    %c1_121 = arith.constant 1 : index
    %c0_122 = arith.constant 0 : index
    %c0_123 = arith.constant 0 : index
    %354 = vector.load %arg10[%c1_121, %c0_122, %c0_123] : memref<2x128x128xbf16, #tpu.memory_space<vmem>>, vector<1x128x128xbf16>
    %355 = vector.shape_cast %354 : vector<1x128x128xbf16> to vector<128x128xbf16>
    %cst_124 = arith.constant dense<0.000000e+00> : vector<16x128xf32>
    %356 = tpu.matmul %353, %355, %cst_124 {dimension_numbers = #tpu.dot_dimension_numbers<[1], [0], [0], [1], [0, 0, 1, 1], [], []>} : vector<16x128xbf16>, vector<128x128xbf16>, vector<16x128xf32> -> vector<16x128xf32>
    %357 = vector.broadcast %8 : vector<1x128xf32> to vector<16x128xf32>
    %358 = arith.addf %356, %357 : vector<16x128xf32>
    %c0_125 = arith.constant 0 : index
    %c0_126 = arith.constant 0 : index
    %359 = vector.load %arg11[%c0_125, %c0_126] : memref<2x128xf32, #tpu.memory_space<vmem>>, vector<2x128xf32>
    tpu.vector_store %arg11[%c0_125, %c0_126], %352 {strides = array<i32>} : memref<2x128xf32, #tpu.memory_space<vmem>>, vector<2x128xf32>,
    %c0_127 = arith.constant 0 : index
    %c0_128 = arith.constant 0 : index
    %360 = vector.load %arg12[%c0_127, %c0_128] : memref<16x128xf32, #tpu.memory_space<vmem>>, vector<16x128xf32>
    tpu.vector_store %arg12[%c0_127, %c0_128], %358 {strides = array<i32>} : memref<16x128xf32, #tpu.memory_space<vmem>>, vector<16x128xf32>,
    %c0_129 = arith.constant 0 : index
    %c0_130 = arith.constant 0 : index
    %361 = vector.load %arg2[%c0_129, %c0_130] : memref<2x1xi32, #tpu.memory_space<vmem>>, vector<2x1xi32>
    %362 = tpu.iota {dimensions = array<i32: 1>} : vector<2x128xi32>
    %c0_i32 = arith.constant 0 : i32
    %363 = vector.broadcast %c0_i32 : i32 to vector<2x128xi32>
    %364 = arith.cmpi sge, %362, %363 : vector<2x128xi32>
    %c2_i32 = arith.constant 2 : i32
    %365 = vector.broadcast %c2_i32 : i32 to vector<2x128xi32>
    %366 = arith.cmpi slt, %362, %365 : vector<2x128xi32>
    %367 = arith.andi %364, %366 : vector<2x128xi1>
    %cst_131 = arith.constant -1.000000e+30 : f32
    %368 = vector.broadcast %cst_131 : f32 to vector<2x128xf32>
    %369 = arith.select %367, %352, %368 : vector<2x128xi1>, vector<2x128xf32>
    %cst_132 = arith.constant dense<0xFF800000> : vector<2xf32>
    %370 = vector.multi_reduction <maximumf>, %369, %cst_132 [1] : vector<2x128xf32> to vector<2xf32>
    %371 = vector.shape_cast %370 : vector<2xf32> to vector<2x1xf32>
    %372 = vector.broadcast %371 : vector<2x1xf32> to vector<2x128xf32>
    %373 = arith.subf %369, %372 : vector<2x128xf32>
    %374 = math.exp %373 : vector<2x128xf32>
    %cst_133 = arith.constant dense<0.000000e+00> : vector<2xf32>
    %375 = vector.multi_reduction <add>, %374, %cst_133 [1] : vector<2x128xf32> to vector<2xf32>
    %376 = vector.shape_cast %375 : vector<2xf32> to vector<2x1xf32>
    %377 = math.log %376 : vector<2x1xf32>
    %378 = arith.addf %371, %377 : vector<2x1xf32>
    %379 = vector.broadcast %361 : vector<2x1xi32> to vector<2x128xi32>
    %380 = arith.cmpi eq, %362, %379 : vector<2x128xi32>
    %cst_134 = arith.constant 0.000000e+00 : f32
    %381 = vector.broadcast %cst_134 : f32 to vector<2x128xf32>
    %382 = arith.select %380, %369, %381 : vector<2x128xi1>, vector<2x128xf32>
    %cst_135 = arith.constant dense<0.000000e+00> : vector<2xf32>
    %383 = vector.multi_reduction <add>, %382, %cst_135 [1] : vector<2x128xf32> to vector<2xf32>
    %384 = vector.shape_cast %383 : vector<2xf32> to vector<2x1xf32>
    %385 = arith.subf %378, %384 : vector<2x1xf32>
    %cst_136 = arith.constant dense<0.000000e+00> : vector<1xf32>
    %386 = vector.multi_reduction <add>, %385, %cst_136 [0] : vector<2x1xf32> to vector<1xf32>
    %387 = vector.shape_cast %386 : vector<1xf32> to vector<1x1xf32>
    %cst_137 = arith.constant 5.000000e-01 : f32
    %388 = vector.broadcast %cst_137 : f32 to vector<1x1xf32>
    %389 = arith.mulf %387, %388 : vector<1x1xf32>
    %c0_138 = arith.constant 0 : index
    %c0_139 = arith.constant 0 : index
    %390 = vector.load %arg13[%c0_138, %c0_139] : memref<1x1xf32, #tpu.memory_space<vmem>>, vector<1x1xf32>
    tpu.vector_store %arg13[%c0_138, %c0_139], %389 {strides = array<i32>} : memref<1x1xf32, #tpu.memory_space<vmem>>, vector<1x1xf32>,
    %c0_140 = arith.constant 0 : index
    %c0_141 = arith.constant 0 : index
    %391 = vector.load %arg3[%c0_140, %c0_141] : memref<16x1xi32, #tpu.memory_space<vmem>>, vector<16x1xi32>
    %c2_i32_142 = arith.constant 2 : i32
    %392 = vector.broadcast %c2_i32_142 : i32 to vector<16x1xi32>
    %393 = arith.addi %391, %392 : vector<16x1xi32>
    %394 = tpu.iota {dimensions = array<i32: 1>} : vector<16x128xi32>
    %c2_i32_143 = arith.constant 2 : i32
    %395 = vector.broadcast %c2_i32_143 : i32 to vector<16x128xi32>
    %396 = arith.cmpi sge, %394, %395 : vector<16x128xi32>
    %c4_i32 = arith.constant 4 : i32
    %397 = vector.broadcast %c4_i32 : i32 to vector<16x128xi32>
    %398 = arith.cmpi slt, %394, %397 : vector<16x128xi32>
    %399 = arith.andi %396, %398 : vector<16x128xi1>
    %cst_144 = arith.constant -1.000000e+30 : f32
    %400 = vector.broadcast %cst_144 : f32 to vector<16x128xf32>
    %401 = arith.select %399, %358, %400 : vector<16x128xi1>, vector<16x128xf32>
    %cst_145 = arith.constant dense<0xFF800000> : vector<16xf32>
    %402 = vector.multi_reduction <maximumf>, %401, %cst_145 [1] : vector<16x128xf32> to vector<16xf32>
    %403 = vector.shape_cast %402 : vector<16xf32> to vector<16x1xf32>
    %404 = vector.broadcast %403 : vector<16x1xf32> to vector<16x128xf32>
    %405 = arith.subf %401, %404 : vector<16x128xf32>
    %406 = math.exp %405 : vector<16x128xf32>
    %cst_146 = arith.constant dense<0.000000e+00> : vector<16xf32>
    %407 = vector.multi_reduction <add>, %406, %cst_146 [1] : vector<16x128xf32> to vector<16xf32>
    %408 = vector.shape_cast %407 : vector<16xf32> to vector<16x1xf32>
    %409 = math.log %408 : vector<16x1xf32>
    %410 = arith.addf %403, %409 : vector<16x1xf32>
    %411 = vector.broadcast %393 : vector<16x1xi32> to vector<16x128xi32>
    %412 = arith.cmpi eq, %394, %411 : vector<16x128xi32>
    %cst_147 = arith.constant 0.000000e+00 : f32
    %413 = vector.broadcast %cst_147 : f32 to vector<16x128xf32>
    %414 = arith.select %412, %401, %413 : vector<16x128xi1>, vector<16x128xf32>
    %cst_148 = arith.constant dense<0.000000e+00> : vector<16xf32>
    %415 = vector.multi_reduction <add>, %414, %cst_148 [1] : vector<16x128xf32> to vector<16xf32>
    %416 = vector.shape_cast %415 : vector<16xf32> to vector<16x1xf32>
    %417 = arith.subf %410, %416 : vector<16x1xf32>
    %c0_149 = arith.constant 0 : index
    %c0_150 = arith.constant 0 : index
    %418 = vector.load %arg4[%c0_149, %c0_150] : memref<16x1xf32, #tpu.memory_space<vmem>>, vector<16x1xf32>
    %419 = arith.mulf %417, %418 : vector<16x1xf32>
    %cst_151 = arith.constant dense<0.000000e+00> : vector<1xf32>
    %420 = vector.multi_reduction <add>, %419, %cst_151 [0] : vector<16x1xf32> to vector<1xf32>
    %421 = vector.shape_cast %420 : vector<1xf32> to vector<1x1xf32>
    %c0_152 = arith.constant 0 : index
    %c0_153 = arith.constant 0 : index
    %422 = vector.load %arg14[%c0_152, %c0_153] : memref<1x1xf32, #tpu.memory_space<vmem>>, vector<1x1xf32>
    tpu.vector_store %arg14[%c0_152, %c0_153], %421 {strides = array<i32>} : memref<1x1xf32, #tpu.memory_space<vmem>>, vector<1x1xf32>,
    return
  }
}

</mosaic_0001>

<llo_original>
// kernel: _device_forward.1
$region0: #{_device_forward.1}
  #allocation0 [shape = 'u32[]', space=smem, size = 0x4, offset = 0x4, fixed_abs, tag = 'smem constant byte address 0x4 - core index']
  #allocation1 [shape = 'u32[144,128]{1,0:T(1,128)}', space=vmem, size = 0x12000, scoped, tag = 'internal scratch']
  %s0 = inlined_call_operand.vmem [shape: f32[16,128], index: 0, kind: input, shape index: {}]
  %s1 = inlined_call_operand.vmem [shape: f32[2,1,8], index: 1, kind: input, shape index: {}]
  %s2 = inlined_call_operand.vmem [shape: s32[2,1], index: 2, kind: input, shape index: {}]
  %s3 = inlined_call_operand.vmem [shape: s32[16,1], index: 3, kind: input, shape index: {}]
  %s4 = inlined_call_operand.vmem [shape: f32[16,1], index: 4, kind: input, shape index: {}]
  %s5 = inlined_call_operand.hbm [shape: bf16[2,128,768], index: 5, kind: input, shape index: {}]
  %s6 = inlined_call_operand.vmem [shape: bf16[2,256,128], index: 6, kind: input, shape index: {}]
  %s7 = inlined_call_operand.hbm [shape: bf16[2,128,128], index: 7, kind: input, shape index: {}]
  %s8 = inlined_call_operand.hbm [shape: bf16[2,128,128], index: 8, kind: input, shape index: {}]
  %s9 = inlined_call_operand.hbm [shape: f32[20,768], index: 9, kind: input, shape index: {}]
  %s10 = inlined_call_operand.hbm [shape: bf16[2,128,128], index: 10, kind: input, shape index: {}]
  %s11 = inlined_call_operand.hbm [shape: f32[2,128], index: 11, kind: output, shape index: {0}]
  %s12 = inlined_call_operand.hbm [shape: f32[16,128], index: 12, kind: output, shape index: {1}]
  %s13 = inlined_call_operand.hbm [shape: f32[1,1], index: 13, kind: output, shape index: {2}]
  %s14 = inlined_call_operand.hbm [shape: f32[1,1], index: 14, kind: output, shape index: {3}]
  %15 = xla_tuple %s11, %s12, %s13, %s14
  %s16 = sld [smem:[#allocation0]]
  $region98: #{_device_forward.1} parent=0
    _
  %s18 = ssub.s32 1, %s16
  %s19 = scalar_select 0, %s18, %s16
  $region1: #{_device_forward.1} parent=0
    #allocation2 [shape = 'u8[393216]{0}', space=vmem, size = 0x60000, scoped, tag = 'input window, operand 5, single buffered']
    #allocation3 [shape = 's32[1]{0}', space=sflag, size = 0x4, scoped, tag = 'scoped memory for _device_forward.1']
    #allocation4 [shape = 's32[1]{0}', space=sflag, size = 0x4, scoped, tag = 'scoped memory for _device_forward.1']
    #allocation5 [shape = 'u8[65536]{0}', space=vmem, size = 0x10000, scoped, tag = 'input window, operand 7, single buffered']
    #allocation6 [shape = 's32[1]{0}', space=sflag, size = 0x4, scoped, tag = 'scoped memory for _device_forward.1']
    #allocation7 [shape = 'u8[65536]{0}', space=vmem, size = 0x10000, scoped, tag = 'input window, operand 8, single buffered']
    #allocation8 [shape = 'u8[73728]{0}', space=vmem, size = 0x12000, scoped, tag = 'input window, operand 9, single buffered']
    #allocation9 [shape = 's32[1]{0}', space=sflag, size = 0x4, scoped, tag = 'scoped memory for _device_forward.1']
    #allocation10 [shape = 'u8[65536]{0}', space=vmem, size = 0x10000, scoped, tag = 'input window, operand 10, single buffered']
    #allocation11 [shape = 'u8[1024]{0}', space=vmem, size = 0x400, scoped, tag = 'output window, operand 0, single buffered']
    #allocation12 [shape = 'u8[8192]{0}', space=vmem, size = 0x2000, scoped, tag = 'output window, operand 1, single buffered']
    #allocation13 [shape = 's32[1]{0}', space=sflag, size = 0x4, scoped, tag = 'scoped memory for _device_forward.1']
    #allocation14 [shape = 'u8[512]{0}', space=vmem, size = 0x400, scoped, tag = 'output window, operand 2, single buffered']
    #allocation15 [shape = 'u8[512]{0}', space=vmem, size = 0x400, scoped, tag = 'output window, operand 3, single buffered']
    #allocation16 [shape = 's32[1]{0}', space=sflag, size = 0x4, scoped, tag = 'scoped memory for _device_forward.1']
    %20 = vsyncpa [#allocation3], 0
    %21 = vsyncpa [#allocation6], 0
    %22 = vsyncpa [#allocation9], 0
    %23 = vsyncpa [#allocation4], 0
    %24 = vsyncpa [#allocation13], 0
    %25 = vsyncpa [#allocation16], 0
    // Predicated region
    $region2: #{_device_forward.1} parent=1 // pred_check
      _
    $region3: #{_device_forward.1} parent=1 // pred_check_branch
      %27 = sbr.rel (0) target = $region5
    $region4: #{_device_forward.1} parent=1 // pred_region
      _
    $region5: #{_device_forward.1} parent=1 // pred_fallthru
      _
    // Predicated region
    $region6: #{_device_forward.1} parent=1 // pred_check
      _
    $region7: #{_device_forward.1} parent=1 // pred_check_branch
      %29 = sbr.rel (0) target = $region9
    $region8: #{_device_forward.1} parent=1 // pred_region
      _
    $region9: #{_device_forward.1} parent=1 // pred_fallthru
      _
    // Predicated region
    $region10: #{_device_forward.1} parent=1 // pred_check
      _
    $region11: #{_device_forward.1} parent=1 // pred_check_branch
      %31 = sbr.rel (0) target = $region13
    $region12: #{_device_forward.1} parent=1 // pred_region
      _
    $region13: #{_device_forward.1} parent=1 // pred_fallthru
      _
    // Predicated region
    $region14: #{_device_forward.1} parent=1 // pred_check
      _
    $region15: #{_device_forward.1} parent=1 // pred_check_branch
      %33 = sbr.rel (0) target = $region17
    $region16: #{_device_forward.1} parent=1 // pred_region
      _
    $region17: #{_device_forward.1} parent=1 // pred_fallthru
      _
    // Predicated region
    $region18: #{_device_forward.1} parent=1 // pred_check
      _
    $region19: #{_device_forward.1} parent=1 // pred_check_branch
      %35 = sbr.rel (0) target = $region21
    $region20: #{_device_forward.1} parent=1 // pred_region
      _
    $region21: #{_device_forward.1} parent=1 // pred_fallthru
      _
    // Predicated region
    $region22: #{_device_forward.1} parent=1 // pred_check
      _
    $region23: #{_device_forward.1} parent=1 // pred_check_branch
      %37 = sbr.rel (0) target = $region25
    $region24: #{_device_forward.1} parent=1 // pred_region
      %s39 = ssub.s32 12288, 12288
      %40 = vsyncadd [#allocation3], %s39
      %s41 = sshll.u32 [#allocation2], 4
      %s42 = int_to_ptr.vmem [resolvable:$true] %s41
      %47 = dma.hbm_to_vmem [thread:$0]  %s5, 12288, %s42, [#allocation3], 384, 384, 24
    $region25: #{_device_forward.1} parent=1 // pred_fallthru
      _
    // Predicated region
    $region26: #{_device_forward.1} parent=1 // pred_check
      _
    $region27: #{_device_forward.1} parent=1 // pred_check_branch
      %49 = sbr.rel (0) target = $region29
    $region28: #{_device_forward.1} parent=1 // pred_region
      _
    $region29: #{_device_forward.1} parent=1 // pred_fallthru
      _
    // Predicated region
    $region30: #{_device_forward.1} parent=1 // pred_check
      _
    $region31: #{_device_forward.1} parent=1 // pred_check_branch
      %51 = sbr.rel (0) target = $region33
    $region32: #{_device_forward.1} parent=1 // pred_region
      %s53 = ssub.s32 2048, 2048
      %54 = vsyncadd [#allocation6], %s53
      %s55 = sshll.u32 [#allocation5], 4
      %s56 = int_to_ptr.vmem [resolvable:$true] %s55
      %61 = dma.hbm_to_vmem [thread:$0]  %s7, 2048, %s56, [#allocation6], 64, 64, 4
    $region33: #{_device_forward.1} parent=1 // pred_fallthru
      _
    // Predicated region
    $region34: #{_device_forward.1} parent=1 // pred_check
      _
    $region35: #{_device_forward.1} parent=1 // pred_check_branch
      %63 = sbr.rel (0) target = $region37
    $region36: #{_device_forward.1} parent=1 // pred_region
      %s65 = ssub.s32 2048, 2048
      %66 = vsyncadd [#allocation6], %s65
      %s67 = sshll.u32 [#allocation7], 4
      %s68 = int_to_ptr.vmem [resolvable:$true] %s67
      %73 = dma.hbm_to_vmem [thread:$0]  %s8, 2048, %s68, [#allocation6], 64, 64, 4
    $region37: #{_device_forward.1} parent=1 // pred_fallthru
      _
    // Predicated region
    $region38: #{_device_forward.1} parent=1 // pred_check
      _
    $region39: #{_device_forward.1} parent=1 // pred_check_branch
      %75 = sbr.rel (0) target = $region41
    $region40: #{_device_forward.1} parent=1 // pred_region
      %s77 = ssub.s32 2304, 2304
      %78 = vsyncadd [#allocation9], %s77
      %s79 = sshll.u32 [#allocation8], 4
      %s80 = int_to_ptr.vmem [resolvable:$true] %s79
      %85 = dma.hbm_to_vmem [thread:$0]  %s9, 2304, %s80, [#allocation9], 768, 768, 48
    $region41: #{_device_forward.1} parent=1 // pred_fallthru
      _
    // Predicated region
    $region42: #{_device_forward.1} parent=1 // pred_check
      _
    $region43: #{_device_forward.1} parent=1 // pred_check_branch
      %87 = sbr.rel (0) target = $region45
    $region44: #{_device_forward.1} parent=1 // pred_region
      %s89 = ssub.s32 2048, 2048
      %90 = vsyncadd [#allocation9], %s89
      %s91 = sshll.u32 [#allocation10], 4
      %s92 = int_to_ptr.vmem [resolvable:$true] %s91
      %97 = dma.hbm_to_vmem [thread:$0]  %s10, 2048, %s92, [#allocation9], 64, 64, 4
    $region45: #{_device_forward.1} parent=1 // pred_fallthru
      _
    // Predicated region
    $region46: #{_device_forward.1} parent=1 // pred_check
      _
    $region47: #{_device_forward.1} parent=1 // pred_check_branch
      %99 = sbr.rel (0) target = $region49
    $region48: #{_device_forward.1} parent=1 // pred_region
      %100 = dma.done [#allocation3], 12288
    $region49: #{_device_forward.1} parent=1 // pred_fallthru
      _
    // Predicated region
    $region50: #{_device_forward.1} parent=1 // pred_check
      _
    $region51: #{_device_forward.1} parent=1 // pred_check_branch
      %102 = sbr.rel (0) target = $region53
    $region52: #{_device_forward.1} parent=1 // pred_region
      %103 = dma.done [#allocation6], 2048
    $region53: #{_device_forward.1} parent=1 // pred_fallthru
      _
    // Predicated region
    $region54: #{_device_forward.1} parent=1 // pred_check
      _
    $region55: #{_device_forward.1} parent=1 // pred_check_branch
      %105 = sbr.rel (0) target = $region57
    $region56: #{_device_forward.1} parent=1 // pred_region
      %106 = dma.done [#allocation6], 2048
    $region57: #{_device_forward.1} parent=1 // pred_fallthru
      _
    // Predicated region
    $region58: #{_device_forward.1} parent=1 // pred_check
      _
    $region59: #{_device_forward.1} parent=1 // pred_check_branch
      %108 = sbr.rel (0) target = $region61
    $region60: #{_device_forward.1} parent=1 // pred_region
      %109 = dma.done [#allocation9], 2304
    $region61: #{_device_forward.1} parent=1 // pred_fallthru
      _
    // Predicated region
    $region62: #{_device_forward.1} parent=1 // pred_check
      _
    $region63: #{_device_forward.1} parent=1 // pred_check_branch
      %111 = sbr.rel (0) target = $region65
    $region64: #{_device_forward.1} parent=1 // pred_region
      %112 = dma.done [#allocation9], 2048
    $region65: #{_device_forward.1} parent=1 // pred_fallthru
      _
    %v114 = vlaneseq
    %v115 = vand.u32 %v114, 127
    %vm116 = vcmp.lt.s32.totalorder %v115, 32
    %v117 = vsel %vm116, 1, 0
    %v118 = vcvt.s32.f32 %v117
    %v119 = vld [vmem:[#allocation8 + $0x60] ss:$0 sm:$0xff]
    %v120 = vld [vmem:[#allocation8 + $0x61] ss:$0 sm:$0xff]
    %v121 = vld [vmem:[#allocation8 + $0x62] ss:$0 sm:$0xff]
    %v122 = vld [vmem:[#allocation8 + $0x63] ss:$0 sm:$0xff]
    %v123 = vld [vmem:[%s1] sm:$0x1]
    %v124 = vld [vmem:[%s1 + $0x1] sm:$0x1]
    %v125 = vsub.f32 1.0, %v123
    %v126 = vsub.f32 1.0, %v124
    %v127 = vmul.f32 %v125, -1e+09
    %v128 = vmul.f32 %v126, -1e+09
    %v129 = vld [vmem:[%s0] sm:$0xff]
    %v130 = vld [vmem:[%s0 + $0x8] sm:$0xff]
    %131 = vadd.xlane.f32.xlu0 %v129
    %v132 = vpop.xlane.xlu0 %131
    %133 = vadd.xlane.f32.xlu0 %v130
    %v134 = vpop.xlane.xlu0 %133
    %v135 = vmul.f32 %v132, 0.03125
    %v136 = vmul.f32 %v134, 0.03125
    %v137 = vsub.f32 %v129, %v135
    %v138 = vsub.f32 %v130, %v136
    %v139 = vmul.f32 %v137, %v118
    %v140 = vmul.f32 %v138, %v118
    %v141 = vmul.f32 %v139, %v139
    %v142 = vmul.f32 %v140, %v140
    %143 = vadd.xlane.f32.xlu0 %v141
    %v144 = vpop.xlane.xlu0 %143
    %145 = vadd.xlane.f32.xlu0 %v142
    %v146 = vpop.xlane.xlu0 %145
    %v147 = vmul.f32 %v144, 0.03125
    %v148 = vmul.f32 %v146, 0.03125
    %v149 = vadd.f32 %v147, 1e-05
    %v150 = vadd.f32 %v148, 1e-05
    %v151 = vrsqrt.pop %v149
    %v152 = vrsqrt.pop %v150
    %v153 = vmul.f32 %v139, %v151
    %v154 = vmul.f32 %v140, %v152
    %v155 = vmul.f32 %v153, %v119
    %v156 = vmul.f32 %v154, %v119
    %v157 = vadd.f32 %v155, %v120
    %v158 = vadd.f32 %v156, %v120
    %v159 = vpack.c.bf16 %v158, %v157
    %v160 = vld [vmem:[#allocation2] sm:$0xff]
    %v161 = vld [vmem:[#allocation2 + $0x8] sm:$0xff]
    %v162 = vld [vmem:[#allocation2 + $0x10] sm:$0xff]
    %v163 = vld [vmem:[#allocation2 + $0x18] sm:$0xff]
    %v164 = vld [vmem:[#allocation2 + $0x20] sm:$0xff]
    %v165 = vld [vmem:[#allocation2 + $0x28] sm:$0xff]
    %v166 = vld [vmem:[#allocation2 + $0x30] sm:$0xff]
    %v167 = vld [vmem:[#allocation2 + $0x38] sm:$0xff]
    %v168 = vld [vmem:[#allocation2 + $0x40] sm:$0xff]
    %v169 = vld [vmem:[#allocation2 + $0x48] sm:$0xff]
    %v170 = vld [vmem:[#allocation2 + $0x50] sm:$0xff]
    %v171 = vld [vmem:[#allocation2 + $0x58] sm:$0xff]
    %v172 = vld [vmem:[#allocation2 + $0x60] sm:$0xff]
    %v173 = vld [vmem:[#allocation2 + $0x68] sm:$0xff]
    %v174 = vld [vmem:[#allocation2 + $0x70] sm:$0xff]
    %v175 = vld [vmem:[#allocation2 + $0x78] sm:$0xff]
    %v176 = vld [vmem:[#allocation2 + $0x80] sm:$0xff]
    %v177 = vld [vmem:[#allocation2 + $0x88] sm:$0xff]
    %v178 = vld [vmem:[#allocation2 + $0x90] sm:$0xff]
    %v179 = vld [vmem:[#allocation2 + $0x98] sm:$0xff]
    %v180 = vld [vmem:[#allocation2 + $0xa0] sm:$0xff]
    %v181 = vld [vmem:[#allocation2 + $0xa8] sm:$0xff]
    %v182 = vld [vmem:[#allocation2 + $0xb0] sm:$0xff]
    %v183 = vld [vmem:[#allocation2 + $0xb8] sm:$0xff]
    %v184 = vld [vmem:[#allocation2 + $0xc0] sm:$0xff]
    %v185 = vld [vmem:[#allocation2 + $0xc8] sm:$0xff]
    %v186 = vld [vmem:[#allocation2 + $0xd0] sm:$0xff]
    %v187 = vld [vmem:[#allocation2 + $0xd8] sm:$0xff]
    %v188 = vld [vmem:[#allocation2 + $0xe0] sm:$0xff]
    %v189 = vld [vmem:[#allocation2 + $0xe8] sm:$0xff]
    %v190 = vld [vmem:[#allocation2 + $0xf0] sm:$0xff]
    %v191 = vld [vmem:[#allocation2 + $0xf8] sm:$0xff]
    %v192 = vld [vmem:[#allocation2 + $0x100] sm:$0xff]
    %v193 = vld [vmem:[#allocation2 + $0x108] sm:$0xff]
    %v194 = vld [vmem:[#allocation2 + $0x110] sm:$0xff]
    %v195 = vld [vmem:[#allocation2 + $0x118] sm:$0xff]
    %v196 = vld [vmem:[#allocation2 + $0x120] sm:$0xff]
    %v197 = vld [vmem:[#allocation2 + $0x128] sm:$0xff]
    %v198 = vld [vmem:[#allocation2 + $0x130] sm:$0xff]
    %v199 = vld [vmem:[#allocation2 + $0x138] sm:$0xff]
    %v200 = vld [vmem:[#allocation2 + $0x140] sm:$0xff]
    %v201 = vld [vmem:[#allocation2 + $0x148] sm:$0xff]
    %v202 = vld [vmem:[#allocation2 + $0x150] sm:$0xff]
    %v203 = vld [vmem:[#allocation2 + $0x158] sm:$0xff]
    %v204 = vld [vmem:[#allocation2 + $0x160] sm:$0xff]
    %v205 = vld [vmem:[#allocation2 + $0x168] sm:$0xff]
    %v206 = vld [vmem:[#allocation2 + $0x170] sm:$0xff]
    %v207 = vld [vmem:[#allocation2 + $0x178] sm:$0xff]
    %v208 = vld [vmem:[#allocation8] ss:$8 sm:$0xf]
    %v209 = vld [vmem:[#allocation8] ss:$8 sm:$0x30]
    %v210 = vor.u32 %v208, %v209
    %v212 = vlaneseq
    %v213 = vshrl.u32 %v212, 7
    %v214 = vsub.s32 0, %v213
    %v215 = vrot.slane %v210, %v214
    %v216 = vlaneseq
    %v217 = vshrl.u32 %v216, 7
    %v218 = vsub.s32 1, %v217
    %v219 = vrot.slane %v210, %v218
    %v220 = vlaneseq
    %v221 = vshrl.u32 %v220, 7
    %v222 = vsub.s32 2, %v221
    %v223 = vrot.slane %v210, %v222
    %v224 = vlaneseq
    %v225 = vshrl.u32 %v224, 7
    %v226 = vsub.s32 3, %v225
    %v227 = vrot.slane %v210, %v226
    %v228 = vlaneseq
    %v229 = vshrl.u32 %v228, 7
    %v230 = vsub.s32 4, %v229
    %v231 = vrot.slane %v210, %v230
    %v232 = vlaneseq
    %v233 = vshrl.u32 %v232, 7
    %v234 = vsub.s32 5, %v233
    %v235 = vrot.slane %v210, %v234
    %v290 = vunpack.c.l.b16 %v160
    %v291 = vunpack.c.h.b16 %v160
    %v292 = vunpack.c.l.b16 %v161
    %v293 = vunpack.c.h.b16 %v161
    %v294 = vunpack.c.l.b16 %v162
    %v295 = vunpack.c.h.b16 %v162
    %v296 = vunpack.c.l.b16 %v163
    %v297 = vunpack.c.h.b16 %v163
    %v298 = vunpack.c.l.b16 %v164
    %v299 = vunpack.c.h.b16 %v164
    %v300 = vunpack.c.l.b16 %v165
    %v301 = vunpack.c.h.b16 %v165
    %v302 = vunpack.c.l.b16 %v166
    %v303 = vunpack.c.h.b16 %v166
    %v304 = vunpack.c.l.b16 %v167
    %v305 = vunpack.c.h.b16 %v167
    %v306 = vunpack.c.l.b16 %v168
    %v307 = vunpack.c.h.b16 %v168
    %v308 = vunpack.c.l.b16 %v169
    %v309 = vunpack.c.h.b16 %v169
    %v310 = vunpack.c.l.b16 %v170
    %v311 = vunpack.c.h.b16 %v170
    %v312 = vunpack.c.l.b16 %v171
    %v313 = vunpack.c.h.b16 %v171
    %v314 = vunpack.c.l.b16 %v172
    %v315 = vunpack.c.h.b16 %v172
    %v316 = vunpack.c.l.b16 %v173
    %v317 = vunpack.c.h.b16 %v173
    %v318 = vunpack.c.l.b16 %v174
    %v319 = vunpack.c.h.b16 %v174
    %v320 = vunpack.c.l.b16 %v175
    %v321 = vunpack.c.h.b16 %v175
    %v322 = vunpack.c.l.b16 %v176
    %v323 = vunpack.c.h.b16 %v176
    %v324 = vunpack.c.l.b16 %v177
    %v325 = vunpack.c.h.b16 %v177
    %v326 = vunpack.c.l.b16 %v178
    %v327 = vunpack.c.h.b16 %v178
    %v328 = vunpack.c.l.b16 %v179
    %v329 = vunpack.c.h.b16 %v179
    %v330 = vunpack.c.l.b16 %v180
    %v331 = vunpack.c.h.b16 %v180
    %v332 = vunpack.c.l.b16 %v181
    %v333 = vunpack.c.h.b16 %v181
    %v334 = vunpack.c.l.b16 %v182
    %v335 = vunpack.c.h.b16 %v182
    %v336 = vunpack.c.l.b16 %v183
    %v337 = vunpack.c.h.b16 %v183
    %v338 = vunpack.c.l.b16 %v184
    %v339 = vunpack.c.h.b16 %v184
    %v340 = vunpack.c.l.b16 %v185
    %v341 = vunpack.c.h.b16 %v185
    %v342 = vunpack.c.l.b16 %v186
    %v343 = vunpack.c.h.b16 %v186
    %v344 = vunpack.c.l.b16 %v187
    %v345 = vunpack.c.h.b16 %v187
    %v346 = vunpack.c.l.b16 %v188
    %v347 = vunpack.c.h.b16 %v188
    %v348 = vunpack.c.l.b16 %v189
    %v349 = vunpack.c.h.b16 %v189
    %v350 = vunpack.c.l.b16 %v190
    %v351 = vunpack.c.h.b16 %v190
    %v352 = vunpack.c.l.b16 %v191
    %v353 = vunpack.c.h.b16 %v191
    %v354 = vunpack.c.l.b16 %v192
    %v355 = vunpack.c.h.b16 %v192
    %v356 = vunpack.c.l.b16 %v193
    %v357 = vunpack.c.h.b16 %v193
    %v358 = vunpack.c.l.b16 %v194
    %v359 = vunpack.c.h.b16 %v194
    %v360 = vunpack.c.l.b16 %v195
    %v361 = vunpack.c.h.b16 %v195
    %v362 = vunpack.c.l.b16 %v196
    %v363 = vunpack.c.h.b16 %v196
    %v364 = vunpack.c.l.b16 %v197
    %v365 = vunpack.c.h.b16 %v197
    %v366 = vunpack.c.l.b16 %v198
    %v367 = vunpack.c.h.b16 %v198
    %v368 = vunpack.c.l.b16 %v199
    %v369 = vunpack.c.h.b16 %v199
    %v370 = vunpack.c.l.b16 %v200
    %v371 = vunpack.c.h.b16 %v200
    %v372 = vunpack.c.l.b16 %v201
    %v373 = vunpack.c.h.b16 %v201
    %v374 = vunpack.c.l.b16 %v202
    %v375 = vunpack.c.h.b16 %v202
    %v376 = vunpack.c.l.b16 %v203
    %v377 = vunpack.c.h.b16 %v203
    %v378 = vunpack.c.l.b16 %v204
    %v379 = vunpack.c.h.b16 %v204
    %v380 = vunpack.c.l.b16 %v205
    %v381 = vunpack.c.h.b16 %v205
    %v382 = vunpack.c.l.b16 %v206
    %v383 = vunpack.c.h.b16 %v206
    %v384 = vunpack.c.l.b16 %v207
    %v385 = vunpack.c.h.b16 %v207
    %v386 = vpack.c.b16 %v296, %v290
    %v387 = vpack.c.b16 %v297, %v291
    %v388 = vpack.c.b16 %v298, %v292
    %v389 = vpack.c.b16 %v299, %v293
    %v390 = vpack.c.b16 %v300, %v294
    %v391 = vpack.c.b16 %v301, %v295
    %v392 = vpack.c.b16 %v308, %v302
    %v393 = vpack.c.b16 %v309, %v303
    %v394 = vpack.c.b16 %v310, %v304
    %v395 = vpack.c.b16 %v311, %v305
    %v396 = vpack.c.b16 %v312, %v306
    %v397 = vpack.c.b16 %v313, %v307
    %v398 = vpack.c.b16 %v320, %v314
    %v399 = vpack.c.b16 %v321, %v315
    %v400 = vpack.c.b16 %v322, %v316
    %v401 = vpack.c.b16 %v323, %v317
    %v402 = vpack.c.b16 %v324, %v318
    %v403 = vpack.c.b16 %v325, %v319
    %v404 = vpack.c.b16 %v332, %v326
    %v405 = vpack.c.b16 %v333, %v327
    %v406 = vpack.c.b16 %v334, %v328
    %v407 = vpack.c.b16 %v335, %v329
    %v408 = vpack.c.b16 %v336, %v330
    %v409 = vpack.c.b16 %v337, %v331
    %v410 = vpack.c.b16 %v344, %v338
    %v411 = vpack.c.b16 %v345, %v339
    %v412 = vpack.c.b16 %v346, %v340
    %v413 = vpack.c.b16 %v347, %v341
    %v414 = vpack.c.b16 %v348, %v342
    %v415 = vpack.c.b16 %v349, %v343
    %v416 = vpack.c.b16 %v356, %v350
    %v417 = vpack.c.b16 %v357, %v351
    %v418 = vpack.c.b16 %v358, %v352
    %v419 = vpack.c.b16 %v359, %v353
    %v420 = vpack.c.b16 %v360, %v354
    %v421 = vpack.c.b16 %v361, %v355
    %v422 = vpack.c.b16 %v368, %v362
    %v423 = vpack.c.b16 %v369, %v363
    %v424 = vpack.c.b16 %v370, %v364
    %v425 = vpack.c.b16 %v371, %v365
    %v426 = vpack.c.b16 %v372, %v366
    %v427 = vpack.c.b16 %v373, %v367
    %v428 = vpack.c.b16 %v380, %v374
    %v429 = vpack.c.b16 %v381, %v375
    %v430 = vpack.c.b16 %v382, %v376
    %v431 = vpack.c.b16 %v383, %v377
    %v432 = vpack.c.b16 %v384, %v378
    %v433 = vpack.c.b16 %v385, %v379
    %482 = vmatprep.subr.bf16.mxu0 %v387
    %483 = vmatpush1.bf16.msra.mxu0 %v386
    %484 = vmatprep.subr.bf16.mxu0 %v393
    %485 = vmatpush1.bf16.msra.mxu0 %v392
    %486 = vmatprep.subr.bf16.mxu0 %v399
    %487 = vmatpush1.bf16.msra.mxu0 %v398
    %488 = vmatprep.subr.bf16.mxu0 %v405
    %489 = vmatpush1.bf16.msra.mxu0 %v404
    %490 = vmatprep.subr.bf16.mxu0 %v411
    %491 = vmatpush1.bf16.msra.mxu0 %v410
    %492 = vmatprep.subr.bf16.mxu0 %v417
    %493 = vmatpush1.bf16.msra.mxu0 %v416
    %494 = vmatprep.subr.bf16.mxu0 %v423
    %495 = vmatpush1.bf16.msra.mxu0 %v422
    %496 = vmatprep.subr.bf16.mxu0 %v429
    %497 = vmatpush1.bf16.msra.mxu0 %v428
    %498 = vmatprep.subr.bf16.mxu0 0
    %499 = vmatpush1.bf16.msra.mxu0 0
    %500 = vmatprep.subr.bf16.mxu0 0
    %501 = vmatpush1.bf16.msra.mxu0 0
    %502 = vmatprep.subr.bf16.mxu0 0
    %503 = vmatpush1.bf16.msra.mxu0 0
    %504 = vmatprep.subr.bf16.mxu0 0
    %505 = vmatpush1.bf16.msra.mxu0 0
    %506 = vmatprep.subr.bf16.mxu0 0
    %507 = vmatpush1.bf16.msra.mxu0 0
    %508 = vmatprep.subr.bf16.mxu0 0
    %509 = vmatpush1.bf16.msra.mxu0 0
    %510 = vmatprep.subr.bf16.mxu0 0
    %511 = vmatpush1.bf16.msra.mxu0 0
    %512 = vmatprep.subr.bf16.mxu0 0
    %513 = vmatpush1.bf16.msra.mxu0 0
    %514 = vmatprep.mubr.bf16.mxu0 0
    %515 = vmatmul.mubr.bf16.gmra.mrb[0].mxu0 %v159
    %v516 = vpop.f32.mrb[0].mxu0
    %v517 = vadd.f32 %v215, %v516
    %v518 = vpop.f32.mrb[0].mxu0
    %v519 = vadd.f32 %v219, %v518
    %v520 = vpop.f32.mrb[0].mxu0
    %v521 = vadd.f32 %v215, %v520
    %v522 = vpop.f32.mrb[0].mxu0
    %v523 = vadd.f32 %v219, %v522
    %524 = vdwg.mxu0
    %525 = vmatprep.subr.bf16.mxu0 %v389
    %526 = vmatpush1.bf16.msra.mxu0 %v388
    %527 = vmatprep.subr.bf16.mxu0 %v395
    %528 = vmatpush1.bf16.msra.mxu0 %v394
    %529 = vmatprep.subr.bf16.mxu0 %v401
    %530 = vmatpush1.bf16.msra.mxu0 %v400
    %531 = vmatprep.subr.bf16.mxu0 %v407
    %532 = vmatpush1.bf16.msra.mxu0 %v406
    %533 = vmatprep.subr.bf16.mxu0 %v413
    %534 = vmatpush1.bf16.msra.mxu0 %v412
    %535 = vmatprep.subr.bf16.mxu0 %v419
    %536 = vmatpush1.bf16.msra.mxu0 %v418
    %537 = vmatprep.subr.bf16.mxu0 %v425
    %538 = vmatpush1.bf16.msra.mxu0 %v424
    %539 = vmatprep.subr.bf16.mxu0 %v431
    %540 = vmatpush1.bf16.msra.mxu0 %v430
    %541 = vmatprep.subr.bf16.mxu0 0
    %542 = vmatpush1.bf16.msra.mxu0 0
    %543 = vmatprep.subr.bf16.mxu0 0
    %544 = vmatpush1.bf16.msra.mxu0 0
    %545 = vmatprep.subr.bf16.mxu0 0
    %546 = vmatpush1.bf16.msra.mxu0 0
    %547 = vmatprep.subr.bf16.mxu0 0
    %548 = vmatpush1.bf16.msra.mxu0 0
    %549 = vmatprep.subr.bf16.mxu0 0
    %550 = vmatpush1.bf16.msra.mxu0 0
    %551 = vmatprep.subr.bf16.mxu0 0
    %552 = vmatpush1.bf16.msra.mxu0 0
    %553 = vmatprep.subr.bf16.mxu0 0
    %554 = vmatpush1.bf16.msra.mxu0 0
    %555 = vmatprep.subr.bf16.mxu0 0
    %556 = vmatpush1.bf16.msra.mxu0 0
    %557 = vmatprep.mubr.bf16.mxu0 0
    %558 = vmatmul.mubr.bf16.gmra.mrb[0].mxu0 %v159
    %v559 = vpop.f32.mrb[0].mxu0
    %v560 = vadd.f32 %v223, %v559
    %v561 = vpop.f32.mrb[0].mxu0
    %v562 = vadd.f32 %v227, %v561
    %v563 = vpop.f32.mrb[0].mxu0
    %v564 = vadd.f32 %v223, %v563
    %v565 = vpop.f32.mrb[0].mxu0
    %v566 = vadd.f32 %v227, %v565
    %567 = vdwg.mxu0
    %568 = vmatprep.subr.bf16.mxu0 %v391
    %569 = vmatpush1.bf16.msra.mxu0 %v390
    %570 = vmatprep.subr.bf16.mxu0 %v397
    %571 = vmatpush1.bf16.msra.mxu0 %v396
    %572 = vmatprep.subr.bf16.mxu0 %v403
    %573 = vmatpush1.bf16.msra.mxu0 %v402
    %574 = vmatprep.subr.bf16.mxu0 %v409
    %575 = vmatpush1.bf16.msra.mxu0 %v408
    %576 = vmatprep.subr.bf16.mxu0 %v415
    %577 = vmatpush1.bf16.msra.mxu0 %v414
    %578 = vmatprep.subr.bf16.mxu0 %v421
    %579 = vmatpush1.bf16.msra.mxu0 %v420
    %580 = vmatprep.subr.bf16.mxu0 %v427
    %581 = vmatpush1.bf16.msra.mxu0 %v426
    %582 = vmatprep.subr.bf16.mxu0 %v433
    %583 = vmatpush1.bf16.msra.mxu0 %v432
    %584 = vmatprep.subr.bf16.mxu0 0
    %585 = vmatpush1.bf16.msra.mxu0 0
    %586 = vmatprep.subr.bf16.mxu0 0
    %587 = vmatpush1.bf16.msra.mxu0 0
    %588 = vmatprep.subr.bf16.mxu0 0
    %589 = vmatpush1.bf16.msra.mxu0 0
    %590 = vmatprep.subr.bf16.mxu0 0
    %591 = vmatpush1.bf16.msra.mxu0 0
    %592 = vmatprep.subr.bf16.mxu0 0
    %593 = vmatpush1.bf16.msra.mxu0 0
    %594 = vmatprep.subr.bf16.mxu0 0
    %595 = vmatpush1.bf16.msra.mxu0 0
    %596 = vmatprep.subr.bf16.mxu0 0
    %597 = vmatpush1.bf16.msra.mxu0 0
    %598 = vmatprep.subr.bf16.mxu0 0
    %599 = vmatpush1.bf16.msra.mxu0 0
    %600 = vmatprep.mubr.bf16.mxu0 0
    %601 = vmatmul.mubr.bf16.gmra.mrb[0].mxu0 %v159
    %v602 = vpop.f32.mrb[0].mxu0
    %v603 = vadd.f32 %v231, %v602
    %v604 = vpop.f32.mrb[0].mxu0
    %v605 = vadd.f32 %v235, %v604
    %v606 = vpop.f32.mrb[0].mxu0
    %v607 = vadd.f32 %v231, %v606
    %v608 = vpop.f32.mrb[0].mxu0
    %v609 = vadd.f32 %v235, %v608
    %610 = vdwg.mxu0
    %v611 = vld [vmem:[%s6] sm:$0xf]
    %v612 = vld [vmem:[%s6 + $0x4] sm:$0xf]
    %v613 = vld [vmem:[%s6 + $0x8] sm:$0xf]
    %v614 = vld [vmem:[%s6 + $0xc] sm:$0xf]
    %v615 = vld [vmem:[%s6 + $0x10] sm:$0xf]
    %v616 = vld [vmem:[%s6 + $0x14] sm:$0xf]
    %v617 = vld [vmem:[%s6 + $0x18] sm:$0xf]
    %v618 = vld [vmem:[%s6 + $0x1c] sm:$0xf]
    %v619 = vld [vmem:[%s6 + $0x20] sm:$0xf]
    %v620 = vld [vmem:[%s6 + $0x24] sm:$0xf]
    %v621 = vld [vmem:[%s6 + $0x28] sm:$0xf]
    %v622 = vld [vmem:[%s6 + $0x2c] sm:$0xf]
    %v623 = vld [vmem:[%s6 + $0x30] sm:$0xf]
    %v624 = vld [vmem:[%s6 + $0x34] sm:$0xf]
    %v625 = vld [vmem:[%s6 + $0x38] sm:$0xf]
    %v626 = vld [vmem:[%s6 + $0x3c] sm:$0xf]
    %v627 = vld [vmem:[%s6 + $0x40] sm:$0xf]
    %v628 = vld [vmem:[%s6 + $0x44] sm:$0xf]
    %v629 = vld [vmem:[%s6 + $0x48] sm:$0xf]
    %v630 = vld [vmem:[%s6 + $0x4c] sm:$0xf]
    %v631 = vld [vmem:[%s6 + $0x50] sm:$0xf]
    %v632 = vld [vmem:[%s6 + $0x54] sm:$0xf]
    %v633 = vld [vmem:[%s6 + $0x58] sm:$0xf]
    %v634 = vld [vmem:[%s6 + $0x5c] sm:$0xf]
    %v635 = vld [vmem:[%s6 + $0x60] sm:$0xf]
    %v636 = vld [vmem:[%s6 + $0x64] sm:$0xf]
    %v637 = vld [vmem:[%s6 + $0x68] sm:$0xf]
    %v638 = vld [vmem:[%s6 + $0x6c] sm:$0xf]
    %v639 = vld [vmem:[%s6 + $0x70] sm:$0xf]
    %v640 = vld [vmem:[%s6 + $0x74] sm:$0xf]
    %v641 = vld [vmem:[%s6 + $0x78] sm:$0xf]
    %v642 = vld [vmem:[%s6 + $0x7c] sm:$0xf]
    %v643 = vpack.c.bf16 %v517, %v517
    %v644 = vpack.c.bf16 %v521, %v521
    %v645 = vpack.c.bf16 %v560, %v560
    %v646 = vpack.c.bf16 %v564, %v564
    %647 = vmatprep.subr.bf16.mxu0 0
    %648 = vmatpush1.bf16.xpose.msra.mxu0 %v645
    %649 = vmatprep.subr.bf16.mxu0 0
    %650 = vmatpush1.bf16.xpose.msra.mxu0 0
    %651 = vmatprep.subr.bf16.mxu0 0
    %652 = vmatpush1.bf16.xpose.msra.mxu0 0
    %653 = vmatprep.subr.bf16.mxu0 0
    %654 = vmatpush1.bf16.xpose.msra.mxu0 0
    %655 = vmatprep.subr.bf16.mxu0 0
    %656 = vmatpush1.bf16.xpose.msra.mxu0 0
    %657 = vmatprep.subr.bf16.mxu0 0
    %658 = vmatpush1.bf16.xpose.msra.mxu0 0
    %659 = vmatprep.subr.bf16.mxu0 0
    %660 = vmatpush1.bf16.xpose.msra.mxu0 0
    %661 = vmatprep.subr.bf16.mxu0 0
    %662 = vmatpush1.bf16.xpose.msra.mxu0 0
    %663 = vmatprep.subr.bf16.mxu0 0
    %664 = vmatpush1.bf16.xpose.msra.mxu0 0
    %665 = vmatprep.subr.bf16.mxu0 0
    %666 = vmatpush1.bf16.xpose.msra.mxu0 0
    %667 = vmatprep.subr.bf16.mxu0 0
    %668 = vmatpush1.bf16.xpose.msra.mxu0 0
    %669 = vmatprep.subr.bf16.mxu0 0
    %670 = vmatpush1.bf16.xpose.msra.mxu0 0
    %671 = vmatprep.subr.bf16.mxu0 0
    %672 = vmatpush1.bf16.xpose.msra.mxu0 0
    %673 = vmatprep.subr.bf16.mxu0 0
    %674 = vmatpush1.bf16.xpose.msra.mxu0 0
    %675 = vmatprep.subr.bf16.mxu0 0
    %676 = vmatpush1.bf16.xpose.msra.mxu0 0
    %677 = vmatprep.subr.bf16.mxu0 0
    %678 = vmatpush1.bf16.xpose.msra.mxu0 0
    %679 = vmatprep.mubr.bf16.mxu0 0
    %680 = vmatmul.mubr.bf16.gmra.mrb[0].mxu0 %v643
    %v681 = vpop.f32.mrb[0].mxu0
    %v682 = vadd.f32 0.0, %v681
    %v683 = vpop.f32.mrb[0].mxu0
    %v684 = vpop.f32.mrb[0].mxu0
    %v685 = vpop.f32.mrb[0].mxu0
    %686 = vdwg.mxu0
    %687 = vmatprep.subr.bf16.mxu0 0
    %688 = vmatpush1.bf16.xpose.msra.mxu0 %v646
    %689 = vmatprep.subr.bf16.mxu0 0
    %690 = vmatpush1.bf16.xpose.msra.mxu0 0
    %691 = vmatprep.subr.bf16.mxu0 0
    %692 = vmatpush1.bf16.xpose.msra.mxu0 0
    %693 = vmatprep.subr.bf16.mxu0 0
    %694 = vmatpush1.bf16.xpose.msra.mxu0 0
    %695 = vmatprep.subr.bf16.mxu0 0
    %696 = vmatpush1.bf16.xpose.msra.mxu0 0
    %697 = vmatprep.subr.bf16.mxu0 0
    %698 = vmatpush1.bf16.xpose.msra.mxu0 0
    %699 = vmatprep.subr.bf16.mxu0 0
    %700 = vmatpush1.bf16.xpose.msra.mxu0 0
    %701 = vmatprep.subr.bf16.mxu0 0
    %702 = vmatpush1.bf16.xpose.msra.mxu0 0
    %703 = vmatprep.subr.bf16.mxu0 0
    %704 = vmatpush1.bf16.xpose.msra.mxu0 0
    %705 = vmatprep.subr.bf16.mxu0 0
    %706 = vmatpush1.bf16.xpose.msra.mxu0 0
    %707 = vmatprep.subr.bf16.mxu0 0
    %708 = vmatpush1.bf16.xpose.msra.mxu0 0
    %709 = vmatprep.subr.bf16.mxu0 0
    %710 = vmatpush1.bf16.xpose.msra.mxu0 0
    %711 = vmatprep.subr.bf16.mxu0 0
    %712 = vmatpush1.bf16.xpose.msra.mxu0 0
    %713 = vmatprep.subr.bf16.mxu0 0
    %714 = vmatpush1.bf16.xpose.msra.mxu0 0
    %715 = vmatprep.subr.bf16.mxu0 0
    %716 = vmatpush1.bf16.xpose.msra.mxu0 0
    %717 = vmatprep.subr.bf16.mxu0 0
    %718 = vmatpush1.bf16.xpose.msra.mxu0 0
    %719 = vmatprep.mubr.bf16.mxu0 0
    %720 = vmatmul.mubr.bf16.gmra.mrb[0].mxu0 %v644
    %v721 = vpop.f32.mrb[0].mxu0
    %v722 = vadd.f32 0.0, %v721
    %v723 = vpop.f32.mrb[0].mxu0
    %v724 = vpop.f32.mrb[0].mxu0
    %v725 = vpop.f32.mrb[0].mxu0
    %726 = vdwg.mxu0
    %v727 = vmul.f32 %v682, 0.25
    %v728 = vmul.f32 %v722, 0.25
    %v731 = vlaneseq
    %v732 = vshrl.u32 %v731, 7
    %v733 = vsub.s32 0, %v732
    %v734 = vrot.slane %v127, %v733
    %v735 = vlaneseq
    %v736 = vshrl.u32 %v735, 7
    %v737 = vsub.s32 0, %v736
    %v738 = vrot.slane %v128, %v737
    %v741 = vadd.f32 %v727, %v734
    %v742 = vadd.f32 %v728, %v738
    %vm743 = vcmask 64512
    %v744 = vsel %vm743, %v741, -inf
    %745 = vmax.xlane.f32.xlu0 %v744
    %v746 = vpop.xlane.xlu0 %745
    %v747 = vsel %vm743, %v742, -inf
    %748 = vmax.xlane.f32.xlu0 %v747
    %v749 = vpop.xlane.xlu0 %748
    %v750 = vsub.f32 %v741, %v746
    %v751 = vsub.f32 %v742, %v749
    %v752 = vmul.f32 %v750, 1.442695
    %v753 = vpow.pop %v752
    %v754 = vmul.f32 %v751, 1.442695
    %v755 = vpow.pop %v754
    %v756 = vsel %vm743, %v753, 0.0
    %757 = vadd.xlane.f32.xlu0 %v756
    %v758 = vpop.xlane.xlu0 %757
    %v759 = vsel %vm743, %v755, 0.0
    %760 = vadd.xlane.f32.xlu0 %v759
    %v761 = vpop.xlane.xlu0 %760
    %v762 = vrcp.pop %v758
    %v763 = vrcp.pop %v761
    %v764 = vmul.f32 %v753, %v762
    %v765 = vmul.f32 %v755, %v763
    %v766 = vpack.c.bf16 %v764, %v764
    %v767 = vpack.c.bf16 %v765, %v765
    %v768 = vpack.c.bf16 %v603, %v603
    %v769 = vpack.c.bf16 %v607, %v607
    %v771 = vsel %vm743, %v766, 0
    %vm773 = vcmask 1043456
    %v775 = vsel %vm773, %v768, 0
    %777 = vmatprep.subr.bf16.mxu0 0
    %778 = vmatpush1.bf16.msra.mxu0 %v775
    %779 = vmatprep.subr.bf16.mxu0 0
    %780 = vmatpush1.bf16.msra.mxu0 0
    %781 = vmatprep.subr.bf16.mxu0 0
    %782 = vmatpush1.bf16.msra.mxu0 0
    %783 = vmatprep.subr.bf16.mxu0 0
    %784 = vmatpush1.bf16.msra.mxu0 0
    %785 = vmatprep.subr.bf16.mxu0 0
    %786 = vmatpush1.bf16.msra.mxu0 0
    %787 = vmatprep.subr.bf16.mxu0 0
    %788 = vmatpush1.bf16.msra.mxu0 0
    %789 = vmatprep.subr.bf16.mxu0 0
    %790 = vmatpush1.bf16.msra.mxu0 0
    %791 = vmatprep.subr.bf16.mxu0 0
    %792 = vmatpush1.bf16.msra.mxu0 0
    %793 = vmatprep.subr.bf16.mxu0 0
    %794 = vmatpush1.bf16.msra.mxu0 0
    %795 = vmatprep.subr.bf16.mxu0 0
    %796 = vmatpush1.bf16.msra.mxu0 0
    %797 = vmatprep.subr.bf16.mxu0 0
    %798 = vmatpush1.bf16.msra.mxu0 0
    %799 = vmatprep.subr.bf16.mxu0 0
    %800 = vmatpush1.bf16.msra.mxu0 0
    %801 = vmatprep.subr.bf16.mxu0 0
    %802 = vmatpush1.bf16.msra.mxu0 0
    %803 = vmatprep.subr.bf16.mxu0 0
    %804 = vmatpush1.bf16.msra.mxu0 0
    %805 = vmatprep.subr.bf16.mxu0 0
    %806 = vmatpush1.bf16.msra.mxu0 0
    %807 = vmatprep.subr.bf16.mxu0 0
    %808 = vmatpush1.bf16.msra.mxu0 0
    %809 = vmatprep.mubr.bf16.mxu0 0
    %810 = vmatmul.mubr.bf16.gmra.mrb[0].mxu0 %v771
    %v811 = vpop.f32.mrb[0].mxu0
    %v812 = vadd.f32 0.0, %v811
    %v813 = vpop.f32.mrb[0].mxu0
    %v814 = vpop.f32.mrb[0].mxu0
    %v815 = vpop.f32.mrb[0].mxu0
    %816 = vdwg.mxu0
    %v818 = vsel %vm743, %v767, 0
    %v821 = vsel %vm773, %v769, 0
    %823 = vmatprep.subr.bf16.mxu0 0
    %824 = vmatpush1.bf16.msra.mxu0 %v821
    %825 = vmatprep.subr.bf16.mxu0 0
    %826 = vmatpush1.bf16.msra.mxu0 0
    %827 = vmatprep.subr.bf16.mxu0 0
    %828 = vmatpush1.bf16.msra.mxu0 0
    %829 = vmatprep.subr.bf16.mxu0 0
    %830 = vmatpush1.bf16.msra.mxu0 0
    %831 = vmatprep.subr.bf16.mxu0 0
    %832 = vmatpush1.bf16.msra.mxu0 0
    %833 = vmatprep.subr.bf16.mxu0 0
    %834 = vmatpush1.bf16.msra.mxu0 0
    %835 = vmatprep.subr.bf16.mxu0 0
    %836 = vmatpush1.bf16.msra.mxu0 0
    %837 = vmatprep.subr.bf16.mxu0 0
    %838 = vmatpush1.bf16.msra.mxu0 0
    %839 = vmatprep.subr.bf16.mxu0 0
    %840 = vmatpush1.bf16.msra.mxu0 0
    %841 = vmatprep.subr.bf16.mxu0 0
    %842 = vmatpush1.bf16.msra.mxu0 0
    %843 = vmatprep.subr.bf16.mxu0 0
    %844 = vmatpush1.bf16.msra.mxu0 0
    %845 = vmatprep.subr.bf16.mxu0 0
    %846 = vmatpush1.bf16.msra.mxu0 0
    %847 = vmatprep.subr.bf16.mxu0 0
    %848 = vmatpush1.bf16.msra.mxu0 0
    %849 = vmatprep.subr.bf16.mxu0 0
    %850 = vmatpush1.bf16.msra.mxu0 0
    %851 = vmatprep.subr.bf16.mxu0 0
    %852 = vmatpush1.bf16.msra.mxu0 0
    %853 = vmatprep.subr.bf16.mxu0 0
    %854 = vmatpush1.bf16.msra.mxu0 0
    %855 = vmatprep.mubr.bf16.mxu0 0
    %856 = vmatmul.mubr.bf16.gmra.mrb[0].mxu0 %v818
    %v857 = vpop.f32.mrb[0].mxu0
    %v858 = vadd.f32 0.0, %v857
    %v859 = vpop.f32.mrb[0].mxu0
    %v860 = vpop.f32.mrb[0].mxu0
    %v861 = vpop.f32.mrb[0].mxu0
    %862 = vdwg.mxu0
    %v863 = vpack.c.bf16 %v858, %v812
    %v864 = vpack.c.bf16 %v519, %v519
    %v865 = vpack.c.bf16 %v523, %v523
    %v866 = vpack.c.bf16 %v562, %v562
    %v867 = vpack.c.bf16 %v566, %v566
    %868 = vmatprep.subr.bf16.mxu0 0
    %869 = vmatpush1.bf16.xpose.msra.mxu0 %v866
    %870 = vmatprep.subr.bf16.mxu0 0
    %871 = vmatpush1.bf16.xpose.msra.mxu0 0
    %872 = vmatprep.subr.bf16.mxu0 0
    %873 = vmatpush1.bf16.xpose.msra.mxu0 0
    %874 = vmatprep.subr.bf16.mxu0 0
    %875 = vmatpush1.bf16.xpose.msra.mxu0 0
    %876 = vmatprep.subr.bf16.mxu0 0
    %877 = vmatpush1.bf16.xpose.msra.mxu0 0
    %878 = vmatprep.subr.bf16.mxu0 0
    %879 = vmatpush1.bf16.xpose.msra.mxu0 0
    %880 = vmatprep.subr.bf16.mxu0 0
    %881 = vmatpush1.bf16.xpose.msra.mxu0 0
    %882 = vmatprep.subr.bf16.mxu0 0
    %883 = vmatpush1.bf16.xpose.msra.mxu0 0
    %884 = vmatprep.subr.bf16.mxu0 0
    %885 = vmatpush1.bf16.xpose.msra.mxu0 0
    %886 = vmatprep.subr.bf16.mxu0 0
    %887 = vmatpush1.bf16.xpose.msra.mxu0 0
    %888 = vmatprep.subr.bf16.mxu0 0
    %889 = vmatpush1.bf16.xpose.msra.mxu0 0
    %890 = vmatprep.subr.bf16.mxu0 0
    %891 = vmatpush1.bf16.xpose.msra.mxu0 0
    %892 = vmatprep.subr.bf16.mxu0 0
    %893 = vmatpush1.bf16.xpose.msra.mxu0 0
    %894 = vmatprep.subr.bf16.mxu0 0
    %895 = vmatpush1.bf16.xpose.msra.mxu0 0
    %896 = vmatprep.subr.bf16.mxu0 0
    %897 = vmatpush1.bf16.xpose.msra.mxu0 0
    %898 = vmatprep.subr.bf16.mxu0 0
    %899 = vmatpush1.bf16.xpose.msra.mxu0 0
    %900 = vmatprep.mubr.bf16.mxu0 0
    %901 = vmatmul.mubr.bf16.gmra.mrb[0].mxu0 %v864
    %v902 = vpop.f32.mrb[0].mxu0
    %v903 = vadd.f32 0.0, %v902
    %v904 = vpop.f32.mrb[0].mxu0
    %v905 = vpop.f32.mrb[0].mxu0
    %v906 = vpop.f32.mrb[0].mxu0
    %907 = vdwg.mxu0
    %908 = vmatprep.subr.bf16.mxu0 0
    %909 = vmatpush1.bf16.xpose.msra.mxu0 %v867
    %910 = vmatprep.subr.bf16.mxu0 0
    %911 = vmatpush1.bf16.xpose.msra.mxu0 0
    %912 = vmatprep.subr.bf16.mxu0 0
    %913 = vmatpush1.bf16.xpose.msra.mxu0 0
    %914 = vmatprep.subr.bf16.mxu0 0
    %915 = vmatpush1.bf16.xpose.msra.mxu0 0
    %916 = vmatprep.subr.bf16.mxu0 0
    %917 = vmatpush1.bf16.xpose.msra.mxu0 0
    %918 = vmatprep.subr.bf16.mxu0 0
    %919 = vmatpush1.bf16.xpose.msra.mxu0 0
    %920 = vmatprep.subr.bf16.mxu0 0
    %921 = vmatpush1.bf16.xpose.msra.mxu0 0
    %922 = vmatprep.subr.bf16.mxu0 0
    %923 = vmatpush1.bf16.xpose.msra.mxu0 0
    %924 = vmatprep.subr.bf16.mxu0 0
    %925 = vmatpush1.bf16.xpose.msra.mxu0 0
    %926 = vmatprep.subr.bf16.mxu0 0
    %927 = vmatpush1.bf16.xpose.msra.mxu0 0
    %928 = vmatprep.subr.bf16.mxu0 0
    %929 = vmatpush1.bf16.xpose.msra.mxu0 0
    %930 = vmatprep.subr.bf16.mxu0 0
    %931 = vmatpush1.bf16.xpose.msra.mxu0 0
    %932 = vmatprep.subr.bf16.mxu0 0
    %933 = vmatpush1.bf16.xpose.msra.mxu0 0
    %934 = vmatprep.subr.bf16.mxu0 0
    %935 = vmatpush1.bf16.xpose.msra.mxu0 0
    %936 = vmatprep.subr.bf16.mxu0 0
    %937 = vmatpush1.bf16.xpose.msra.mxu0 0
    %938 = vmatprep.subr.bf16.mxu0 0
    %939 = vmatpush1.bf16.xpose.msra.mxu0 0
    %940 = vmatprep.mubr.bf16.mxu0 0
    %941 = vmatmul.mubr.bf16.gmra.mrb[0].mxu0 %v865
    %v942 = vpop.f32.mrb[0].mxu0
    %v943 = vadd.f32 0.0, %v942
    %v944 = vpop.f32.mrb[0].mxu0
    %v945 = vpop.f32.mrb[0].mxu0
    %v946 = vpop.f32.mrb[0].mxu0
    %947 = vdwg.mxu0
    %v948 = vmul.f32 %v903, 0.25
    %v949 = vmul.f32 %v943, 0.25
    %v950 = vadd.f32 %v948, %v734
    %v951 = vadd.f32 %v949, %v738
    %v952 = vsel %vm743, %v950, -inf
    %953 = vmax.xlane.f32.xlu0 %v952
    %v954 = vpop.xlane.xlu0 %953
    %v955 = vsel %vm743, %v951, -inf
    %956 = vmax.xlane.f32.xlu0 %v955
    %v957 = vpop.xlane.xlu0 %956
    %v958 = vsub.f32 %v950, %v954
    %v959 = vsub.f32 %v951, %v957
    %v960 = vmul.f32 %v958, 1.442695
    %v961 = vpow.pop %v960
    %v962 = vmul.f32 %v959, 1.442695
    %v963 = vpow.pop %v962
    %v964 = vsel %vm743, %v961, 0.0
    %965 = vadd.xlane.f32.xlu0 %v964
    %v966 = vpop.xlane.xlu0 %965
    %v967 = vsel %vm743, %v963, 0.0
    %968 = vadd.xlane.f32.xlu0 %v967
    %v969 = vpop.xlane.xlu0 %968
    %v970 = vrcp.pop %v966
    %v971 = vrcp.pop %v969
    %v972 = vmul.f32 %v961, %v970
    %v973 = vmul.f32 %v963, %v971
    %v974 = vpack.c.bf16 %v972, %v972
    %v975 = vpack.c.bf16 %v973, %v973
    %v976 = vpack.c.bf16 %v605, %v605
    %v977 = vpack.c.bf16 %v609, %v609
    %v979 = vsel %vm743, %v974, 0
    %v982 = vsel %vm773, %v976, 0
    %984 = vmatprep.subr.bf16.mxu0 0
    %985 = vmatpush1.bf16.msra.mxu0 %v982
    %986 = vmatprep.subr.bf16.mxu0 0
    %987 = vmatpush1.bf16.msra.mxu0 0
    %988 = vmatprep.subr.bf16.mxu0 0
    %989 = vmatpush1.bf16.msra.mxu0 0
    %990 = vmatprep.subr.bf16.mxu0 0
    %991 = vmatpush1.bf16.msra.mxu0 0
    %992 = vmatprep.subr.bf16.mxu0 0
    %993 = vmatpush1.bf16.msra.mxu0 0
    %994 = vmatprep.subr.bf16.mxu0 0
    %995 = vmatpush1.bf16.msra.mxu0 0
    %996 = vmatprep.subr.bf16.mxu0 0
    %997 = vmatpush1.bf16.msra.mxu0 0
    %998 = vmatprep.subr.bf16.mxu0 0
    %999 = vmatpush1.bf16.msra.mxu0 0
    %1000 = vmatprep.subr.bf16.mxu0 0
    %1001 = vmatpush1.bf16.msra.mxu0 0
    %1002 = vmatprep.subr.bf16.mxu0 0
    %1003 = vmatpush1.bf16.msra.mxu0 0
    %1004 = vmatprep.subr.bf16.mxu0 0
    %1005 = vmatpush1.bf16.msra.mxu0 0
    %1006 = vmatprep.subr.bf16.mxu0 0
    %1007 = vmatpush1.bf16.msra.mxu0 0
    %1008 = vmatprep.subr.bf16.mxu0 0
    %1009 = vmatpush1.bf16.msra.mxu0 0
    %1010 = vmatprep.subr.bf16.mxu0 0
    %1011 = vmatpush1.bf16.msra.mxu0 0
    %1012 = vmatprep.subr.bf16.mxu0 0
    %1013 = vmatpush1.bf16.msra.mxu0 0
    %1014 = vmatprep.subr.bf16.mxu0 0
    %1015 = vmatpush1.bf16.msra.mxu0 0
    %1016 = vmatprep.mubr.bf16.mxu0 0
    %1017 = vmatmul.mubr.bf16.gmra.mrb[0].mxu0 %v979
    %v1018 = vpop.f32.mrb[0].mxu0
    %v1019 = vadd.f32 0.0, %v1018
    %v1020 = vpop.f32.mrb[0].mxu0
    %v1021 = vpop.f32.mrb[0].mxu0
    %v1022 = vpop.f32.mrb[0].mxu0
    %1023 = vdwg.mxu0
    %v1025 = vsel %vm743, %v975, 0
    %v1028 = vsel %vm773, %v977, 0
    %1030 = vmatprep.subr.bf16.mxu0 0
    %1031 = vmatpush1.bf16.msra.mxu0 %v1028
    %1032 = vmatprep.subr.bf16.mxu0 0
    %1033 = vmatpush1.bf16.msra.mxu0 0
    %1034 = vmatprep.subr.bf16.mxu0 0
    %1035 = vmatpush1.bf16.msra.mxu0 0
    %1036 = vmatprep.subr.bf16.mxu0 0
    %1037 = vmatpush1.bf16.msra.mxu0 0
    %1038 = vmatprep.subr.bf16.mxu0 0
    %1039 = vmatpush1.bf16.msra.mxu0 0
    %1040 = vmatprep.subr.bf16.mxu0 0
    %1041 = vmatpush1.bf16.msra.mxu0 0
    %1042 = vmatprep.subr.bf16.mxu0 0
    %1043 = vmatpush1.bf16.msra.mxu0 0
    %1044 = vmatprep.subr.bf16.mxu0 0
    %1045 = vmatpush1.bf16.msra.mxu0 0
    %1046 = vmatprep.subr.bf16.mxu0 0
    %1047 = vmatpush1.bf16.msra.mxu0 0
    %1048 = vmatprep.subr.bf16.mxu0 0
    %1049 = vmatpush1.bf16.msra.mxu0 0
    %1050 = vmatprep.subr.bf16.mxu0 0
    %1051 = vmatpush1.bf16.msra.mxu0 0
    %1052 = vmatprep.subr.bf16.mxu0 0
    %1053 = vmatpush1.bf16.msra.mxu0 0
    %1054 = vmatprep.subr.bf16.mxu0 0
    %1055 = vmatpush1.bf16.msra.mxu0 0
    %1056 = vmatprep.subr.bf16.mxu0 0
    %1057 = vmatpush1.bf16.msra.mxu0 0
    %1058 = vmatprep.subr.bf16.mxu0 0
    %1059 = vmatpush1.bf16.msra.mxu0 0
    %1060 = vmatprep.subr.bf16.mxu0 0
    %1061 = vmatpush1.bf16.msra.mxu0 0
    %1062 = vmatprep.mubr.bf16.mxu0 0
    %1063 = vmatmul.mubr.bf16.gmra.mrb[0].mxu0 %v1025
    %v1064 = vpop.f32.mrb[0].mxu0
    %v1065 = vadd.f32 0.0, %v1064
    %v1066 = vpop.f32.mrb[0].mxu0
    %v1067 = vpop.f32.mrb[0].mxu0
    %v1068 = vpop.f32.mrb[0].mxu0
    %1069 = vdwg.mxu0
    %v1070 = vpack.c.bf16 %v1065, %v1019
    %v1087 = vunpack.c.l.b16 %v627
    %v1088 = vunpack.c.l.b16 %v628
    %v1089 = vunpack.c.l.b16 %v629
    %v1090 = vunpack.c.l.b16 %v630
    %v1091 = vunpack.c.l.b16 %v631
    %v1092 = vunpack.c.l.b16 %v632
    %v1093 = vunpack.c.l.b16 %v633
    %v1094 = vunpack.c.l.b16 %v634
    %v1095 = vunpack.c.l.b16 %v635
    %v1096 = vunpack.c.l.b16 %v636
    %v1097 = vunpack.c.l.b16 %v637
    %v1098 = vunpack.c.l.b16 %v638
    %v1099 = vunpack.c.l.b16 %v639
    %v1100 = vunpack.c.l.b16 %v640
    %v1101 = vunpack.c.l.b16 %v641
    %v1102 = vunpack.c.l.b16 %v642
    %v1103 = vpack.c.b16 %v1088, %v1087
    %v1104 = vpack.c.b16 %v1090, %v1089
    %v1105 = vpack.c.b16 %v1092, %v1091
    %v1106 = vpack.c.b16 %v1094, %v1093
    %v1107 = vpack.c.b16 %v1096, %v1095
    %v1108 = vpack.c.b16 %v1098, %v1097
    %v1109 = vpack.c.b16 %v1100, %v1099
    %v1110 = vpack.c.b16 %v1102, %v1101
    %1119 = vmatprep.subr.bf16.mxu0 0
    %1120 = vmatpush1.bf16.msra.mxu0 %v1103
    %1121 = vmatprep.subr.bf16.mxu0 0
    %1122 = vmatpush1.bf16.msra.mxu0 %v1104
    %1123 = vmatprep.subr.bf16.mxu0 0
    %1124 = vmatpush1.bf16.msra.mxu0 %v1105
    %1125 = vmatprep.subr.bf16.mxu0 0
    %1126 = vmatpush1.bf16.msra.mxu0 %v1106
    %1127 = vmatprep.subr.bf16.mxu0 0
    %1128 = vmatpush1.bf16.msra.mxu0 %v1107
    %1129 = vmatprep.subr.bf16.mxu0 0
    %1130 = vmatpush1.bf16.msra.mxu0 %v1108
    %1131 = vmatprep.subr.bf16.mxu0 0
    %1132 = vmatpush1.bf16.msra.mxu0 %v1109
    %1133 = vmatprep.subr.bf16.mxu0 0
    %1134 = vmatpush1.bf16.msra.mxu0 %v1110
    %1135 = vmatprep.subr.bf16.mxu0 0
    %1136 = vmatpush1.bf16.msra.mxu0 0
    %1137 = vmatprep.subr.bf16.mxu0 0
    %1138 = vmatpush1.bf16.msra.mxu0 0
    %1139 = vmatprep.subr.bf16.mxu0 0
    %1140 = vmatpush1.bf16.msra.mxu0 0
    %1141 = vmatprep.subr.bf16.mxu0 0
    %1142 = vmatpush1.bf16.msra.mxu0 0
    %1143 = vmatprep.subr.bf16.mxu0 0
    %1144 = vmatpush1.bf16.msra.mxu0 0
    %1145 = vmatprep.subr.bf16.mxu0 0
    %1146 = vmatpush1.bf16.msra.mxu0 0
    %1147 = vmatprep.subr.bf16.mxu0 0
    %1148 = vmatpush1.bf16.msra.mxu0 0
    %1149 = vmatprep.subr.bf16.mxu0 0
    %1150 = vmatpush1.bf16.msra.mxu0 0
    %1151 = vmatprep.mubr.bf16.mxu0 0
    %1152 = vmatmul.mubr.bf16.gmra.mrb[0].mxu0 %v1070
    %v1153 = vpop.f32.mrb[0].mxu0
    %v1154 = vadd.f32 0.0, %v1153
    %v1155 = vpop.f32.mrb[0].mxu0
    %v1156 = vpop.f32.mrb[0].mxu0
    %v1157 = vadd.f32 0.0, %v1156
    %v1158 = vpop.f32.mrb[0].mxu0
    %1159 = vdwg.mxu0
    %v1176 = vunpack.c.l.b16 %v611
    %v1177 = vunpack.c.l.b16 %v612
    %v1178 = vunpack.c.l.b16 %v613
    %v1179 = vunpack.c.l.b16 %v614
    %v1180 = vunpack.c.l.b16 %v615
    %v1181 = vunpack.c.l.b16 %v616
    %v1182 = vunpack.c.l.b16 %v617
    %v1183 = vunpack.c.l.b16 %v618
    %v1184 = vunpack.c.l.b16 %v619
    %v1185 = vunpack.c.l.b16 %v620
    %v1186 = vunpack.c.l.b16 %v621
    %v1187 = vunpack.c.l.b16 %v622
    %v1188 = vunpack.c.l.b16 %v623
    %v1189 = vunpack.c.l.b16 %v624
    %v1190 = vunpack.c.l.b16 %v625
    %v1191 = vunpack.c.l.b16 %v626
    %v1192 = vpack.c.b16 %v1177, %v1176
    %v1193 = vpack.c.b16 %v1179, %v1178
    %v1194 = vpack.c.b16 %v1181, %v1180
    %v1195 = vpack.c.b16 %v1183, %v1182
    %v1196 = vpack.c.b16 %v1185, %v1184
    %v1197 = vpack.c.b16 %v1187, %v1186
    %v1198 = vpack.c.b16 %v1189, %v1188
    %v1199 = vpack.c.b16 %v1191, %v1190
    %1208 = vmatprep.subr.bf16.mxu0 0
    %1209 = vmatpush1.bf16.msra.mxu0 %v1192
    %1210 = vmatprep.subr.bf16.mxu0 0
    %1211 = vmatpush1.bf16.msra.mxu0 %v1193
    %1212 = vmatprep.subr.bf16.mxu0 0
    %1213 = vmatpush1.bf16.msra.mxu0 %v1194
    %1214 = vmatprep.subr.bf16.mxu0 0
    %1215 = vmatpush1.bf16.msra.mxu0 %v1195
    %1216 = vmatprep.subr.bf16.mxu0 0
    %1217 = vmatpush1.bf16.msra.mxu0 %v1196
    %1218 = vmatprep.subr.bf16.mxu0 0
    %1219 = vmatpush1.bf16.msra.mxu0 %v1197
    %1220 = vmatprep.subr.bf16.mxu0 0
    %1221 = vmatpush1.bf16.msra.mxu0 %v1198
    %1222 = vmatprep.subr.bf16.mxu0 0
    %1223 = vmatpush1.bf16.msra.mxu0 %v1199
    %1224 = vmatprep.subr.bf16.mxu0 0
    %1225 = vmatpush1.bf16.msra.mxu0 0
    %1226 = vmatprep.subr.bf16.mxu0 0
    %1227 = vmatpush1.bf16.msra.mxu0 0
    %1228 = vmatprep.subr.bf16.mxu0 0
    %1229 = vmatpush1.bf16.msra.mxu0 0
    %1230 = vmatprep.subr.bf16.mxu0 0
    %1231 = vmatpush1.bf16.msra.mxu0 0
    %1232 = vmatprep.subr.bf16.mxu0 0
    %1233 = vmatpush1.bf16.msra.mxu0 0
    %1234 = vmatprep.subr.bf16.mxu0 0
    %1235 = vmatpush1.bf16.msra.mxu0 0
    %1236 = vmatprep.subr.bf16.mxu0 0
    %1237 = vmatpush1.bf16.msra.mxu0 0
    %1238 = vmatprep.subr.bf16.mxu0 0
    %1239 = vmatpush1.bf16.msra.mxu0 0
    %1240 = vmatprep.mubr.bf16.mxu0 0
    %1241 = vmatmul.mubr.bf16.gmra.mrb[0].mxu0 %v863
    %v1242 = vpop.f32.mrb[0].mxu0
    %v1243 = vadd.f32 %v1154, %v1242
    %v1244 = vpop.f32.mrb[0].mxu0
    %v1245 = vpop.f32.mrb[0].mxu0
    %v1246 = vadd.f32 %v1157, %v1245
    %v1247 = vpop.f32.mrb[0].mxu0
    %1248 = vdwg.mxu0
    %v1249 = vld [vmem:[#allocation8 + $0x1] ss:$0 sm:$0xff]
    %v1250 = vadd.f32 %v1243, %v1249
    %v1251 = vadd.f32 %v1246, %v1249
    %v1252 = vadd.f32 %v1250, %v157
    %v1253 = vadd.f32 %v1251, %v158
    %v1254 = vld [vmem:[#allocation8 + $0x2] ss:$0 sm:$0xff]
    %v1255 = vld [vmem:[#allocation8 + $0x3] ss:$0 sm:$0xff]
    %1256 = vadd.xlane.f32.xlu0 %v1252
    %v1257 = vpop.xlane.xlu0 %1256
    %1258 = vadd.xlane.f32.xlu0 %v1253
    %v1259 = vpop.xlane.xlu0 %1258
    %v1260 = vmul.f32 %v1257, 0.03125
    %v1261 = vmul.f32 %v1259, 0.03125
    %v1262 = vsub.f32 %v1252, %v1260
    %v1263 = vsub.f32 %v1253, %v1261
    %v1264 = vmul.f32 %v1262, %v118
    %v1265 = vmul.f32 %v1263, %v118
    %v1266 = vmul.f32 %v1264, %v1264
    %v1267 = vmul.f32 %v1265, %v1265
    %1268 = vadd.xlane.f32.xlu0 %v1266
    %v1269 = vpop.xlane.xlu0 %1268
    %1270 = vadd.xlane.f32.xlu0 %v1267
    %v1271 = vpop.xlane.xlu0 %1270
    %v1272 = vmul.f32 %v1269, 0.03125
    %v1273 = vmul.f32 %v1271, 0.03125
    %v1274 = vadd.f32 %v1272, 1e-05
    %v1275 = vadd.f32 %v1273, 1e-05
    %v1276 = vrsqrt.pop %v1274
    %v1277 = vrsqrt.pop %v1275
    %v1278 = vmul.f32 %v1264, %v1276
    %v1279 = vmul.f32 %v1265, %v1277
    %v1280 = vmul.f32 %v1278, %v1254
    %v1281 = vmul.f32 %v1279, %v1254
    %v1282 = vadd.f32 %v1280, %v1255
    %v1283 = vadd.f32 %v1281, %v1255
    %v1284 = vpack.c.bf16 %v1283, %v1282
    %v1285 = vld [vmem:[#allocation5] sm:$0xf]
    %v1286 = vld [vmem:[#allocation5 + $0x4] sm:$0xf]
    %v1287 = vld [vmem:[#allocation5 + $0x8] sm:$0xf]
    %v1288 = vld [vmem:[#allocation5 + $0xc] sm:$0xf]
    %v1289 = vld [vmem:[#allocation5 + $0x10] sm:$0xf]
    %v1290 = vld [vmem:[#allocation5 + $0x14] sm:$0xf]
    %v1291 = vld [vmem:[#allocation5 + $0x18] sm:$0xf]
    %v1292 = vld [vmem:[#allocation5 + $0x1c] sm:$0xf]
    %v1293 = vld [vmem:[#allocation5 + $0x20] sm:$0xf]
    %v1294 = vld [vmem:[#allocation5 + $0x24] sm:$0xf]
    %v1295 = vld [vmem:[#allocation5 + $0x28] sm:$0xf]
    %v1296 = vld [vmem:[#allocation5 + $0x2c] sm:$0xf]
    %v1297 = vld [vmem:[#allocation5 + $0x30] sm:$0xf]
    %v1298 = vld [vmem:[#allocation5 + $0x34] sm:$0xf]
    %v1299 = vld [vmem:[#allocation5 + $0x38] sm:$0xf]
    %v1300 = vld [vmem:[#allocation5 + $0x3c] sm:$0xf]
    %v1301 = vld [vmem:[#allocation8 + $0x4] ss:$0 sm:$0xff]
    %v1318 = vunpack.c.l.b16 %v1285
    %v1319 = vunpack.c.l.b16 %v1286
    %v1320 = vunpack.c.l.b16 %v1287
    %v1321 = vunpack.c.l.b16 %v1288
    %v1322 = vunpack.c.l.b16 %v1289
    %v1323 = vunpack.c.l.b16 %v1290
    %v1324 = vunpack.c.l.b16 %v1291
    %v1325 = vunpack.c.l.b16 %v1292
    %v1326 = vunpack.c.l.b16 %v1293
    %v1327 = vunpack.c.l.b16 %v1294
    %v1328 = vunpack.c.l.b16 %v1295
    %v1329 = vunpack.c.l.b16 %v1296
    %v1330 = vunpack.c.l.b16 %v1297
    %v1331 = vunpack.c.l.b16 %v1298
    %v1332 = vunpack.c.l.b16 %v1299
    %v1333 = vunpack.c.l.b16 %v1300
    %v1334 = vpack.c.b16 %v1319, %v1318
    %v1335 = vpack.c.b16 %v1321, %v1320
    %v1336 = vpack.c.b16 %v1323, %v1322
    %v1337 = vpack.c.b16 %v1325, %v1324
    %v1338 = vpack.c.b16 %v1327, %v1326
    %v1339 = vpack.c.b16 %v1329, %v1328
    %v1340 = vpack.c.b16 %v1331, %v1330
    %v1341 = vpack.c.b16 %v1333, %v1332
    %1350 = vmatprep.subr.bf16.mxu0 0
    %1351 = vmatpush1.bf16.msra.mxu0 %v1334
    %1352 = vmatprep.subr.bf16.mxu0 0
    %1353 = vmatpush1.bf16.msra.mxu0 %v1335
    %1354 = vmatprep.subr.bf16.mxu0 0
    %1355 = vmatpush1.bf16.msra.mxu0 %v1336
    %1356 = vmatprep.subr.bf16.mxu0 0
    %1357 = vmatpush1.bf16.msra.mxu0 %v1337
    %1358 = vmatprep.subr.bf16.mxu0 0
    %1359 = vmatpush1.bf16.msra.mxu0 %v1338
    %1360 = vmatprep.subr.bf16.mxu0 0
    %1361 = vmatpush1.bf16.msra.mxu0 %v1339
    %1362 = vmatprep.subr.bf16.mxu0 0
    %1363 = vmatpush1.bf16.msra.mxu0 %v1340
    %1364 = vmatprep.subr.bf16.mxu0 0
    %1365 = vmatpush1.bf16.msra.mxu0 %v1341
    %1366 = vmatprep.subr.bf16.mxu0 0
    %1367 = vmatpush1.bf16.msra.mxu0 0
    %1368 = vmatprep.subr.bf16.mxu0 0
    %1369 = vmatpush1.bf16.msra.mxu0 0
    %1370 = vmatprep.subr.bf16.mxu0 0
    %1371 = vmatpush1.bf16.msra.mxu0 0
    %1372 = vmatprep.subr.bf16.mxu0 0
    %1373 = vmatpush1.bf16.msra.mxu0 0
    %1374 = vmatprep.subr.bf16.mxu0 0
    %1375 = vmatpush1.bf16.msra.mxu0 0
    %1376 = vmatprep.subr.bf16.mxu0 0
    %1377 = vmatpush1.bf16.msra.mxu0 0
    %1378 = vmatprep.subr.bf16.mxu0 0
    %1379 = vmatpush1.bf16.msra.mxu0 0
    %1380 = vmatprep.subr.bf16.mxu0 0
    %1381 = vmatpush1.bf16.msra.mxu0 0
    %1382 = vmatprep.mubr.bf16.mxu0 0
    %1383 = vmatmul.mubr.bf16.gmra.mrb[0].mxu0 %v1284
    %v1384 = vpop.f32.mrb[0].mxu0
    %v1385 = vadd.f32 %v1301, %v1384
    %v1386 = vpop.f32.mrb[0].mxu0
    %v1387 = vpop.f32.mrb[0].mxu0
    %v1388 = vadd.f32 %v1301, %v1387
    %v1389 = vpop.f32.mrb[0].mxu0
    %1390 = vdwg.mxu0
    %v1391 = vmul.f32 %v1385, %v1385
    %v1392 = vmul.f32 %v1388, %v1388
    %v1393 = vmul.f32 %v1385, %v1391
    %v1394 = vmul.f32 %v1388, %v1392
    %v1395 = vmul.f32 %v1393, 0.044715
    %v1396 = vmul.f32 %v1394, 0.044715
    %v1397 = vadd.f32 %v1385, %v1395
    %v1398 = vadd.f32 %v1388, %v1396
    %v1399 = vmul.f32 %v1397, 0.7978846
    %v1400 = vmul.f32 %v1398, 0.7978846
    %v1401 = vtanh.pop %v1399
    %v1402 = vtanh.pop %v1400
    %v1403 = vadd.f32 %v1401, 1.0
    %v1404 = vadd.f32 %v1402, 1.0
    %v1405 = vmul.f32 %v1403, 0.5
    %v1406 = vmul.f32 %v1404, 0.5
    %v1407 = vmul.f32 %v1385, %v1405
    %v1408 = vmul.f32 %v1388, %v1406
    %v1409 = vpack.c.bf16 %v1408, %v1407
    %v1410 = vld [vmem:[#allocation7] sm:$0xf]
    %v1411 = vld [vmem:[#allocation7 + $0x4] sm:$0xf]
    %v1412 = vld [vmem:[#allocation7 + $0x8] sm:$0xf]
    %v1413 = vld [vmem:[#allocation7 + $0xc] sm:$0xf]
    %v1414 = vld [vmem:[#allocation7 + $0x10] sm:$0xf]
    %v1415 = vld [vmem:[#allocation7 + $0x14] sm:$0xf]
    %v1416 = vld [vmem:[#allocation7 + $0x18] sm:$0xf]
    %v1417 = vld [vmem:[#allocation7 + $0x1c] sm:$0xf]
    %v1418 = vld [vmem:[#allocation7 + $0x20] sm:$0xf]
    %v1419 = vld [vmem:[#allocation7 + $0x24] sm:$0xf]
    %v1420 = vld [vmem:[#allocation7 + $0x28] sm:$0xf]
    %v1421 = vld [vmem:[#allocation7 + $0x2c] sm:$0xf]
    %v1422 = vld [vmem:[#allocation7 + $0x30] sm:$0xf]
    %v1423 = vld [vmem:[#allocation7 + $0x34] sm:$0xf]
    %v1424 = vld [vmem:[#allocation7 + $0x38] sm:$0xf]
    %v1425 = vld [vmem:[#allocation7 + $0x3c] sm:$0xf]
    %v1426 = vld [vmem:[#allocation8 + $0x5] ss:$0 sm:$0xff]
    %v1443 = vunpack.c.l.b16 %v1410
    %v1444 = vunpack.c.l.b16 %v1411
    %v1445 = vunpack.c.l.b16 %v1412
    %v1446 = vunpack.c.l.b16 %v1413
    %v1447 = vunpack.c.l.b16 %v1414
    %v1448 = vunpack.c.l.b16 %v1415
    %v1449 = vunpack.c.l.b16 %v1416
    %v1450 = vunpack.c.l.b16 %v1417
    %v1451 = vunpack.c.l.b16 %v1418
    %v1452 = vunpack.c.l.b16 %v1419
    %v1453 = vunpack.c.l.b16 %v1420
    %v1454 = vunpack.c.l.b16 %v1421
    %v1455 = vunpack.c.l.b16 %v1422
    %v1456 = vunpack.c.l.b16 %v1423
    %v1457 = vunpack.c.l.b16 %v1424
    %v1458 = vunpack.c.l.b16 %v1425
    %v1459 = vpack.c.b16 %v1444, %v1443
    %v1460 = vpack.c.b16 %v1446, %v1445
    %v1461 = vpack.c.b16 %v1448, %v1447
    %v1462 = vpack.c.b16 %v1450, %v1449
    %v1463 = vpack.c.b16 %v1452, %v1451
    %v1464 = vpack.c.b16 %v1454, %v1453
    %v1465 = vpack.c.b16 %v1456, %v1455
    %v1466 = vpack.c.b16 %v1458, %v1457
    %1475 = vmatprep.subr.bf16.mxu0 0
    %1476 = vmatpush1.bf16.msra.mxu0 %v1459
    %1477 = vmatprep.subr.bf16.mxu0 0
    %1478 = vmatpush1.bf16.msra.mxu0 %v1460
    %1479 = vmatprep.subr.bf16.mxu0 0
    %1480 = vmatpush1.bf16.msra.mxu0 %v1461
    %1481 = vmatprep.subr.bf16.mxu0 0
    %1482 = vmatpush1.bf16.msra.mxu0 %v1462
    %1483 = vmatprep.subr.bf16.mxu0 0
    %1484 = vmatpush1.bf16.msra.mxu0 %v1463
    %1485 = vmatprep.subr.bf16.mxu0 0
    %1486 = vmatpush1.bf16.msra.mxu0 %v1464
    %1487 = vmatprep.subr.bf16.mxu0 0
    %1488 = vmatpush1.bf16.msra.mxu0 %v1465
    %1489 = vmatprep.subr.bf16.mxu0 0
    %1490 = vmatpush1.bf16.msra.mxu0 %v1466
    %1491 = vmatprep.subr.bf16.mxu0 0
    %1492 = vmatpush1.bf16.msra.mxu0 0
    %1493 = vmatprep.subr.bf16.mxu0 0
    %1494 = vmatpush1.bf16.msra.mxu0 0
    %1495 = vmatprep.subr.bf16.mxu0 0
    %1496 = vmatpush1.bf16.msra.mxu0 0
    %1497 = vmatprep.subr.bf16.mxu0 0
    %1498 = vmatpush1.bf16.msra.mxu0 0
    %1499 = vmatprep.subr.bf16.mxu0 0
    %1500 = vmatpush1.bf16.msra.mxu0 0
    %1501 = vmatprep.subr.bf16.mxu0 0
    %1502 = vmatpush1.bf16.msra.mxu0 0
    %1503 = vmatprep.subr.bf16.mxu0 0
    %1504 = vmatpush1.bf16.msra.mxu0 0
    %1505 = vmatprep.subr.bf16.mxu0 0
    %1506 = vmatpush1.bf16.msra.mxu0 0
    %1507 = vmatprep.mubr.bf16.mxu0 0
    %1508 = vmatmul.mubr.bf16.gmra.mrb[0].mxu0 %v1409
    %v1509 = vpop.f32.mrb[0].mxu0
    %v1510 = vadd.f32 %v1426, %v1509
    %v1511 = vpop.f32.mrb[0].mxu0
    %v1512 = vpop.f32.mrb[0].mxu0
    %v1513 = vadd.f32 %v1426, %v1512
    %v1514 = vpop.f32.mrb[0].mxu0
    %1515 = vdwg.mxu0
    %v1516 = vadd.f32 %v1510, %v1282
    %v1517 = vadd.f32 %v1513, %v1283
    %v1518 = vld [vmem:[#allocation8 + $0x6] ss:$0 sm:$0xff]
    %v1519 = vld [vmem:[#allocation8 + $0x7] ss:$0 sm:$0xff]
    %1520 = vadd.xlane.f32.xlu0 %v1516
    %v1521 = vpop.xlane.xlu0 %1520
    %1522 = vadd.xlane.f32.xlu0 %v1517
    %v1523 = vpop.xlane.xlu0 %1522
    %v1524 = vmul.f32 %v1521, 0.03125
    %v1525 = vmul.f32 %v1523, 0.03125
    %v1526 = vsub.f32 %v1516, %v1524
    %v1527 = vsub.f32 %v1517, %v1525
    %v1528 = vmul.f32 %v1526, %v118
    %v1529 = vmul.f32 %v1527, %v118
    %v1530 = vmul.f32 %v1528, %v1528
    %v1531 = vmul.f32 %v1529, %v1529
    %1532 = vadd.xlane.f32.xlu0 %v1530
    %v1533 = vpop.xlane.xlu0 %1532
    %1534 = vadd.xlane.f32.xlu0 %v1531
    %v1535 = vpop.xlane.xlu0 %1534
    %v1536 = vmul.f32 %v1533, 0.03125
    %v1537 = vmul.f32 %v1535, 0.03125
    %v1538 = vadd.f32 %v1536, 1e-05
    %v1539 = vadd.f32 %v1537, 1e-05
    %v1540 = vrsqrt.pop %v1538
    %v1541 = vrsqrt.pop %v1539
    %v1542 = vmul.f32 %v1528, %v1540
    %v1543 = vmul.f32 %v1529, %v1541
    %v1544 = vmul.f32 %v1542, %v1518
    %v1545 = vmul.f32 %v1543, %v1518
    %v1546 = vadd.f32 %v1544, %v1519
    %v1547 = vadd.f32 %v1545, %v1519
    %v1548 = vpack.c.bf16 %v1547, %v1546
    %s1549 = scalar_lea.vmem [#allocation2], 384
    %v1550 = vld [vmem:[%s1549] sm:$0xff]
    %v1551 = vld [vmem:[%s1549 + $0x8] sm:$0xff]
    %v1552 = vld [vmem:[%s1549 + $0x10] sm:$0xff]
    %v1553 = vld [vmem:[%s1549 + $0x18] sm:$0xff]
    %v1554 = vld [vmem:[%s1549 + $0x20] sm:$0xff]
    %v1555 = vld [vmem:[%s1549 + $0x28] sm:$0xff]
    %v1556 = vld [vmem:[%s1549 + $0x30] sm:$0xff]
    %v1557 = vld [vmem:[%s1549 + $0x38] sm:$0xff]
    %v1558 = vld [vmem:[%s1549 + $0x40] sm:$0xff]
    %v1559 = vld [vmem:[%s1549 + $0x48] sm:$0xff]
    %v1560 = vld [vmem:[%s1549 + $0x50] sm:$0xff]
    %v1561 = vld [vmem:[%s1549 + $0x58] sm:$0xff]
    %v1562 = vld [vmem:[%s1549 + $0x60] sm:$0xff]
    %v1563 = vld [vmem:[%s1549 + $0x68] sm:$0xff]
    %v1564 = vld [vmem:[%s1549 + $0x70] sm:$0xff]
    %v1565 = vld [vmem:[%s1549 + $0x78] sm:$0xff]
    %v1566 = vld [vmem:[%s1549 + $0x80] sm:$0xff]
    %v1567 = vld [vmem:[%s1549 + $0x88] sm:$0xff]
    %v1568 = vld [vmem:[%s1549 + $0x90] sm:$0xff]
    %v1569 = vld [vmem:[%s1549 + $0x98] sm:$0xff]
    %v1570 = vld [vmem:[%s1549 + $0xa0] sm:$0xff]
    %v1571 = vld [vmem:[%s1549 + $0xa8] sm:$0xff]
    %v1572 = vld [vmem:[%s1549 + $0xb0] sm:$0xff]
    %v1573 = vld [vmem:[%s1549 + $0xb8] sm:$0xff]
    %v1574 = vld [vmem:[%s1549 + $0xc0] sm:$0xff]
    %v1575 = vld [vmem:[%s1549 + $0xc8] sm:$0xff]
    %v1576 = vld [vmem:[%s1549 + $0xd0] sm:$0xff]
    %v1577 = vld [vmem:[%s1549 + $0xd8] sm:$0xff]
    %v1578 = vld [vmem:[%s1549 + $0xe0] sm:$0xff]
    %v1579 = vld [vmem:[%s1549 + $0xe8] sm:$0xff]
    %v1580 = vld [vmem:[%s1549 + $0xf0] sm:$0xff]
    %v1581 = vld [vmem:[%s1549 + $0xf8] sm:$0xff]
    %v1582 = vld [vmem:[%s1549 + $0x100] sm:$0xff]
    %v1583 = vld [vmem:[%s1549 + $0x108] sm:$0xff]
    %v1584 = vld [vmem:[%s1549 + $0x110] sm:$0xff]
    %v1585 = vld [vmem:[%s1549 + $0x118] sm:$0xff]
    %v1586 = vld [vmem:[%s1549 + $0x120] sm:$0xff]
    %v1587 = vld [vmem:[%s1549 + $0x128] sm:$0xff]
    %v1588 = vld [vmem:[%s1549 + $0x130] sm:$0xff]
    %v1589 = vld [vmem:[%s1549 + $0x138] sm:$0xff]
    %v1590 = vld [vmem:[%s1549 + $0x140] sm:$0xff]
    %v1591 = vld [vmem:[%s1549 + $0x148] sm:$0xff]
    %v1592 = vld [vmem:[%s1549 + $0x150] sm:$0xff]
    %v1593 = vld [vmem:[%s1549 + $0x158] sm:$0xff]
    %v1594 = vld [vmem:[%s1549 + $0x160] sm:$0xff]
    %v1595 = vld [vmem:[%s1549 + $0x168] sm:$0xff]
    %v1596 = vld [vmem:[%s1549 + $0x170] sm:$0xff]
    %v1597 = vld [vmem:[%s1549 + $0x178] sm:$0xff]
    %s1598 = scalar_lea.vmem [#allocation8], 48
    %v1599 = vld [vmem:[%s1598] ss:$8 sm:$0xf]
    %v1600 = vld [vmem:[%s1598] ss:$8 sm:$0x30]
    %v1601 = vor.u32 %v1599, %v1600
    %v1603 = vlaneseq
    %v1604 = vshrl.u32 %v1603, 7
    %v1605 = vsub.s32 0, %v1604
    %v1606 = vrot.slane %v1601, %v1605
    %v1607 = vlaneseq
    %v1608 = vshrl.u32 %v1607, 7
    %v1609 = vsub.s32 1, %v1608
    %v1610 = vrot.slane %v1601, %v1609
    %v1611 = vlaneseq
    %v1612 = vshrl.u32 %v1611, 7
    %v1613 = vsub.s32 2, %v1612
    %v1614 = vrot.slane %v1601, %v1613
    %v1615 = vlaneseq
    %v1616 = vshrl.u32 %v1615, 7
    %v1617 = vsub.s32 3, %v1616
    %v1618 = vrot.slane %v1601, %v1617
    %v1619 = vlaneseq
    %v1620 = vshrl.u32 %v1619, 7
    %v1621 = vsub.s32 4, %v1620
    %v1622 = vrot.slane %v1601, %v1621
    %v1623 = vlaneseq
    %v1624 = vshrl.u32 %v1623, 7
    %v1625 = vsub.s32 5, %v1624
    %v1626 = vrot.slane %v1601, %v1625
    %v1681 = vunpack.c.l.b16 %v1550
    %v1682 = vunpack.c.h.b16 %v1550
    %v1683 = vunpack.c.l.b16 %v1551
    %v1684 = vunpack.c.h.b16 %v1551
    %v1685 = vunpack.c.l.b16 %v1552
    %v1686 = vunpack.c.h.b16 %v1552
    %v1687 = vunpack.c.l.b16 %v1553
    %v1688 = vunpack.c.h.b16 %v1553
    %v1689 = vunpack.c.l.b16 %v1554
    %v1690 = vunpack.c.h.b16 %v1554
    %v1691 = vunpack.c.l.b16 %v1555
    %v1692 = vunpack.c.h.b16 %v1555
    %v1693 = vunpack.c.l.b16 %v1556
    %v1694 = vunpack.c.h.b16 %v1556
    %v1695 = vunpack.c.l.b16 %v1557
    %v1696 = vunpack.c.h.b16 %v1557
    %v1697 = vunpack.c.l.b16 %v1558
    %v1698 = vunpack.c.h.b16 %v1558
    %v1699 = vunpack.c.l.b16 %v1559
    %v1700 = vunpack.c.h.b16 %v1559
    %v1701 = vunpack.c.l.b16 %v1560
    %v1702 = vunpack.c.h.b16 %v1560
    %v1703 = vunpack.c.l.b16 %v1561
    %v1704 = vunpack.c.h.b16 %v1561
    %v1705 = vunpack.c.l.b16 %v1562
    %v1706 = vunpack.c.h.b16 %v1562
    %v1707 = vunpack.c.l.b16 %v1563
    %v1708 = vunpack.c.h.b16 %v1563
    %v1709 = vunpack.c.l.b16 %v1564
    %v1710 = vunpack.c.h.b16 %v1564
    %v1711 = vunpack.c.l.b16 %v1565
    %v1712 = vunpack.c.h.b16 %v1565
    %v1713 = vunpack.c.l.b16 %v1566
    %v1714 = vunpack.c.h.b16 %v1566
    %v1715 = vunpack.c.l.b16 %v1567
    %v1716 = vunpack.c.h.b16 %v1567
    %v1717 = vunpack.c.l.b16 %v1568
    %v1718 = vunpack.c.h.b16 %v1568
    %v1719 = vunpack.c.l.b16 %v1569
    %v1720 = vunpack.c.h.b16 %v1569
    %v1721 = vunpack.c.l.b16 %v1570
    %v1722 = vunpack.c.h.b16 %v1570
    %v1723 = vunpack.c.l.b16 %v1571
    %v1724 = vunpack.c.h.b16 %v1571
    %v1725 = vunpack.c.l.b16 %v1572
    %v1726 = vunpack.c.h.b16 %v1572
    %v1727 = vunpack.c.l.b16 %v1573
    %v1728 = vunpack.c.h.b16 %v1573
    %v1729 = vunpack.c.l.b16 %v1574
    %v1730 = vunpack.c.h.b16 %v1574
    %v1731 = vunpack.c.l.b16 %v1575
    %v1732 = vunpack.c.h.b16 %v1575
    %v1733 = vunpack.c.l.b16 %v1576
    %v1734 = vunpack.c.h.b16 %v1576
    %v1735 = vunpack.c.l.b16 %v1577
    %v1736 = vunpack.c.h.b16 %v1577
    %v1737 = vunpack.c.l.b16 %v1578
    %v1738 = vunpack.c.h.b16 %v1578
    %v1739 = vunpack.c.l.b16 %v1579
    %v1740 = vunpack.c.h.b16 %v1579
    %v1741 = vunpack.c.l.b16 %v1580
    %v1742 = vunpack.c.h.b16 %v1580
    %v1743 = vunpack.c.l.b16 %v1581
    %v1744 = vunpack.c.h.b16 %v1581
    %v1745 = vunpack.c.l.b16 %v1582
    %v1746 = vunpack.c.h.b16 %v1582
    %v1747 = vunpack.c.l.b16 %v1583
    %v1748 = vunpack.c.h.b16 %v1583
    %v1749 = vunpack.c.l.b16 %v1584
    %v1750 = vunpack.c.h.b16 %v1584
    %v1751 = vunpack.c.l.b16 %v1585
    %v1752 = vunpack.c.h.b16 %v1585
    %v1753 = vunpack.c.l.b16 %v1586
    %v1754 = vunpack.c.h.b16 %v1586
    %v1755 = vunpack.c.l.b16 %v1587
    %v1756 = vunpack.c.h.b16 %v1587
    %v1757 = vunpack.c.l.b16 %v1588
    %v1758 = vunpack.c.h.b16 %v1588
    %v1759 = vunpack.c.l.b16 %v1589
    %v1760 = vunpack.c.h.b16 %v1589
    %v1761 = vunpack.c.l.b16 %v1590
    %v1762 = vunpack.c.h.b16 %v1590
    %v1763 = vunpack.c.l.b16 %v1591
    %v1764 = vunpack.c.h.b16 %v1591
    %v1765 = vunpack.c.l.b16 %v1592
    %v1766 = vunpack.c.h.b16 %v1592
    %v1767 = vunpack.c.l.b16 %v1593
    %v1768 = vunpack.c.h.b16 %v1593
    %v1769 = vunpack.c.l.b16 %v1594
    %v1770 = vunpack.c.h.b16 %v1594
    %v1771 = vunpack.c.l.b16 %v1595
    %v1772 = vunpack.c.h.b16 %v1595
    %v1773 = vunpack.c.l.b16 %v1596
    %v1774 = vunpack.c.h.b16 %v1596
    %v1775 = vunpack.c.l.b16 %v1597
    %v1776 = vunpack.c.h.b16 %v1597
    %v1777 = vpack.c.b16 %v1687, %v1681
    %v1778 = vpack.c.b16 %v1688, %v1682
    %v1779 = vpack.c.b16 %v1689, %v1683
    %v1780 = vpack.c.b16 %v1690, %v1684
    %v1781 = vpack.c.b16 %v1691, %v1685
    %v1782 = vpack.c.b16 %v1692, %v1686
    %v1783 = vpack.c.b16 %v1699, %v1693
    %v1784 = vpack.c.b16 %v1700, %v1694
    %v1785 = vpack.c.b16 %v1701, %v1695
    %v1786 = vpack.c.b16 %v1702, %v1696
    %v1787 = vpack.c.b16 %v1703, %v1697
    %v1788 = vpack.c.b16 %v1704, %v1698
    %v1789 = vpack.c.b16 %v1711, %v1705
    %v1790 = vpack.c.b16 %v1712, %v1706
    %v1791 = vpack.c.b16 %v1713, %v1707
    %v1792 = vpack.c.b16 %v1714, %v1708
    %v1793 = vpack.c.b16 %v1715, %v1709
    %v1794 = vpack.c.b16 %v1716, %v1710
    %v1795 = vpack.c.b16 %v1723, %v1717
    %v1796 = vpack.c.b16 %v1724, %v1718
    %v1797 = vpack.c.b16 %v1725, %v1719
    %v1798 = vpack.c.b16 %v1726, %v1720
    %v1799 = vpack.c.b16 %v1727, %v1721
    %v1800 = vpack.c.b16 %v1728, %v1722
    %v1801 = vpack.c.b16 %v1735, %v1729
    %v1802 = vpack.c.b16 %v1736, %v1730
    %v1803 = vpack.c.b16 %v1737, %v1731
    %v1804 = vpack.c.b16 %v1738, %v1732
    %v1805 = vpack.c.b16 %v1739, %v1733
    %v1806 = vpack.c.b16 %v1740, %v1734
    %v1807 = vpack.c.b16 %v1747, %v1741
    %v1808 = vpack.c.b16 %v1748, %v1742
    %v1809 = vpack.c.b16 %v1749, %v1743
    %v1810 = vpack.c.b16 %v1750, %v1744
    %v1811 = vpack.c.b16 %v1751, %v1745
    %v1812 = vpack.c.b16 %v1752, %v1746
    %v1813 = vpack.c.b16 %v1759, %v1753
    %v1814 = vpack.c.b16 %v1760, %v1754
    %v1815 = vpack.c.b16 %v1761, %v1755
    %v1816 = vpack.c.b16 %v1762, %v1756
    %v1817 = vpack.c.b16 %v1763, %v1757
    %v1818 = vpack.c.b16 %v1764, %v1758
    %v1819 = vpack.c.b16 %v1771, %v1765
    %v1820 = vpack.c.b16 %v1772, %v1766
    %v1821 = vpack.c.b16 %v1773, %v1767
    %v1822 = vpack.c.b16 %v1774, %v1768
    %v1823 = vpack.c.b16 %v1775, %v1769
    %v1824 = vpack.c.b16 %v1776, %v1770
    %1873 = vmatprep.subr.bf16.mxu0 %v1778
    %1874 = vmatpush1.bf16.msra.mxu0 %v1777
    %1875 = vmatprep.subr.bf16.mxu0 %v1784
    %1876 = vmatpush1.bf16.msra.mxu0 %v1783
    %1877 = vmatprep.subr.bf16.mxu0 %v1790
    %1878 = vmatpush1.bf16.msra.mxu0 %v1789
    %1879 = vmatprep.subr.bf16.mxu0 %v1796
    %1880 = vmatpush1.bf16.msra.mxu0 %v1795
    %1881 = vmatprep.subr.bf16.mxu0 %v1802
    %1882 = vmatpush1.bf16.msra.mxu0 %v1801
    %1883 = vmatprep.subr.bf16.mxu0 %v1808
    %1884 = vmatpush1.bf16.msra.mxu0 %v1807
    %1885 = vmatprep.subr.bf16.mxu0 %v1814
    %1886 = vmatpush1.bf16.msra.mxu0 %v1813
    %1887 = vmatprep.subr.bf16.mxu0 %v1820
    %1888 = vmatpush1.bf16.msra.mxu0 %v1819
    %1889 = vmatprep.subr.bf16.mxu0 0
    %1890 = vmatpush1.bf16.msra.mxu0 0
    %1891 = vmatprep.subr.bf16.mxu0 0
    %1892 = vmatpush1.bf16.msra.mxu0 0
    %1893 = vmatprep.subr.bf16.mxu0 0
    %1894 = vmatpush1.bf16.msra.mxu0 0
    %1895 = vmatprep.subr.bf16.mxu0 0
    %1896 = vmatpush1.bf16.msra.mxu0 0
    %1897 = vmatprep.subr.bf16.mxu0 0
    %1898 = vmatpush1.bf16.msra.mxu0 0
    %1899 = vmatprep.subr.bf16.mxu0 0
    %1900 = vmatpush1.bf16.msra.mxu0 0
    %1901 = vmatprep.subr.bf16.mxu0 0
    %1902 = vmatpush1.bf16.msra.mxu0 0
    %1903 = vmatprep.subr.bf16.mxu0 0
    %1904 = vmatpush1.bf16.msra.mxu0 0
    %1905 = vmatprep.mubr.bf16.mxu0 0
    %1906 = vmatmul.mubr.bf16.gmra.mrb[0].mxu0 %v1548
    %v1907 = vpop.f32.mrb[0].mxu0
    %v1908 = vadd.f32 %v1606, %v1907
    %v1909 = vpop.f32.mrb[0].mxu0
    %v1910 = vadd.f32 %v1610, %v1909
    %v1911 = vpop.f32.mrb[0].mxu0
    %v1912 = vadd.f32 %v1606, %v1911
    %v1913 = vpop.f32.mrb[0].mxu0
    %v1914 = vadd.f32 %v1610, %v1913
    %1915 = vdwg.mxu0
    %1916 = vmatprep.subr.bf16.mxu0 %v1780
    %1917 = vmatpush1.bf16.msra.mxu0 %v1779
    %1918 = vmatprep.subr.bf16.mxu0 %v1786
    %1919 = vmatpush1.bf16.msra.mxu0 %v1785
    %1920 = vmatprep.subr.bf16.mxu0 %v1792
    %1921 = vmatpush1.bf16.msra.mxu0 %v1791
    %1922 = vmatprep.subr.bf16.mxu0 %v1798
    %1923 = vmatpush1.bf16.msra.mxu0 %v1797
    %1924 = vmatprep.subr.bf16.mxu0 %v1804
    %1925 = vmatpush1.bf16.msra.mxu0 %v1803
    %1926 = vmatprep.subr.bf16.mxu0 %v1810
    %1927 = vmatpush1.bf16.msra.mxu0 %v1809
    %1928 = vmatprep.subr.bf16.mxu0 %v1816
    %1929 = vmatpush1.bf16.msra.mxu0 %v1815
    %1930 = vmatprep.subr.bf16.mxu0 %v1822
    %1931 = vmatpush1.bf16.msra.mxu0 %v1821
    %1932 = vmatprep.subr.bf16.mxu0 0
    %1933 = vmatpush1.bf16.msra.mxu0 0
    %1934 = vmatprep.subr.bf16.mxu0 0
    %1935 = vmatpush1.bf16.msra.mxu0 0
    %1936 = vmatprep.subr.bf16.mxu0 0
    %1937 = vmatpush1.bf16.msra.mxu0 0
    %1938 = vmatprep.subr.bf16.mxu0 0
    %1939 = vmatpush1.bf16.msra.mxu0 0
    %1940 = vmatprep.subr.bf16.mxu0 0
    %1941 = vmatpush1.bf16.msra.mxu0 0
    %1942 = vmatprep.subr.bf16.mxu0 0
    %1943 = vmatpush1.bf16.msra.mxu0 0
    %1944 = vmatprep.subr.bf16.mxu0 0
    %1945 = vmatpush1.bf16.msra.mxu0 0
    %1946 = vmatprep.subr.bf16.mxu0 0
    %1947 = vmatpush1.bf16.msra.mxu0 0
    %1948 = vmatprep.mubr.bf16.mxu0 0
    %1949 = vmatmul.mubr.bf16.gmra.mrb[0].mxu0 %v1548
    %v1950 = vpop.f32.mrb[0].mxu0
    %v1951 = vadd.f32 %v1614, %v1950
    %v1952 = vpop.f32.mrb[0].mxu0
    %v1953 = vadd.f32 %v1618, %v1952
    %v1954 = vpop.f32.mrb[0].mxu0
    %v1955 = vadd.f32 %v1614, %v1954
    %v1956 = vpop.f32.mrb[0].mxu0
    %v1957 = vadd.f32 %v1618, %v1956
    %1958 = vdwg.mxu0
    %1959 = vmatprep.subr.bf16.mxu0 %v1782
    %1960 = vmatpush1.bf16.msra.mxu0 %v1781
    %1961 = vmatprep.subr.bf16.mxu0 %v1788
    %1962 = vmatpush1.bf16.msra.mxu0 %v1787
    %1963 = vmatprep.subr.bf16.mxu0 %v1794
    %1964 = vmatpush1.bf16.msra.mxu0 %v1793
    %1965 = vmatprep.subr.bf16.mxu0 %v1800
    %1966 = vmatpush1.bf16.msra.mxu0 %v1799
    %1967 = vmatprep.subr.bf16.mxu0 %v1806
    %1968 = vmatpush1.bf16.msra.mxu0 %v1805
    %1969 = vmatprep.subr.bf16.mxu0 %v1812
    %1970 = vmatpush1.bf16.msra.mxu0 %v1811
    %1971 = vmatprep.subr.bf16.mxu0 %v1818
    %1972 = vmatpush1.bf16.msra.mxu0 %v1817
    %1973 = vmatprep.subr.bf16.mxu0 %v1824
    %1974 = vmatpush1.bf16.msra.mxu0 %v1823
    %1975 = vmatprep.subr.bf16.mxu0 0
    %1976 = vmatpush1.bf16.msra.mxu0 0
    %1977 = vmatprep.subr.bf16.mxu0 0
    %1978 = vmatpush1.bf16.msra.mxu0 0
    %1979 = vmatprep.subr.bf16.mxu0 0
    %1980 = vmatpush1.bf16.msra.mxu0 0
    %1981 = vmatprep.subr.bf16.mxu0 0
    %1982 = vmatpush1.bf16.msra.mxu0 0
    %1983 = vmatprep.subr.bf16.mxu0 0
    %1984 = vmatpush1.bf16.msra.mxu0 0
    %1985 = vmatprep.subr.bf16.mxu0 0
    %1986 = vmatpush1.bf16.msra.mxu0 0
    %1987 = vmatprep.subr.bf16.mxu0 0
    %1988 = vmatpush1.bf16.msra.mxu0 0
    %1989 = vmatprep.subr.bf16.mxu0 0
    %1990 = vmatpush1.bf16.msra.mxu0 0
    %1991 = vmatprep.mubr.bf16.mxu0 0
    %1992 = vmatmul.mubr.bf16.gmra.mrb[0].mxu0 %v1548
    %v1993 = vpop.f32.mrb[0].mxu0
    %v1994 = vadd.f32 %v1622, %v1993
    %v1995 = vpop.f32.mrb[0].mxu0
    %v1996 = vadd.f32 %v1626, %v1995
    %v1997 = vpop.f32.mrb[0].mxu0
    %v1998 = vadd.f32 %v1622, %v1997
    %v1999 = vpop.f32.mrb[0].mxu0
    %v2000 = vadd.f32 %v1626, %v1999
    %2001 = vdwg.mxu0
    %s2002 = scalar_lea.vmem %s6, 128
    %v2003 = vld [vmem:[%s2002] sm:$0xf]
    %v2004 = vld [vmem:[%s2002 + $0x4] sm:$0xf]
    %v2005 = vld [vmem:[%s2002 + $0x8] sm:$0xf]
    %v2006 = vld [vmem:[%s2002 + $0xc] sm:$0xf]
    %v2007 = vld [vmem:[%s2002 + $0x10] sm:$0xf]
    %v2008 = vld [vmem:[%s2002 + $0x14] sm:$0xf]
    %v2009 = vld [vmem:[%s2002 + $0x18] sm:$0xf]
    %v2010 = vld [vmem:[%s2002 + $0x1c] sm:$0xf]
    %v2011 = vld [vmem:[%s2002 + $0x20] sm:$0xf]
    %v2012 = vld [vmem:[%s2002 + $0x24] sm:$0xf]
    %v2013 = vld [vmem:[%s2002 + $0x28] sm:$0xf]
    %v2014 = vld [vmem:[%s2002 + $0x2c] sm:$0xf]
    %v2015 = vld [vmem:[%s2002 + $0x30] sm:$0xf]
    %v2016 = vld [vmem:[%s2002 + $0x34] sm:$0xf]
    %v2017 = vld [vmem:[%s2002 + $0x38] sm:$0xf]
    %v2018 = vld [vmem:[%s2002 + $0x3c] sm:$0xf]
    %v2019 = vld [vmem:[%s2002 + $0x40] sm:$0xf]
    %v2020 = vld [vmem:[%s2002 + $0x44] sm:$0xf]
    %v2021 = vld [vmem:[%s2002 + $0x48] sm:$0xf]
    %v2022 = vld [vmem:[%s2002 + $0x4c] sm:$0xf]
    %v2023 = vld [vmem:[%s2002 + $0x50] sm:$0xf]
    %v2024 = vld [vmem:[%s2002 + $0x54] sm:$0xf]
    %v2025 = vld [vmem:[%s2002 + $0x58] sm:$0xf]
    %v2026 = vld [vmem:[%s2002 + $0x5c] sm:$0xf]
    %v2027 = vld [vmem:[%s2002 + $0x60] sm:$0xf]
    %v2028 = vld [vmem:[%s2002 + $0x64] sm:$0xf]
    %v2029 = vld [vmem:[%s2002 + $0x68] sm:$0xf]
    %v2030 = vld [vmem:[%s2002 + $0x6c] sm:$0xf]
    %v2031 = vld [vmem:[%s2002 + $0x70] sm:$0xf]
    %v2032 = vld [vmem:[%s2002 + $0x74] sm:$0xf]
    %v2033 = vld [vmem:[%s2002 + $0x78] sm:$0xf]
    %v2034 = vld [vmem:[%s2002 + $0x7c] sm:$0xf]
    %v2035 = vpack.c.bf16 %v1908, %v1908
    %v2036 = vpack.c.bf16 %v1912, %v1912
    %v2037 = vpack.c.bf16 %v1951, %v1951
    %v2038 = vpack.c.bf16 %v1955, %v1955
    %2039 = vmatprep.subr.bf16.mxu0 0
    %2040 = vmatpush1.bf16.xpose.msra.mxu0 %v2037
    %2041 = vmatprep.subr.bf16.mxu0 0
    %2042 = vmatpush1.bf16.xpose.msra.mxu0 0
    %2043 = vmatprep.subr.bf16.mxu0 0
    %2044 = vmatpush1.bf16.xpose.msra.mxu0 0
    %2045 = vmatprep.subr.bf16.mxu0 0
    %2046 = vmatpush1.bf16.xpose.msra.mxu0 0
    %2047 = vmatprep.subr.bf16.mxu0 0
    %2048 = vmatpush1.bf16.xpose.msra.mxu0 0
    %2049 = vmatprep.subr.bf16.mxu0 0
    %2050 = vmatpush1.bf16.xpose.msra.mxu0 0
    %2051 = vmatprep.subr.bf16.mxu0 0
    %2052 = vmatpush1.bf16.xpose.msra.mxu0 0
    %2053 = vmatprep.subr.bf16.mxu0 0
    %2054 = vmatpush1.bf16.xpose.msra.mxu0 0
    %2055 = vmatprep.subr.bf16.mxu0 0
    %2056 = vmatpush1.bf16.xpose.msra.mxu0 0
    %2057 = vmatprep.subr.bf16.mxu0 0
    %2058 = vmatpush1.bf16.xpose.msra.mxu0 0
    %2059 = vmatprep.subr.bf16.mxu0 0
    %2060 = vmatpush1.bf16.xpose.msra.mxu0 0
    %2061 = vmatprep.subr.bf16.mxu0 0
    %2062 = vmatpush1.bf16.xpose.msra.mxu0 0
    %2063 = vmatprep.subr.bf16.mxu0 0
    %2064 = vmatpush1.bf16.xpose.msra.mxu0 0
    %2065 = vmatprep.subr.bf16.mxu0 0
    %2066 = vmatpush1.bf16.xpose.msra.mxu0 0
    %2067 = vmatprep.subr.bf16.mxu0 0
    %2068 = vmatpush1.bf16.xpose.msra.mxu0 0
    %2069 = vmatprep.subr.bf16.mxu0 0
    %2070 = vmatpush1.bf16.xpose.msra.mxu0 0
    %2071 = vmatprep.mubr.bf16.mxu0 0
    %2072 = vmatmul.mubr.bf16.gmra.mrb[0].mxu0 %v2035
    %v2073 = vpop.f32.mrb[0].mxu0
    %v2074 = vadd.f32 0.0, %v2073
    %v2075 = vpop.f32.mrb[0].mxu0
    %v2076 = vpop.f32.mrb[0].mxu0
    %v2077 = vpop.f32.mrb[0].mxu0
    %2078 = vdwg.mxu0
    %2079 = vmatprep.subr.bf16.mxu0 0
    %2080 = vmatpush1.bf16.xpose.msra.mxu0 %v2038
    %2081 = vmatprep.subr.bf16.mxu0 0
    %2082 = vmatpush1.bf16.xpose.msra.mxu0 0
    %2083 = vmatprep.subr.bf16.mxu0 0
    %2084 = vmatpush1.bf16.xpose.msra.mxu0 0
    %2085 = vmatprep.subr.bf16.mxu0 0
    %2086 = vmatpush1.bf16.xpose.msra.mxu0 0
    %2087 = vmatprep.subr.bf16.mxu0 0
    %2088 = vmatpush1.bf16.xpose.msra.mxu0 0
    %2089 = vmatprep.subr.bf16.mxu0 0
    %2090 = vmatpush1.bf16.xpose.msra.mxu0 0
    %2091 = vmatprep.subr.bf16.mxu0 0
    %2092 = vmatpush1.bf16.xpose.msra.mxu0 0
    %2093 = vmatprep.subr.bf16.mxu0 0
    %2094 = vmatpush1.bf16.xpose.msra.mxu0 0
    %2095 = vmatprep.subr.bf16.mxu0 0
    %2096 = vmatpush1.bf16.xpose.msra.mxu0 0
    %2097 = vmatprep.subr.bf16.mxu0 0
    %2098 = vmatpush1.bf16.xpose.msra.mxu0 0
    %2099 = vmatprep.subr.bf16.mxu0 0
    %2100 = vmatpush1.bf16.xpose.msra.mxu0 0
    %2101 = vmatprep.subr.bf16.mxu0 0
    %2102 = vmatpush1.bf16.xpose.msra.mxu0 0
    %2103 = vmatprep.subr.bf16.mxu0 0
    %2104 = vmatpush1.bf16.xpose.msra.mxu0 0
    %2105 = vmatprep.subr.bf16.mxu0 0
    %2106 = vmatpush1.bf16.xpose.msra.mxu0 0
    %2107 = vmatprep.subr.bf16.mxu0 0
    %2108 = vmatpush1.bf16.xpose.msra.mxu0 0
    %2109 = vmatprep.subr.bf16.mxu0 0
    %2110 = vmatpush1.bf16.xpose.msra.mxu0 0
    %2111 = vmatprep.mubr.bf16.mxu0 0
    %2112 = vmatmul.mubr.bf16.gmra.mrb[0].mxu0 %v2036
    %v2113 = vpop.f32.mrb[0].mxu0
    %v2114 = vadd.f32 0.0, %v2113
    %v2115 = vpop.f32.mrb[0].mxu0
    %v2116 = vpop.f32.mrb[0].mxu0
    %v2117 = vpop.f32.mrb[0].mxu0
    %2118 = vdwg.mxu0
    %v2119 = vmul.f32 %v2074, 0.25
    %v2120 = vmul.f32 %v2114, 0.25
    %v2121 = vadd.f32 %v2119, %v734
    %v2122 = vadd.f32 %v2120, %v738
    %v2123 = vsel %vm743, %v2121, -inf
    %2124 = vmax.xlane.f32.xlu0 %v2123
    %v2125 = vpop.xlane.xlu0 %2124
    %v2126 = vsel %vm743, %v2122, -inf
    %2127 = vmax.xlane.f32.xlu0 %v2126
    %v2128 = vpop.xlane.xlu0 %2127
    %v2129 = vsub.f32 %v2121, %v2125
    %v2130 = vsub.f32 %v2122, %v2128
    %v2131 = vmul.f32 %v2129, 1.442695
    %v2132 = vpow.pop %v2131
    %v2133 = vmul.f32 %v2130, 1.442695
    %v2134 = vpow.pop %v2133
    %v2135 = vsel %vm743, %v2132, 0.0
    %2136 = vadd.xlane.f32.xlu0 %v2135
    %v2137 = vpop.xlane.xlu0 %2136
    %v2138 = vsel %vm743, %v2134, 0.0
    %2139 = vadd.xlane.f32.xlu0 %v2138
    %v2140 = vpop.xlane.xlu0 %2139
    %v2141 = vrcp.pop %v2137
    %v2142 = vrcp.pop %v2140
    %v2143 = vmul.f32 %v2132, %v2141
    %v2144 = vmul.f32 %v2134, %v2142
    %v2145 = vpack.c.bf16 %v2143, %v2143
    %v2146 = vpack.c.bf16 %v2144, %v2144
    %v2147 = vpack.c.bf16 %v1994, %v1994
    %v2148 = vpack.c.bf16 %v1998, %v1998
    %v2150 = vsel %vm743, %v2145, 0
    %v2153 = vsel %vm773, %v2147, 0
    %2155 = vmatprep.subr.bf16.mxu0 0
    %2156 = vmatpush1.bf16.msra.mxu0 %v2153
    %2157 = vmatprep.subr.bf16.mxu0 0
    %2158 = vmatpush1.bf16.msra.mxu0 0
    %2159 = vmatprep.subr.bf16.mxu0 0
    %2160 = vmatpush1.bf16.msra.mxu0 0
    %2161 = vmatprep.subr.bf16.mxu0 0
    %2162 = vmatpush1.bf16.msra.mxu0 0
    %2163 = vmatprep.subr.bf16.mxu0 0
    %2164 = vmatpush1.bf16.msra.mxu0 0
    %2165 = vmatprep.subr.bf16.mxu0 0
    %2166 = vmatpush1.bf16.msra.mxu0 0
    %2167 = vmatprep.subr.bf16.mxu0 0
    %2168 = vmatpush1.bf16.msra.mxu0 0
    %2169 = vmatprep.subr.bf16.mxu0 0
    %2170 = vmatpush1.bf16.msra.mxu0 0
    %2171 = vmatprep.subr.bf16.mxu0 0
    %2172 = vmatpush1.bf16.msra.mxu0 0
    %2173 = vmatprep.subr.bf16.mxu0 0
    %2174 = vmatpush1.bf16.msra.mxu0 0
    %2175 = vmatprep.subr.bf16.mxu0 0
    %2176 = vmatpush1.bf16.msra.mxu0 0
    %2177 = vmatprep.subr.bf16.mxu0 0
    %2178 = vmatpush1.bf16.msra.mxu0 0
    %2179 = vmatprep.subr.bf16.mxu0 0
    %2180 = vmatpush1.bf16.msra.mxu0 0
    %2181 = vmatprep.subr.bf16.mxu0 0
    %2182 = vmatpush1.bf16.msra.mxu0 0
    %2183 = vmatprep.subr.bf16.mxu0 0
    %2184 = vmatpush1.bf16.msra.mxu0 0
    %2185 = vmatprep.subr.bf16.mxu0 0
    %2186 = vmatpush1.bf16.msra.mxu0 0
    %2187 = vmatprep.mubr.bf16.mxu0 0
    %2188 = vmatmul.mubr.bf16.gmra.mrb[0].mxu0 %v2150
    %v2189 = vpop.f32.mrb[0].mxu0
    %v2190 = vadd.f32 0.0, %v2189
    %v2191 = vpop.f32.mrb[0].mxu0
    %v2192 = vpop.f32.mrb[0].mxu0
    %v2193 = vpop.f32.mrb[0].mxu0
    %2194 = vdwg.mxu0
    %v2196 = vsel %vm743, %v2146, 0
    %v2199 = vsel %vm773, %v2148, 0
    %2201 = vmatprep.subr.bf16.mxu0 0
    %2202 = vmatpush1.bf16.msra.mxu0 %v2199
    %2203 = vmatprep.subr.bf16.mxu0 0
    %2204 = vmatpush1.bf16.msra.mxu0 0
    %2205 = vmatprep.subr.bf16.mxu0 0
    %2206 = vmatpush1.bf16.msra.mxu0 0
    %2207 = vmatprep.subr.bf16.mxu0 0
    %2208 = vmatpush1.bf16.msra.mxu0 0
    %2209 = vmatprep.subr.bf16.mxu0 0
    %2210 = vmatpush1.bf16.msra.mxu0 0
    %2211 = vmatprep.subr.bf16.mxu0 0
    %2212 = vmatpush1.bf16.msra.mxu0 0
    %2213 = vmatprep.subr.bf16.mxu0 0
    %2214 = vmatpush1.bf16.msra.mxu0 0
    %2215 = vmatprep.subr.bf16.mxu0 0
    %2216 = vmatpush1.bf16.msra.mxu0 0
    %2217 = vmatprep.subr.bf16.mxu0 0
    %2218 = vmatpush1.bf16.msra.mxu0 0
    %2219 = vmatprep.subr.bf16.mxu0 0
    %2220 = vmatpush1.bf16.msra.mxu0 0
    %2221 = vmatprep.subr.bf16.mxu0 0
    %2222 = vmatpush1.bf16.msra.mxu0 0
    %2223 = vmatprep.subr.bf16.mxu0 0
    %2224 = vmatpush1.bf16.msra.mxu0 0
    %2225 = vmatprep.subr.bf16.mxu0 0
    %2226 = vmatpush1.bf16.msra.mxu0 0
    %2227 = vmatprep.subr.bf16.mxu0 0
    %2228 = vmatpush1.bf16.msra.mxu0 0
    %2229 = vmatprep.subr.bf16.mxu0 0
    %2230 = vmatpush1.bf16.msra.mxu0 0
    %2231 = vmatprep.subr.bf16.mxu0 0
    %2232 = vmatpush1.bf16.msra.mxu0 0
    %2233 = vmatprep.mubr.bf16.mxu0 0
    %2234 = vmatmul.mubr.bf16.gmra.mrb[0].mxu0 %v2196
    %v2235 = vpop.f32.mrb[0].mxu0
    %v2236 = vadd.f32 0.0, %v2235
    %v2237 = vpop.f32.mrb[0].mxu0
    %v2238 = vpop.f32.mrb[0].mxu0
    %v2239 = vpop.f32.mrb[0].mxu0
    %2240 = vdwg.mxu0
    %v2241 = vpack.c.bf16 %v2236, %v2190
    %v2242 = vpack.c.bf16 %v1910, %v1910
    %v2243 = vpack.c.bf16 %v1914, %v1914
    %v2244 = vpack.c.bf16 %v1953, %v1953
    %v2245 = vpack.c.bf16 %v1957, %v1957
    %2246 = vmatprep.subr.bf16.mxu0 0
    %2247 = vmatpush1.bf16.xpose.msra.mxu0 %v2244
    %2248 = vmatprep.subr.bf16.mxu0 0
    %2249 = vmatpush1.bf16.xpose.msra.mxu0 0
    %2250 = vmatprep.subr.bf16.mxu0 0
    %2251 = vmatpush1.bf16.xpose.msra.mxu0 0
    %2252 = vmatprep.subr.bf16.mxu0 0
    %2253 = vmatpush1.bf16.xpose.msra.mxu0 0
    %2254 = vmatprep.subr.bf16.mxu0 0
    %2255 = vmatpush1.bf16.xpose.msra.mxu0 0
    %2256 = vmatprep.subr.bf16.mxu0 0
    %2257 = vmatpush1.bf16.xpose.msra.mxu0 0
    %2258 = vmatprep.subr.bf16.mxu0 0
    %2259 = vmatpush1.bf16.xpose.msra.mxu0 0
    %2260 = vmatprep.subr.bf16.mxu0 0
    %2261 = vmatpush1.bf16.xpose.msra.mxu0 0
    %2262 = vmatprep.subr.bf16.mxu0 0
    %2263 = vmatpush1.bf16.xpose.msra.mxu0 0
    %2264 = vmatprep.subr.bf16.mxu0 0
    %2265 = vmatpush1.bf16.xpose.msra.mxu0 0
    %2266 = vmatprep.subr.bf16.mxu0 0
    %2267 = vmatpush1.bf16.xpose.msra.mxu0 0
    %2268 = vmatprep.subr.bf16.mxu0 0
    %2269 = vmatpush1.bf16.xpose.msra.mxu0 0
    %2270 = vmatprep.subr.bf16.mxu0 0
    %2271 = vmatpush1.bf16.xpose.msra.mxu0 0
    %2272 = vmatprep.subr.bf16.mxu0 0
    %2273 = vmatpush1.bf16.xpose.msra.mxu0 0
    %2274 = vmatprep.subr.bf16.mxu0 0
    %2275 = vmatpush1.bf16.xpose.msra.mxu0 0
    %2276 = vmatprep.subr.bf16.mxu0 0
    %2277 = vmatpush1.bf16.xpose.msra.mxu0 0
    %2278 = vmatprep.mubr.bf16.mxu0 0
    %2279 = vmatmul.mubr.bf16.gmra.mrb[0].mxu0 %v2242
    %v2280 = vpop.f32.mrb[0].mxu0
    %v2281 = vadd.f32 0.0, %v2280
    %v2282 = vpop.f32.mrb[0].mxu0
    %v2283 = vpop.f32.mrb[0].mxu0
    %v2284 = vpop.f32.mrb[0].mxu0
    %2285 = vdwg.mxu0
    %2286 = vmatprep.subr.bf16.mxu0 0
    %2287 = vmatpush1.bf16.xpose.msra.mxu0 %v2245
    %2288 = vmatprep.subr.bf16.mxu0 0
    %2289 = vmatpush1.bf16.xpose.msra.mxu0 0
    %2290 = vmatprep.subr.bf16.mxu0 0
    %2291 = vmatpush1.bf16.xpose.msra.mxu0 0
    %2292 = vmatprep.subr.bf16.mxu0 0
    %2293 = vmatpush1.bf16.xpose.msra.mxu0 0
    %2294 = vmatprep.subr.bf16.mxu0 0
    %2295 = vmatpush1.bf16.xpose.msra.mxu0 0
    %2296 = vmatprep.subr.bf16.mxu0 0
    %2297 = vmatpush1.bf16.xpose.msra.mxu0 0
    %2298 = vmatprep.subr.bf16.mxu0 0
    %2299 = vmatpush1.bf16.xpose.msra.mxu0 0
    %2300 = vmatprep.subr.bf16.mxu0 0
    %2301 = vmatpush1.bf16.xpose.msra.mxu0 0
    %2302 = vmatprep.subr.bf16.mxu0 0
    %2303 = vmatpush1.bf16.xpose.msra.mxu0 0
    %2304 = vmatprep.subr.bf16.mxu0 0
    %2305 = vmatpush1.bf16.xpose.msra.mxu0 0
    %2306 = vmatprep.subr.bf16.mxu0 0
    %2307 = vmatpush1.bf16.xpose.msra.mxu0 0
    %2308 = vmatprep.subr.bf16.mxu0 0
    %2309 = vmatpush1.bf16.xpose.msra.mxu0 0
    %2310 = vmatprep.subr.bf16.mxu0 0
    %2311 = vmatpush1.bf16.xpose.msra.mxu0 0
    %2312 = vmatprep.subr.bf16.mxu0 0
    %2313 = vmatpush1.bf16.xpose.msra.mxu0 0
    %2314 = vmatprep.subr.bf16.mxu0 0
    %2315 = vmatpush1.bf16.xpose.msra.mxu0 0
    %2316 = vmatprep.subr.bf16.mxu0 0
    %2317 = vmatpush1.bf16.xpose.msra.mxu0 0
    %2318 = vmatprep.mubr.bf16.mxu0 0
    %2319 = vmatmul.mubr.bf16.gmra.mrb[0].mxu0 %v2243
    %v2320 = vpop.f32.mrb[0].mxu0
    %v2321 = vadd.f32 0.0, %v2320
    %v2322 = vpop.f32.mrb[0].mxu0
    %v2323 = vpop.f32.mrb[0].mxu0
    %v2324 = vpop.f32.mrb[0].mxu0
    %2325 = vdwg.mxu0
    %v2326 = vmul.f32 %v2281, 0.25
    %v2327 = vmul.f32 %v2321, 0.25
    %v2328 = vadd.f32 %v2326, %v734
    %v2329 = vadd.f32 %v2327, %v738
    %v2330 = vsel %vm743, %v2328, -inf
    %2331 = vmax.xlane.f32.xlu0 %v2330
    %v2332 = vpop.xlane.xlu0 %2331
    %v2333 = vsel %vm743, %v2329, -inf
    %2334 = vmax.xlane.f32.xlu0 %v2333
    %v2335 = vpop.xlane.xlu0 %2334
    %v2336 = vsub.f32 %v2328, %v2332
    %v2337 = vsub.f32 %v2329, %v2335
    %v2338 = vmul.f32 %v2336, 1.442695
    %v2339 = vpow.pop %v2338
    %v2340 = vmul.f32 %v2337, 1.442695
    %v2341 = vpow.pop %v2340
    %v2342 = vsel %vm743, %v2339, 0.0
    %2343 = vadd.xlane.f32.xlu0 %v2342
    %v2344 = vpop.xlane.xlu0 %2343
    %v2345 = vsel %vm743, %v2341, 0.0
    %2346 = vadd.xlane.f32.xlu0 %v2345
    %v2347 = vpop.xlane.xlu0 %2346
    %v2348 = vrcp.pop %v2344
    %v2349 = vrcp.pop %v2347
    %v2350 = vmul.f32 %v2339, %v2348
    %v2351 = vmul.f32 %v2341, %v2349
    %v2352 = vpack.c.bf16 %v2350, %v2350
    %v2353 = vpack.c.bf16 %v2351, %v2351
    %v2354 = vpack.c.bf16 %v1996, %v1996
    %v2355 = vpack.c.bf16 %v2000, %v2000
    %v2357 = vsel %vm743, %v2352, 0
    %v2360 = vsel %vm773, %v2354, 0
    %2362 = vmatprep.subr.bf16.mxu0 0
    %2363 = vmatpush1.bf16.msra.mxu0 %v2360
    %2364 = vmatprep.subr.bf16.mxu0 0
    %2365 = vmatpush1.bf16.msra.mxu0 0
    %2366 = vmatprep.subr.bf16.mxu0 0
    %2367 = vmatpush1.bf16.msra.mxu0 0
    %2368 = vmatprep.subr.bf16.mxu0 0
    %2369 = vmatpush1.bf16.msra.mxu0 0
    %2370 = vmatprep.subr.bf16.mxu0 0
    %2371 = vmatpush1.bf16.msra.mxu0 0
    %2372 = vmatprep.subr.bf16.mxu0 0
    %2373 = vmatpush1.bf16.msra.mxu0 0
    %2374 = vmatprep.subr.bf16.mxu0 0
    %2375 = vmatpush1.bf16.msra.mxu0 0
    %2376 = vmatprep.subr.bf16.mxu0 0
    %2377 = vmatpush1.bf16.msra.mxu0 0
    %2378 = vmatprep.subr.bf16.mxu0 0
    %2379 = vmatpush1.bf16.msra.mxu0 0
    %2380 = vmatprep.subr.bf16.mxu0 0
    %2381 = vmatpush1.bf16.msra.mxu0 0
    %2382 = vmatprep.subr.bf16.mxu0 0
    %2383 = vmatpush1.bf16.msra.mxu0 0
    %2384 = vmatprep.subr.bf16.mxu0 0
    %2385 = vmatpush1.bf16.msra.mxu0 0
    %2386 = vmatprep.subr.bf16.mxu0 0
    %2387 = vmatpush1.bf16.msra.mxu0 0
    %2388 = vmatprep.subr.bf16.mxu0 0
    %2389 = vmatpush1.bf16.msra.mxu0 0
    %2390 = vmatprep.subr.bf16.mxu0 0
    %2391 = vmatpush1.bf16.msra.mxu0 0
    %2392 = vmatprep.subr.bf16.mxu0 0
    %2393 = vmatpush1.bf16.msra.mxu0 0
    %2394 = vmatprep.mubr.bf16.mxu0 0
    %2395 = vmatmul.mubr.bf16.gmra.mrb[0].mxu0 %v2357
    %v2396 = vpop.f32.mrb[0].mxu0
    %v2397 = vadd.f32 0.0, %v2396
    %v2398 = vpop.f32.mrb[0].mxu0
    %v2399 = vpop.f32.mrb[0].mxu0
    %v2400 = vpop.f32.mrb[0].mxu0
    %2401 = vdwg.mxu0
    %v2403 = vsel %vm743, %v2353, 0
    %v2406 = vsel %vm773, %v2355, 0
    %2408 = vmatprep.subr.bf16.mxu0 0
    %2409 = vmatpush1.bf16.msra.mxu0 %v2406
    %2410 = vmatprep.subr.bf16.mxu0 0
    %2411 = vmatpush1.bf16.msra.mxu0 0
    %2412 = vmatprep.subr.bf16.mxu0 0
    %2413 = vmatpush1.bf16.msra.mxu0 0
    %2414 = vmatprep.subr.bf16.mxu0 0
    %2415 = vmatpush1.bf16.msra.mxu0 0
    %2416 = vmatprep.subr.bf16.mxu0 0
    %2417 = vmatpush1.bf16.msra.mxu0 0
    %2418 = vmatprep.subr.bf16.mxu0 0
    %2419 = vmatpush1.bf16.msra.mxu0 0
    %2420 = vmatprep.subr.bf16.mxu0 0
    %2421 = vmatpush1.bf16.msra.mxu0 0
    %2422 = vmatprep.subr.bf16.mxu0 0
    %2423 = vmatpush1.bf16.msra.mxu0 0
    %2424 = vmatprep.subr.bf16.mxu0 0
    %2425 = vmatpush1.bf16.msra.mxu0 0
    %2426 = vmatprep.subr.bf16.mxu0 0
    %2427 = vmatpush1.bf16.msra.mxu0 0
    %2428 = vmatprep.subr.bf16.mxu0 0
    %2429 = vmatpush1.bf16.msra.mxu0 0
    %2430 = vmatprep.subr.bf16.mxu0 0
    %2431 = vmatpush1.bf16.msra.mxu0 0
    %2432 = vmatprep.subr.bf16.mxu0 0
    %2433 = vmatpush1.bf16.msra.mxu0 0
    %2434 = vmatprep.subr.bf16.mxu0 0
    %2435 = vmatpush1.bf16.msra.mxu0 0
    %2436 = vmatprep.subr.bf16.mxu0 0
    %2437 = vmatpush1.bf16.msra.mxu0 0
    %2438 = vmatprep.subr.bf16.mxu0 0
    %2439 = vmatpush1.bf16.msra.mxu0 0
    %2440 = vmatprep.mubr.bf16.mxu0 0
    %2441 = vmatmul.mubr.bf16.gmra.mrb[0].mxu0 %v2403
    %v2442 = vpop.f32.mrb[0].mxu0
    %v2443 = vadd.f32 0.0, %v2442
    %v2444 = vpop.f32.mrb[0].mxu0
    %v2445 = vpop.f32.mrb[0].mxu0
    %v2446 = vpop.f32.mrb[0].mxu0
    %2447 = vdwg.mxu0
    %v2448 = vpack.c.bf16 %v2443, %v2397
    %v2465 = vunpack.c.l.b16 %v2019
    %v2466 = vunpack.c.l.b16 %v2020
    %v2467 = vunpack.c.l.b16 %v2021
    %v2468 = vunpack.c.l.b16 %v2022
    %v2469 = vunpack.c.l.b16 %v2023
    %v2470 = vunpack.c.l.b16 %v2024
    %v2471 = vunpack.c.l.b16 %v2025
    %v2472 = vunpack.c.l.b16 %v2026
    %v2473 = vunpack.c.l.b16 %v2027
    %v2474 = vunpack.c.l.b16 %v2028
    %v2475 = vunpack.c.l.b16 %v2029
    %v2476 = vunpack.c.l.b16 %v2030
    %v2477 = vunpack.c.l.b16 %v2031
    %v2478 = vunpack.c.l.b16 %v2032
    %v2479 = vunpack.c.l.b16 %v2033
    %v2480 = vunpack.c.l.b16 %v2034
    %v2481 = vpack.c.b16 %v2466, %v2465
    %v2482 = vpack.c.b16 %v2468, %v2467
    %v2483 = vpack.c.b16 %v2470, %v2469
    %v2484 = vpack.c.b16 %v2472, %v2471
    %v2485 = vpack.c.b16 %v2474, %v2473
    %v2486 = vpack.c.b16 %v2476, %v2475
    %v2487 = vpack.c.b16 %v2478, %v2477
    %v2488 = vpack.c.b16 %v2480, %v2479
    %2497 = vmatprep.subr.bf16.mxu0 0
    %2498 = vmatpush1.bf16.msra.mxu0 %v2481
    %2499 = vmatprep.subr.bf16.mxu0 0
    %2500 = vmatpush1.bf16.msra.mxu0 %v2482
    %2501 = vmatprep.subr.bf16.mxu0 0
    %2502 = vmatpush1.bf16.msra.mxu0 %v2483
    %2503 = vmatprep.subr.bf16.mxu0 0
    %2504 = vmatpush1.bf16.msra.mxu0 %v2484
    %2505 = vmatprep.subr.bf16.mxu0 0
    %2506 = vmatpush1.bf16.msra.mxu0 %v2485
    %2507 = vmatprep.subr.bf16.mxu0 0
    %2508 = vmatpush1.bf16.msra.mxu0 %v2486
    %2509 = vmatprep.subr.bf16.mxu0 0
    %2510 = vmatpush1.bf16.msra.mxu0 %v2487
    %2511 = vmatprep.subr.bf16.mxu0 0
    %2512 = vmatpush1.bf16.msra.mxu0 %v2488
    %2513 = vmatprep.subr.bf16.mxu0 0
    %2514 = vmatpush1.bf16.msra.mxu0 0
    %2515 = vmatprep.subr.bf16.mxu0 0
    %2516 = vmatpush1.bf16.msra.mxu0 0
    %2517 = vmatprep.subr.bf16.mxu0 0
    %2518 = vmatpush1.bf16.msra.mxu0 0
    %2519 = vmatprep.subr.bf16.mxu0 0
    %2520 = vmatpush1.bf16.msra.mxu0 0
    %2521 = vmatprep.subr.bf16.mxu0 0
    %2522 = vmatpush1.bf16.msra.mxu0 0
    %2523 = vmatprep.subr.bf16.mxu0 0
    %2524 = vmatpush1.bf16.msra.mxu0 0
    %2525 = vmatprep.subr.bf16.mxu0 0
    %2526 = vmatpush1.bf16.msra.mxu0 0
    %2527 = vmatprep.subr.bf16.mxu0 0
    %2528 = vmatpush1.bf16.msra.mxu0 0
    %2529 = vmatprep.mubr.bf16.mxu0 0
    %2530 = vmatmul.mubr.bf16.gmra.mrb[0].mxu0 %v2448
    %v2531 = vpop.f32.mrb[0].mxu0
    %v2532 = vadd.f32 0.0, %v2531
    %v2533 = vpop.f32.mrb[0].mxu0
    %v2534 = vpop.f32.mrb[0].mxu0
    %v2535 = vadd.f32 0.0, %v2534
    %v2536 = vpop.f32.mrb[0].mxu0
    %2537 = vdwg.mxu0
    %v2554 = vunpack.c.l.b16 %v2003
    %v2555 = vunpack.c.l.b16 %v2004
    %v2556 = vunpack.c.l.b16 %v2005
    %v2557 = vunpack.c.l.b16 %v2006
    %v2558 = vunpack.c.l.b16 %v2007
    %v2559 = vunpack.c.l.b16 %v2008
    %v2560 = vunpack.c.l.b16 %v2009
    %v2561 = vunpack.c.l.b16 %v2010
    %v2562 = vunpack.c.l.b16 %v2011
    %v2563 = vunpack.c.l.b16 %v2012
    %v2564 = vunpack.c.l.b16 %v2013
    %v2565 = vunpack.c.l.b16 %v2014
    %v2566 = vunpack.c.l.b16 %v2015
    %v2567 = vunpack.c.l.b16 %v2016
    %v2568 = vunpack.c.l.b16 %v2017
    %v2569 = vunpack.c.l.b16 %v2018
    %v2570 = vpack.c.b16 %v2555, %v2554
    %v2571 = vpack.c.b16 %v2557, %v2556
    %v2572 = vpack.c.b16 %v2559, %v2558
    %v2573 = vpack.c.b16 %v2561, %v2560
    %v2574 = vpack.c.b16 %v2563, %v2562
    %v2575 = vpack.c.b16 %v2565, %v2564
    %v2576 = vpack.c.b16 %v2567, %v2566
    %v2577 = vpack.c.b16 %v2569, %v2568
    %2586 = vmatprep.subr.bf16.mxu0 0
    %2587 = vmatpush1.bf16.msra.mxu0 %v2570
    %2588 = vmatprep.subr.bf16.mxu0 0
    %2589 = vmatpush1.bf16.msra.mxu0 %v2571
    %2590 = vmatprep.subr.bf16.mxu0 0
    %2591 = vmatpush1.bf16.msra.mxu0 %v2572
    %2592 = vmatprep.subr.bf16.mxu0 0
    %2593 = vmatpush1.bf16.msra.mxu0 %v2573
    %2594 = vmatprep.subr.bf16.mxu0 0
    %2595 = vmatpush1.bf16.msra.mxu0 %v2574
    %2596 = vmatprep.subr.bf16.mxu0 0
    %2597 = vmatpush1.bf16.msra.mxu0 %v2575
    %2598 = vmatprep.subr.bf16.mxu0 0
    %2599 = vmatpush1.bf16.msra.mxu0 %v2576
    %2600 = vmatprep.subr.bf16.mxu0 0
    %2601 = vmatpush1.bf16.msra.mxu0 %v2577
    %2602 = vmatprep.subr.bf16.mxu0 0
    %2603 = vmatpush1.bf16.msra.mxu0 0
    %2604 = vmatprep.subr.bf16.mxu0 0
    %2605 = vmatpush1.bf16.msra.mxu0 0
    %2606 = vmatprep.subr.bf16.mxu0 0
    %2607 = vmatpush1.bf16.msra.mxu0 0
    %2608 = vmatprep.subr.bf16.mxu0 0
    %2609 = vmatpush1.bf16.msra.mxu0 0
    %2610 = vmatprep.subr.bf16.mxu0 0
    %2611 = vmatpush1.bf16.msra.mxu0 0
    %2612 = vmatprep.subr.bf16.mxu0 0
    %2613 = vmatpush1.bf16.msra.mxu0 0
    %2614 = vmatprep.subr.bf16.mxu0 0
    %2615 = vmatpush1.bf16.msra.mxu0 0
    %2616 = vmatprep.subr.bf16.mxu0 0
    %2617 = vmatpush1.bf16.msra.mxu0 0
    %2618 = vmatprep.mubr.bf16.mxu0 0
    %2619 = vmatmul.mubr.bf16.gmra.mrb[0].mxu0 %v2241
    %v2620 = vpop.f32.mrb[0].mxu0
    %v2621 = vadd.f32 %v2532, %v2620
    %v2622 = vpop.f32.mrb[0].mxu0
    %v2623 = vpop.f32.mrb[0].mxu0
    %v2624 = vadd.f32 %v2535, %v2623
    %v2625 = vpop.f32.mrb[0].mxu0
    %2626 = vdwg.mxu0
    %v2627 = vld [vmem:[#allocation8 + $0x31] ss:$0 sm:$0xff]
    %v2628 = vadd.f32 %v2621, %v2627
    %v2629 = vadd.f32 %v2624, %v2627
    %v2630 = vadd.f32 %v2628, %v1546
    %v2631 = vadd.f32 %v2629, %v1547
    %v2632 = vld [vmem:[#allocation8 + $0x32] ss:$0 sm:$0xff]
    %v2633 = vld [vmem:[#allocation8 + $0x33] ss:$0 sm:$0xff]
    %2634 = vadd.xlane.f32.xlu0 %v2630
    %v2635 = vpop.xlane.xlu0 %2634
    %2636 = vadd.xlane.f32.xlu0 %v2631
    %v2637 = vpop.xlane.xlu0 %2636
    %v2638 = vmul.f32 %v2635, 0.03125
    %v2639 = vmul.f32 %v2637, 0.03125
    %v2640 = vsub.f32 %v2630, %v2638
    %v2641 = vsub.f32 %v2631, %v2639
    %v2642 = vmul.f32 %v2640, %v118
    %v2643 = vmul.f32 %v2641, %v118
    %v2644 = vmul.f32 %v2642, %v2642
    %v2645 = vmul.f32 %v2643, %v2643
    %2646 = vadd.xlane.f32.xlu0 %v2644
    %v2647 = vpop.xlane.xlu0 %2646
    %2648 = vadd.xlane.f32.xlu0 %v2645
    %v2649 = vpop.xlane.xlu0 %2648
    %v2650 = vmul.f32 %v2647, 0.03125
    %v2651 = vmul.f32 %v2649, 0.03125
    %v2652 = vadd.f32 %v2650, 1e-05
    %v2653 = vadd.f32 %v2651, 1e-05
    %v2654 = vrsqrt.pop %v2652
    %v2655 = vrsqrt.pop %v2653
    %v2656 = vmul.f32 %v2642, %v2654
    %v2657 = vmul.f32 %v2643, %v2655
    %v2658 = vmul.f32 %v2656, %v2632
    %v2659 = vmul.f32 %v2657, %v2632
    %v2660 = vadd.f32 %v2658, %v2633
    %v2661 = vadd.f32 %v2659, %v2633
    %v2662 = vpack.c.bf16 %v2661, %v2660
    %s2663 = scalar_lea.vmem [#allocation5], 64
    %v2664 = vld [vmem:[%s2663] sm:$0xf]
    %v2665 = vld [vmem:[%s2663 + $0x4] sm:$0xf]
    %v2666 = vld [vmem:[%s2663 + $0x8] sm:$0xf]
    %v2667 = vld [vmem:[%s2663 + $0xc] sm:$0xf]
    %v2668 = vld [vmem:[%s2663 + $0x10] sm:$0xf]
    %v2669 = vld [vmem:[%s2663 + $0x14] sm:$0xf]
    %v2670 = vld [vmem:[%s2663 + $0x18] sm:$0xf]
    %v2671 = vld [vmem:[%s2663 + $0x1c] sm:$0xf]
    %v2672 = vld [vmem:[%s2663 + $0x20] sm:$0xf]
    %v2673 = vld [vmem:[%s2663 + $0x24] sm:$0xf]
    %v2674 = vld [vmem:[%s2663 + $0x28] sm:$0xf]
    %v2675 = vld [vmem:[%s2663 + $0x2c] sm:$0xf]
    %v2676 = vld [vmem:[%s2663 + $0x30] sm:$0xf]
    %v2677 = vld [vmem:[%s2663 + $0x34] sm:$0xf]
    %v2678 = vld [vmem:[%s2663 + $0x38] sm:$0xf]
    %v2679 = vld [vmem:[%s2663 + $0x3c] sm:$0xf]
    %v2680 = vld [vmem:[#allocation8 + $0x34] ss:$0 sm:$0xff]
    %v2697 = vunpack.c.l.b16 %v2664
    %v2698 = vunpack.c.l.b16 %v2665
    %v2699 = vunpack.c.l.b16 %v2666
    %v2700 = vunpack.c.l.b16 %v2667
    %v2701 = vunpack.c.l.b16 %v2668
    %v2702 = vunpack.c.l.b16 %v2669
    %v2703 = vunpack.c.l.b16 %v2670
    %v2704 = vunpack.c.l.b16 %v2671
    %v2705 = vunpack.c.l.b16 %v2672
    %v2706 = vunpack.c.l.b16 %v2673
    %v2707 = vunpack.c.l.b16 %v2674
    %v2708 = vunpack.c.l.b16 %v2675
    %v2709 = vunpack.c.l.b16 %v2676
    %v2710 = vunpack.c.l.b16 %v2677
    %v2711 = vunpack.c.l.b16 %v2678
    %v2712 = vunpack.c.l.b16 %v2679
    %v2713 = vpack.c.b16 %v2698, %v2697
    %v2714 = vpack.c.b16 %v2700, %v2699
    %v2715 = vpack.c.b16 %v2702, %v2701
    %v2716 = vpack.c.b16 %v2704, %v2703
    %v2717 = vpack.c.b16 %v2706, %v2705
    %v2718 = vpack.c.b16 %v2708, %v2707
    %v2719 = vpack.c.b16 %v2710, %v2709
    %v2720 = vpack.c.b16 %v2712, %v2711
    %2729 = vmatprep.subr.bf16.mxu0 0
    %2730 = vmatpush1.bf16.msra.mxu0 %v2713
    %2731 = vmatprep.subr.bf16.mxu0 0
    %2732 = vmatpush1.bf16.msra.mxu0 %v2714
    %2733 = vmatprep.subr.bf16.mxu0 0
    %2734 = vmatpush1.bf16.msra.mxu0 %v2715
    %2735 = vmatprep.subr.bf16.mxu0 0
    %2736 = vmatpush1.bf16.msra.mxu0 %v2716
    %2737 = vmatprep.subr.bf16.mxu0 0
    %2738 = vmatpush1.bf16.msra.mxu0 %v2717
    %2739 = vmatprep.subr.bf16.mxu0 0
    %2740 = vmatpush1.bf16.msra.mxu0 %v2718
    %2741 = vmatprep.subr.bf16.mxu0 0
    %2742 = vmatpush1.bf16.msra.mxu0 %v2719
    %2743 = vmatprep.subr.bf16.mxu0 0
    %2744 = vmatpush1.bf16.msra.mxu0 %v2720
    %2745 = vmatprep.subr.bf16.mxu0 0
    %2746 = vmatpush1.bf16.msra.mxu0 0
    %2747 = vmatprep.subr.bf16.mxu0 0
    %2748 = vmatpush1.bf16.msra.mxu0 0
    %2749 = vmatprep.subr.bf16.mxu0 0
    %2750 = vmatpush1.bf16.msra.mxu0 0
    %2751 = vmatprep.subr.bf16.mxu0 0
    %2752 = vmatpush1.bf16.msra.mxu0 0
    %2753 = vmatprep.subr.bf16.mxu0 0
    %2754 = vmatpush1.bf16.msra.mxu0 0
    %2755 = vmatprep.subr.bf16.mxu0 0
    %2756 = vmatpush1.bf16.msra.mxu0 0
    %2757 = vmatprep.subr.bf16.mxu0 0
    %2758 = vmatpush1.bf16.msra.mxu0 0
    %2759 = vmatprep.subr.bf16.mxu0 0
    %2760 = vmatpush1.bf16.msra.mxu0 0
    %2761 = vmatprep.mubr.bf16.mxu0 0
    %2762 = vmatmul.mubr.bf16.gmra.mrb[0].mxu0 %v2662
    %v2763 = vpop.f32.mrb[0].mxu0
    %v2764 = vadd.f32 %v2680, %v2763
    %v2765 = vpop.f32.mrb[0].mxu0
    %v2766 = vpop.f32.mrb[0].mxu0
    %v2767 = vadd.f32 %v2680, %v2766
    %v2768 = vpop.f32.mrb[0].mxu0
    %2769 = vdwg.mxu0
    %v2770 = vmul.f32 %v2764, %v2764
    %v2771 = vmul.f32 %v2767, %v2767
    %v2772 = vmul.f32 %v2764, %v2770
    %v2773 = vmul.f32 %v2767, %v2771
    %v2774 = vmul.f32 %v2772, 0.044715
    %v2775 = vmul.f32 %v2773, 0.044715
    %v2776 = vadd.f32 %v2764, %v2774
    %v2777 = vadd.f32 %v2767, %v2775
    %v2778 = vmul.f32 %v2776, 0.7978846
    %v2779 = vmul.f32 %v2777, 0.7978846
    %v2780 = vtanh.pop %v2778
    %v2781 = vtanh.pop %v2779
    %v2782 = vadd.f32 %v2780, 1.0
    %v2783 = vadd.f32 %v2781, 1.0
    %v2784 = vmul.f32 %v2782, 0.5
    %v2785 = vmul.f32 %v2783, 0.5
    %v2786 = vmul.f32 %v2764, %v2784
    %v2787 = vmul.f32 %v2767, %v2785
    %v2788 = vpack.c.bf16 %v2787, %v2786
    %s2789 = scalar_lea.vmem [#allocation7], 64
    %v2790 = vld [vmem:[%s2789] sm:$0xf]
    %v2791 = vld [vmem:[%s2789 + $0x4] sm:$0xf]
    %v2792 = vld [vmem:[%s2789 + $0x8] sm:$0xf]
    %v2793 = vld [vmem:[%s2789 + $0xc] sm:$0xf]
    %v2794 = vld [vmem:[%s2789 + $0x10] sm:$0xf]
    %v2795 = vld [vmem:[%s2789 + $0x14] sm:$0xf]
    %v2796 = vld [vmem:[%s2789 + $0x18] sm:$0xf]
    %v2797 = vld [vmem:[%s2789 + $0x1c] sm:$0xf]
    %v2798 = vld [vmem:[%s2789 + $0x20] sm:$0xf]
    %v2799 = vld [vmem:[%s2789 + $0x24] sm:$0xf]
    %v2800 = vld [vmem:[%s2789 + $0x28] sm:$0xf]
    %v2801 = vld [vmem:[%s2789 + $0x2c] sm:$0xf]
    %v2802 = vld [vmem:[%s2789 + $0x30] sm:$0xf]
    %v2803 = vld [vmem:[%s2789 + $0x34] sm:$0xf]
    %v2804 = vld [vmem:[%s2789 + $0x38] sm:$0xf]
    %v2805 = vld [vmem:[%s2789 + $0x3c] sm:$0xf]
    %v2806 = vld [vmem:[#allocation8 + $0x35] ss:$0 sm:$0xff]
    %v2823 = vunpack.c.l.b16 %v2790
    %v2824 = vunpack.c.l.b16 %v2791
    %v2825 = vunpack.c.l.b16 %v2792
    %v2826 = vunpack.c.l.b16 %v2793
    %v2827 = vunpack.c.l.b16 %v2794
    %v2828 = vunpack.c.l.b16 %v2795
    %v2829 = vunpack.c.l.b16 %v2796
    %v2830 = vunpack.c.l.b16 %v2797
    %v2831 = vunpack.c.l.b16 %v2798
    %v2832 = vunpack.c.l.b16 %v2799
    %v2833 = vunpack.c.l.b16 %v2800
    %v2834 = vunpack.c.l.b16 %v2801
    %v2835 = vunpack.c.l.b16 %v2802
    %v2836 = vunpack.c.l.b16 %v2803
    %v2837 = vunpack.c.l.b16 %v2804
    %v2838 = vunpack.c.l.b16 %v2805
    %v2839 = vpack.c.b16 %v2824, %v2823
    %v2840 = vpack.c.b16 %v2826, %v2825
    %v2841 = vpack.c.b16 %v2828, %v2827
    %v2842 = vpack.c.b16 %v2830, %v2829
    %v2843 = vpack.c.b16 %v2832, %v2831
    %v2844 = vpack.c.b16 %v2834, %v2833
    %v2845 = vpack.c.b16 %v2836, %v2835
    %v2846 = vpack.c.b16 %v2838, %v2837
    %2855 = vmatprep.subr.bf16.mxu0 0
    %2856 = vmatpush1.bf16.msra.mxu0 %v2839
    %2857 = vmatprep.subr.bf16.mxu0 0
    %2858 = vmatpush1.bf16.msra.mxu0 %v2840
    %2859 = vmatprep.subr.bf16.mxu0 0
    %2860 = vmatpush1.bf16.msra.mxu0 %v2841
    %2861 = vmatprep.subr.bf16.mxu0 0
    %2862 = vmatpush1.bf16.msra.mxu0 %v2842
    %2863 = vmatprep.subr.bf16.mxu0 0
    %2864 = vmatpush1.bf16.msra.mxu0 %v2843
    %2865 = vmatprep.subr.bf16.mxu0 0
    %2866 = vmatpush1.bf16.msra.mxu0 %v2844
    %2867 = vmatprep.subr.bf16.mxu0 0
    %2868 = vmatpush1.bf16.msra.mxu0 %v2845
    %2869 = vmatprep.subr.bf16.mxu0 0
    %2870 = vmatpush1.bf16.msra.mxu0 %v2846
    %2871 = vmatprep.subr.bf16.mxu0 0
    %2872 = vmatpush1.bf16.msra.mxu0 0
    %2873 = vmatprep.subr.bf16.mxu0 0
    %2874 = vmatpush1.bf16.msra.mxu0 0
    %2875 = vmatprep.subr.bf16.mxu0 0
    %2876 = vmatpush1.bf16.msra.mxu0 0
    %2877 = vmatprep.subr.bf16.mxu0 0
    %2878 = vmatpush1.bf16.msra.mxu0 0
    %2879 = vmatprep.subr.bf16.mxu0 0
    %2880 = vmatpush1.bf16.msra.mxu0 0
    %2881 = vmatprep.subr.bf16.mxu0 0
    %2882 = vmatpush1.bf16.msra.mxu0 0
    %2883 = vmatprep.subr.bf16.mxu0 0
    %2884 = vmatpush1.bf16.msra.mxu0 0
    %2885 = vmatprep.subr.bf16.mxu0 0
    %2886 = vmatpush1.bf16.msra.mxu0 0
    %2887 = vmatprep.mubr.bf16.mxu0 0
    %2888 = vmatmul.mubr.bf16.gmra.mrb[0].mxu0 %v2788
    %v2889 = vpop.f32.mrb[0].mxu0
    %v2890 = vadd.f32 %v2806, %v2889
    %v2891 = vpop.f32.mrb[0].mxu0
    %v2892 = vpop.f32.mrb[0].mxu0
    %v2893 = vadd.f32 %v2806, %v2892
    %v2894 = vpop.f32.mrb[0].mxu0
    %2895 = vdwg.mxu0
    %v2896 = vadd.f32 %v2890, %v2660
    %v2897 = vadd.f32 %v2893, %v2661
    %v2898 = vld [vmem:[#allocation8 + $0x36] ss:$0 sm:$0xff]
    %v2899 = vld [vmem:[#allocation8 + $0x37] ss:$0 sm:$0xff]
    %2900 = vadd.xlane.f32.xlu0 %v2896
    %v2901 = vpop.xlane.xlu0 %2900
    %2902 = vadd.xlane.f32.xlu0 %v2897
    %v2903 = vpop.xlane.xlu0 %2902
    %v2904 = vmul.f32 %v2901, 0.03125
    %v2905 = vmul.f32 %v2903, 0.03125
    %v2906 = vsub.f32 %v2896, %v2904
    %v2907 = vsub.f32 %v2897, %v2905
    %v2908 = vmul.f32 %v2906, %v118
    %v2909 = vmul.f32 %v2907, %v118
    %v2910 = vmul.f32 %v2908, %v2908
    %v2911 = vmul.f32 %v2909, %v2909
    %2912 = vadd.xlane.f32.xlu0 %v2910
    %v2913 = vpop.xlane.xlu0 %2912
    %2914 = vadd.xlane.f32.xlu0 %v2911
    %v2915 = vpop.xlane.xlu0 %2914
    %v2916 = vmul.f32 %v2913, 0.03125
    %v2917 = vmul.f32 %v2915, 0.03125
    %v2918 = vadd.f32 %v2916, 1e-05
    %v2919 = vadd.f32 %v2917, 1e-05
    %v2920 = vrsqrt.pop %v2918
    %v2921 = vrsqrt.pop %v2919
    %v2922 = vmul.f32 %v2908, %v2920
    %v2923 = vmul.f32 %v2909, %v2921
    %v2924 = vmul.f32 %v2922, %v2898
    %v2925 = vmul.f32 %v2923, %v2898
    %v2926 = vadd.f32 %v2924, %v2899
    %v2927 = vadd.f32 %v2925, %v2899
    %v2928 = vpack.c.bf16 %v2926, %v2926
    %v2929 = vpack.c.bf16 %v2927, %v2927
    %v2930 = vld [vmem:[#allocation10] sm:$0xf]
    %v2931 = vld [vmem:[#allocation10 + $0x4] sm:$0xf]
    %v2932 = vld [vmem:[#allocation10 + $0x8] sm:$0xf]
    %v2933 = vld [vmem:[#allocation10 + $0xc] sm:$0xf]
    %v2934 = vld [vmem:[#allocation10 + $0x10] sm:$0xf]
    %v2935 = vld [vmem:[#allocation10 + $0x14] sm:$0xf]
    %v2936 = vld [vmem:[#allocation10 + $0x18] sm:$0xf]
    %v2937 = vld [vmem:[#allocation10 + $0x1c] sm:$0xf]
    %v2938 = vld [vmem:[#allocation10 + $0x20] sm:$0xf]
    %v2939 = vld [vmem:[#allocation10 + $0x24] sm:$0xf]
    %v2940 = vld [vmem:[#allocation10 + $0x28] sm:$0xf]
    %v2941 = vld [vmem:[#allocation10 + $0x2c] sm:$0xf]
    %v2942 = vld [vmem:[#allocation10 + $0x30] sm:$0xf]
    %v2943 = vld [vmem:[#allocation10 + $0x34] sm:$0xf]
    %v2944 = vld [vmem:[#allocation10 + $0x38] sm:$0xf]
    %v2945 = vld [vmem:[#allocation10 + $0x3c] sm:$0xf]
    %v2948 = vunpack.c.l.b16 %v2928
    %v2949 = vunpack.c.l.b16 %v2929
    %v2950 = vrot.slane %v2949, 7
    %vm2951 = vcmask 1041409
    %v2952 = vsel %vm2951, %v2950, %v2948
    %v2953 = vpack.c.b16 %v2952, %v2952
    %v2971 = vunpack.c.l.b16 %v2930
    %v2972 = vunpack.c.l.b16 %v2931
    %v2973 = vunpack.c.l.b16 %v2932
    %v2974 = vunpack.c.l.b16 %v2933
    %v2975 = vunpack.c.l.b16 %v2934
    %v2976 = vunpack.c.l.b16 %v2935
    %v2977 = vunpack.c.l.b16 %v2936
    %v2978 = vunpack.c.l.b16 %v2937
    %v2979 = vunpack.c.l.b16 %v2938
    %v2980 = vunpack.c.l.b16 %v2939
    %v2981 = vunpack.c.l.b16 %v2940
    %v2982 = vunpack.c.l.b16 %v2941
    %v2983 = vunpack.c.l.b16 %v2942
    %v2984 = vunpack.c.l.b16 %v2943
    %v2985 = vunpack.c.l.b16 %v2944
    %v2986 = vunpack.c.l.b16 %v2945
    %v2987 = vpack.c.b16 %v2972, %v2971
    %v2988 = vpack.c.b16 %v2974, %v2973
    %v2989 = vpack.c.b16 %v2976, %v2975
    %v2990 = vpack.c.b16 %v2978, %v2977
    %v2991 = vpack.c.b16 %v2980, %v2979
    %v2992 = vpack.c.b16 %v2982, %v2981
    %v2993 = vpack.c.b16 %v2984, %v2983
    %v2994 = vpack.c.b16 %v2986, %v2985
    %3003 = vmatprep.subr.bf16.mxu0 0
    %3004 = vmatpush1.bf16.msra.mxu0 %v2987
    %3005 = vmatprep.subr.bf16.mxu0 0
    %3006 = vmatpush1.bf16.msra.mxu0 %v2988
    %3007 = vmatprep.subr.bf16.mxu0 0
    %3008 = vmatpush1.bf16.msra.mxu0 %v2989
    %3009 = vmatprep.subr.bf16.mxu0 0
    %3010 = vmatpush1.bf16.msra.mxu0 %v2990
    %3011 = vmatprep.subr.bf16.mxu0 0
    %3012 = vmatpush1.bf16.msra.mxu0 %v2991
    %3013 = vmatprep.subr.bf16.mxu0 0
    %3014 = vmatpush1.bf16.msra.mxu0 %v2992
    %3015 = vmatprep.subr.bf16.mxu0 0
    %3016 = vmatpush1.bf16.msra.mxu0 %v2993
    %3017 = vmatprep.subr.bf16.mxu0 0
    %3018 = vmatpush1.bf16.msra.mxu0 %v2994
    %3019 = vmatprep.subr.bf16.mxu0 0
    %3020 = vmatpush1.bf16.msra.mxu0 0
    %3021 = vmatprep.subr.bf16.mxu0 0
    %3022 = vmatpush1.bf16.msra.mxu0 0
    %3023 = vmatprep.subr.bf16.mxu0 0
    %3024 = vmatpush1.bf16.msra.mxu0 0
    %3025 = vmatprep.subr.bf16.mxu0 0
    %3026 = vmatpush1.bf16.msra.mxu0 0
    %3027 = vmatprep.subr.bf16.mxu0 0
    %3028 = vmatpush1.bf16.msra.mxu0 0
    %3029 = vmatprep.subr.bf16.mxu0 0
    %3030 = vmatpush1.bf16.msra.mxu0 0
    %3031 = vmatprep.subr.bf16.mxu0 0
    %3032 = vmatpush1.bf16.msra.mxu0 0
    %3033 = vmatprep.subr.bf16.mxu0 0
    %3034 = vmatpush1.bf16.msra.mxu0 0
    %3035 = vmatprep.mubr.bf16.mxu0 0
    %3036 = vmatmul.mubr.bf16.gmra.mrb[0].mxu0 %v2953
    %v3037 = vpop.f32.mrb[0].mxu0
    %v3038 = vadd.f32 %v121, %v3037
    %v3039 = vpop.f32.mrb[0].mxu0
    %v3040 = vpop.f32.mrb[0].mxu0
    %v3041 = vpop.f32.mrb[0].mxu0
    %3042 = vdwg.mxu0
    %v3043 = vtanh.pop %v3038
    %v3044 = vpack.c.bf16 %v3043, %v3043
    %s3045 = scalar_lea.vmem [#allocation10], 64
    %v3046 = vld [vmem:[%s3045] sm:$0xf]
    %v3047 = vld [vmem:[%s3045 + $0x4] sm:$0xf]
    %v3048 = vld [vmem:[%s3045 + $0x8] sm:$0xf]
    %v3049 = vld [vmem:[%s3045 + $0xc] sm:$0xf]
    %v3050 = vld [vmem:[%s3045 + $0x10] sm:$0xf]
    %v3051 = vld [vmem:[%s3045 + $0x14] sm:$0xf]
    %v3052 = vld [vmem:[%s3045 + $0x18] sm:$0xf]
    %v3053 = vld [vmem:[%s3045 + $0x1c] sm:$0xf]
    %v3054 = vld [vmem:[%s3045 + $0x20] sm:$0xf]
    %v3055 = vld [vmem:[%s3045 + $0x24] sm:$0xf]
    %v3056 = vld [vmem:[%s3045 + $0x28] sm:$0xf]
    %v3057 = vld [vmem:[%s3045 + $0x2c] sm:$0xf]
    %v3058 = vld [vmem:[%s3045 + $0x30] sm:$0xf]
    %v3059 = vld [vmem:[%s3045 + $0x34] sm:$0xf]
    %v3060 = vld [vmem:[%s3045 + $0x38] sm:$0xf]
    %v3061 = vld [vmem:[%s3045 + $0x3c] sm:$0xf]
    %v3078 = vunpack.c.l.b16 %v3046
    %v3079 = vunpack.c.l.b16 %v3047
    %v3080 = vunpack.c.l.b16 %v3048
    %v3081 = vunpack.c.l.b16 %v3049
    %v3082 = vunpack.c.l.b16 %v3050
    %v3083 = vunpack.c.l.b16 %v3051
    %v3084 = vunpack.c.l.b16 %v3052
    %v3085 = vunpack.c.l.b16 %v3053
    %v3086 = vunpack.c.l.b16 %v3054
    %v3087 = vunpack.c.l.b16 %v3055
    %v3088 = vunpack.c.l.b16 %v3056
    %v3089 = vunpack.c.l.b16 %v3057
    %v3090 = vunpack.c.l.b16 %v3058
    %v3091 = vunpack.c.l.b16 %v3059
    %v3092 = vunpack.c.l.b16 %v3060
    %v3093 = vunpack.c.l.b16 %v3061
    %v3094 = vpack.c.b16 %v3079, %v3078
    %v3095 = vpack.c.b16 %v3081, %v3080
    %v3096 = vpack.c.b16 %v3083, %v3082
    %v3097 = vpack.c.b16 %v3085, %v3084
    %v3098 = vpack.c.b16 %v3087, %v3086
    %v3099 = vpack.c.b16 %v3089, %v3088
    %v3100 = vpack.c.b16 %v3091, %v3090
    %v3101 = vpack.c.b16 %v3093, %v3092
    %3110 = vmatprep.subr.bf16.mxu0 0
    %3111 = vmatpush1.bf16.msra.mxu0 %v3094
    %3112 = vmatprep.subr.bf16.mxu0 0
    %3113 = vmatpush1.bf16.msra.mxu0 %v3095
    %3114 = vmatprep.subr.bf16.mxu0 0
    %3115 = vmatpush1.bf16.msra.mxu0 %v3096
    %3116 = vmatprep.subr.bf16.mxu0 0
    %3117 = vmatpush1.bf16.msra.mxu0 %v3097
    %3118 = vmatprep.subr.bf16.mxu0 0
    %3119 = vmatpush1.bf16.msra.mxu0 %v3098
    %3120 = vmatprep.subr.bf16.mxu0 0
    %3121 = vmatpush1.bf16.msra.mxu0 %v3099
    %3122 = vmatprep.subr.bf16.mxu0 0
    %3123 = vmatpush1.bf16.msra.mxu0 %v3100
    %3124 = vmatprep.subr.bf16.mxu0 0
    %3125 = vmatpush1.bf16.msra.mxu0 %v3101
    %3126 = vmatprep.subr.bf16.mxu0 0
    %3127 = vmatpush1.bf16.msra.mxu0 0
    %3128 = vmatprep.subr.bf16.mxu0 0
    %3129 = vmatpush1.bf16.msra.mxu0 0
    %3130 = vmatprep.subr.bf16.mxu0 0
    %3131 = vmatpush1.bf16.msra.mxu0 0
    %3132 = vmatprep.subr.bf16.mxu0 0
    %3133 = vmatpush1.bf16.msra.mxu0 0
    %3134 = vmatprep.subr.bf16.mxu0 0
    %3135 = vmatpush1.bf16.msra.mxu0 0
    %3136 = vmatprep.subr.bf16.mxu0 0
    %3137 = vmatpush1.bf16.msra.mxu0 0
    %3138 = vmatprep.subr.bf16.mxu0 0
    %3139 = vmatpush1.bf16.msra.mxu0 0
    %3140 = vmatprep.subr.bf16.mxu0 0
    %3141 = vmatpush1.bf16.msra.mxu0 0
    %3142 = vmatprep.mubr.bf16.mxu0 0
    %3143 = vmatmul.mubr.bf16.gmra.mrb[0].mxu0 %v3044
    %v3144 = vpop.f32.mrb[0].mxu0
    %v3145 = vadd.f32 %v122, %v3144
    %v3146 = vpop.f32.mrb[0].mxu0
    %v3147 = vpop.f32.mrb[0].mxu0
    %v3148 = vpop.f32.mrb[0].mxu0
    %3149 = vdwg.mxu0
    %v3150 = vpack.c.bf16 %v2927, %v2926
    %3151 = vmatprep.subr.bf16.mxu0 0
    %3152 = vmatpush1.bf16.msra.mxu0 %v3094
    %3153 = vmatprep.subr.bf16.mxu0 0
    %3154 = vmatpush1.bf16.msra.mxu0 %v3095
    %3155 = vmatprep.subr.bf16.mxu0 0
    %3156 = vmatpush1.bf16.msra.mxu0 %v3096
    %3157 = vmatprep.subr.bf16.mxu0 0
    %3158 = vmatpush1.bf16.msra.mxu0 %v3097
    %3159 = vmatprep.subr.bf16.mxu0 0
    %3160 = vmatpush1.bf16.msra.mxu0 %v3098
    %3161 = vmatprep.subr.bf16.mxu0 0
    %3162 = vmatpush1.bf16.msra.mxu0 %v3099
    %3163 = vmatprep.subr.bf16.mxu0 0
    %3164 = vmatpush1.bf16.msra.mxu0 %v3100
    %3165 = vmatprep.subr.bf16.mxu0 0
    %3166 = vmatpush1.bf16.msra.mxu0 %v3101
    %3167 = vmatprep.subr.bf16.mxu0 0
    %3168 = vmatpush1.bf16.msra.mxu0 0
    %3169 = vmatprep.subr.bf16.mxu0 0
    %3170 = vmatpush1.bf16.msra.mxu0 0
    %3171 = vmatprep.subr.bf16.mxu0 0
    %3172 = vmatpush1.bf16.msra.mxu0 0
    %3173 = vmatprep.subr.bf16.mxu0 0
    %3174 = vmatpush1.bf16.msra.mxu0 0
    %3175 = vmatprep.subr.bf16.mxu0 0
    %3176 = vmatpush1.bf16.msra.mxu0 0
    %3177 = vmatprep.subr.bf16.mxu0 0
    %3178 = vmatpush1.bf16.msra.mxu0 0
    %3179 = vmatprep.subr.bf16.mxu0 0
    %3180 = vmatpush1.bf16.msra.mxu0 0
    %3181 = vmatprep.subr.bf16.mxu0 0
    %3182 = vmatpush1.bf16.msra.mxu0 0
    %3183 = vmatprep.mubr.bf16.mxu0 0
    %3184 = vmatmul.mubr.bf16.gmra.mrb[0].mxu0 %v3150
    %v3185 = vpop.f32.mrb[0].mxu0
    %v3186 = vadd.f32 %v122, %v3185
    %v3187 = vpop.f32.mrb[0].mxu0
    %v3188 = vpop.f32.mrb[0].mxu0
    %v3189 = vadd.f32 %v122, %v3188
    %v3190 = vpop.f32.mrb[0].mxu0
    %3191 = vdwg.mxu0
    %3192 = vst [vmem:[#allocation11] sm:$0x3] %v3145
    %3193 = vst [vmem:[#allocation12] sm:$0xff] %v3186
    %3194 = vst [vmem:[#allocation12 + $0x8] sm:$0xff] %v3189
    %v3195 = vld [vmem:[%s2] sm:$0x3]
    %vm3196 = vcmp.ge.s32.totalorder %v115, 0
    %vm3197 = vcmp.lt.s32.totalorder %v115, 2
    %vm3198 = vmand %vm3196, %vm3197
    %v3199 = vsel %vm3198, %v3145, -1e+30
    %vm3200 = vcmask 1041408
    %v3201 = vsel %vm3200, %v3199, -inf
    %3202 = vmax.xlane.f32.xlu0 %v3201
    %v3203 = vpop.xlane.xlu0 %3202
    %v3204 = vsub.f32 %v3199, %v3203
    %v3205 = vmul.f32 %v3204, 1.442695
    %v3206 = vpow.pop %v3205
    %v3207 = vsel %vm3200, %v3206, 0.0
    %3208 = vadd.xlane.f32.xlu0 %v3207
    %v3209 = vpop.xlane.xlu0 %3208
    %v3210 = vlog2.pop %v3209
    %v3211 = vmul.f32 %v3210, 0.6931472
    %v3212 = vadd.f32 %v3203, %v3211
    %3213 = vset.pattern.permute.xlu0 0
    %3214 = vperm.xlu0 %3213, %v3195
    %v3215 = vpop.permute.xlu0 %3214
    %vm3216 = vcmp.eq.s32.totalorder %v115, %v3215
    %v3217 = vsel %vm3216, %v3199, 0.0
    %v3218 = vsel %vm3200, %v3217, 0.0
    %3219 = vadd.xlane.f32.xlu0 %v3218
    %v3220 = vpop.xlane.xlu0 %3219
    %v3221 = vsub.f32 %v3212, %v3220
    %v3222 = vsel %vm3200, %v3221, 0.0
    %v3223 = vrot.slane %v3222, 4
    %v3224 = vadd.f32 %v3222, %v3223
    %v3225 = vrot.slane %v3224, 2
    %v3226 = vadd.f32 %v3224, %v3225
    %v3227 = vrot.slane %v3226, 1
    %v3228 = vadd.f32 %v3226, %v3227
    %v3229 = vmul.f32 %v3228, 0.5
    %vm3230 = vcmask 0
    %3231 = vst.msk [vmem:[#allocation14] sm:$0x1] %vm3230, %v3229
    %v3232 = vld [vmem:[%s3] sm:$0xff]
    %v3233 = vld [vmem:[%s3 + $0x8] sm:$0xff]
    %v3234 = vadd.s32 %v3232, 2
    %v3235 = vadd.s32 %v3233, 2
    %vm3236 = vcmp.ge.s32.totalorder %v115, 2
    %vm3237 = vcmp.lt.s32.totalorder %v115, 4
    %vm3238 = vmand %vm3236, %vm3237
    %v3239 = vsel %vm3238, %v3186, -1e+30
    %v3240 = vsel %vm3238, %v3189, -1e+30
    %3241 = vmax.xlane.f32.xlu0 %v3239
    %v3242 = vpop.xlane.xlu0 %3241
    %3243 = vmax.xlane.f32.xlu0 %v3240
    %v3244 = vpop.xlane.xlu0 %3243
    %v3245 = vsub.f32 %v3239, %v3242
    %v3246 = vsub.f32 %v3240, %v3244
    %v3247 = vmul.f32 %v3245, 1.442695
    %v3248 = vpow.pop %v3247
    %v3249 = vmul.f32 %v3246, 1.442695
    %v3250 = vpow.pop %v3249
    %3251 = vadd.xlane.f32.xlu0 %v3248
    %v3252 = vpop.xlane.xlu0 %3251
    %3253 = vadd.xlane.f32.xlu0 %v3250
    %v3254 = vpop.xlane.xlu0 %3253
    %v3255 = vlog2.pop %v3252
    %v3256 = vmul.f32 %v3255, 0.6931472
    %v3257 = vlog2.pop %v3254
    %v3258 = vmul.f32 %v3257, 0.6931472
    %v3259 = vadd.f32 %v3242, %v3256
    %v3260 = vadd.f32 %v3244, %v3258
    %3261 = vset.pattern.permute.xlu0 0
    %3262 = vperm.xlu0 %3261, %v3234
    %v3263 = vpop.permute.xlu0 %3262
    %3264 = vset.pattern.permute.xlu0 0
    %3265 = vperm.xlu0 %3264, %v3235
    %v3266 = vpop.permute.xlu0 %3265
    %vm3267 = vcmp.eq.s32.totalorder %v115, %v3263
    %vm3268 = vcmp.eq.s32.totalorder %v115, %v3266
    %v3269 = vsel %vm3267, %v3239, 0.0
    %v3270 = vsel %vm3268, %v3240, 0.0
    %3271 = vadd.xlane.f32.xlu0 %v3269
    %v3272 = vpop.xlane.xlu0 %3271
    %3273 = vadd.xlane.f32.xlu0 %v3270
    %v3274 = vpop.xlane.xlu0 %3273
    %v3275 = vsub.f32 %v3259, %v3272
    %v3276 = vsub.f32 %v3260, %v3274
    %v3277 = vld [vmem:[%s4] sm:$0xff]
    %v3278 = vld [vmem:[%s4 + $0x8] sm:$0xff]
    %v3279 = vmul.f32 %v3275, %v3277
    %v3280 = vmul.f32 %v3276, %v3278
    %vm3281 = vcmask 7168
    %v3282 = vsel %vm3281, %v3279, 0.0
    %v3283 = vsel %vm3281, %v3280, 0.0
    %v3284 = vadd.f32 %v3282, %v3283
    %v3285 = vrot.slane %v3284, 4
    %v3286 = vadd.f32 %v3284, %v3285
    %v3287 = vrot.slane %v3286, 2
    %v3288 = vadd.f32 %v3286, %v3287
    %v3289 = vrot.slane %v3288, 1
    %v3290 = vadd.f32 %v3288, %v3289
    %3291 = vst.msk [vmem:[#allocation15] sm:$0x1] %vm3230, %v3290
    // Predicated region
    $region66: #{_device_forward.1} parent=1 // pred_check
      _
    $region67: #{_device_forward.1} parent=1 // pred_check_branch
      %3293 = sbr.rel (0) target = $region69
    $region68: #{_device_forward.1} parent=1 // pred_region
      %s3295 = ssub.s32 32, 32
      %3296 = vsyncadd [#allocation4], %s3295
      %s3298 = sshll.u32 [#allocation11], 4
      %s3299 = int_to_ptr.vmem [resolvable:$true] %s3298
      %3301 = dma.vmem_to_hbm [thread:$0]  %s3299, 32, %s11, [#allocation4]
    $region69: #{_device_forward.1} parent=1 // pred_fallthru
      _
    // Predicated region
    $region70: #{_device_forward.1} parent=1 // pred_check
      _
    $region71: #{_device_forward.1} parent=1 // pred_check_branch
      %3303 = sbr.rel (0) target = $region73
    $region72: #{_device_forward.1} parent=1 // pred_region
      %s3305 = ssub.s32 256, 256
      %3306 = vsyncadd [#allocation13], %s3305
      %s3307 = sshll.u32 [#allocation12], 4
      %s3308 = int_to_ptr.vmem [resolvable:$true] %s3307
      %3313 = dma.vmem_to_hbm [thread:$0]  %s3308, 256, %s12, [#allocation13], 128, 128, 8
    $region73: #{_device_forward.1} parent=1 // pred_fallthru
      _
    // Predicated region
    $region74: #{_device_forward.1} parent=1 // pred_check
      _
    $region75: #{_device_forward.1} parent=1 // pred_check_branch
      %3315 = sbr.rel (0) target = $region77
    $region76: #{_device_forward.1} parent=1 // pred_region
      %s3317 = ssub.s32 16, 16
      %3318 = vsyncadd [#allocation13], %s3317
      %s3320 = sshll.u32 [#allocation14], 4
      %s3321 = int_to_ptr.vmem [resolvable:$true] %s3320
      %3323 = dma.vmem_to_hbm [thread:$0]  %s3321, 16, %s13, [#allocation13]
    $region77: #{_device_forward.1} parent=1 // pred_fallthru
      _
    // Predicated region
    $region78: #{_device_forward.1} parent=1 // pred_check
      _
    $region79: #{_device_forward.1} parent=1 // pred_check_branch
      %3325 = sbr.rel (0) target = $region81
    $region80: #{_device_forward.1} parent=1 // pred_region
      %s3327 = ssub.s32 16, 16
      %3328 = vsyncadd [#allocation16], %s3327
      %s3330 = sshll.u32 [#allocation15], 4
      %s3331 = int_to_ptr.vmem [resolvable:$true] %s3330
      %3333 = dma.vmem_to_hbm [thread:$0]  %s3331, 16, %s14, [#allocation16]
    $region81: #{_device_forward.1} parent=1 // pred_fallthru
      _
    // Predicated region
    $region82: #{_device_forward.1} parent=1 // pred_check
      _
    $region83: #{_device_forward.1} parent=1 // pred_check_branch
      %3335 = sbr.rel (0) target = $region85
    $region84: #{_device_forward.1} parent=1 // pred_region
      %3336 = dma.done [#allocation4], 32
    $region85: #{_device_forward.1} parent=1 // pred_fallthru
      _
    // Predicated region
    $region86: #{_device_forward.1} parent=1 // pred_check
      _
    $region87: #{_device_forward.1} parent=1 // pred_check_branch
      %3338 = sbr.rel (0) target = $region89
    $region88: #{_device_forward.1} parent=1 // pred_region
      %3339 = dma.done [#allocation13], 256
    $region89: #{_device_forward.1} parent=1 // pred_fallthru
      _
    // Predicated region
    $region90: #{_device_forward.1} parent=1 // pred_check
      _
    $region91: #{_device_forward.1} parent=1 // pred_check_branch
      %3341 = sbr.rel (0) target = $region93
    $region92: #{_device_forward.1} parent=1 // pred_region
      %3342 = dma.done [#allocation13], 16
    $region93: #{_device_forward.1} parent=1 // pred_fallthru
      _
    // Predicated region
    $region94: #{_device_forward.1} parent=1 // pred_check
      _
    $region95: #{_device_forward.1} parent=1 // pred_check_branch
      %3344 = sbr.rel (0) target = $region97
    $region96: #{_device_forward.1} parent=1 // pred_region
      %3345 = dma.done [#allocation16], 16
    $region97: #{_device_forward.1} parent=1 // pred_fallthru
      _
    %3346 = vsyncpa [#allocation3], 1
    %3347 = vsyncpa [#allocation6], 1
    %3348 = vsyncpa [#allocation9], 1
    %3349 = vsyncpa [#allocation4], 1
    %3350 = vsyncpa [#allocation13], 1
    %3351 = vsyncpa [#allocation16], 1

</llo_original>
